<compile_context>
chip_gen: v7x
topology: tpu7x:2x2x1
jax: 0.10.0
libtpu: 0.0.40
codegen_flags: <defaults>
</compile_context>

<pallas_src>
import jax
import jax.numpy as jnp
from jax import lax
from jax.experimental import pallas as pl
from jax.experimental.pallas import tpu as pltpu

LN_EPS = 1e-5
_MAX_HW_TILE = 2048                        # lanes per tile (multiple of 128)
_DEFAULT_VMEM_BUDGET = 44 * 1024 * 1024    # safe on v5e/v6e (128 MiB) and v7x (64 MiB)


def _vmem_budget_bytes():
    """VMEM budget used both for tile sizing and the explicit scoped limit."""
    try:
        cap = int(pltpu.get_tpu_info().vmem_capacity_bytes)
        return max(32 * 1024 * 1024, min(int(cap * 0.7), 100 * 1024 * 1024))
    except Exception:
        return _DEFAULT_VMEM_BUDGET


def _choose_hw_tiling(C, HW, itemsize, vmem_budget_bytes):
    """Largest 128-multiple HW tile keeping x/out double buffers + single-buffered
    weights + scratch inside the VMEM budget (capped at _MAX_HW_TILE lanes)."""
    hw128 = pl.cdiv(HW, 128) * 128
    # weights (single-buffered) + scratch + slack for compiler-internal scratch
    fixed = (2 * C * C + 6 * C + 2) * 4 + (2 << 20)
    avail = max(vmem_budget_bytes - fixed, 4 * C * 128 * itemsize)
    # x and out tiles are each double buffered -> 4 live (C, hw_tile) buffers
    cap = avail // (4 * C * itemsize)
    cap = max(128, min(_MAX_HW_TILE, (cap // 128) * 128, hw128))
    n_tiles = pl.cdiv(hw128, cap)
    hw_tile = pl.cdiv(pl.cdiv(hw128, n_tiles), 128) * 128
    return int(hw_tile), int(n_tiles)


def _make_gc_kernel(hw_tile, hw_valid, need_mask, mxu_context):
    """Build the fused GC-block kernel for a fixed HW tiling (static params)."""

    def kernel(x_ref, wm_ref, w1_ref, b1_ref, g_ref, beta_ref, w2_ref, b2_ref,
               out_ref, m_ref, d_ref, ctx_ref, term_ref):
        ph = pl.program_id(1)        # 0: softmax/context pass, 1: residual pass
        t = pl.program_id(2)         # HW tile index
        nt = pl.num_programs(2)

        # ------------- phase 0: online softmax + context pooling -------------
        @pl.when(ph == 0)
        def _softmax_context():
            @pl.when(t == 0)
            def _init():
                m_ref[...] = jnp.full_like(m_ref, -jnp.inf)
                d_ref[...] = jnp.zeros_like(d_ref)
                ctx_ref[...] = jnp.zeros_like(ctx_ref)

            x = x_ref[0].astype(jnp.float32)                        # (C, hw_tile)

            # conv_mask (1x1, C->1, no bias): attention logits on the MXU.
            logits = jnp.dot(wm_ref[...], x,
                             preferred_element_type=jnp.float32)    # (1, hw_tile)
            if need_mask:
                pos = t * hw_tile + lax.broadcasted_iota(
                    jnp.int32, (1, hw_tile), 1)
                logits = jnp.where(pos < hw_valid, logits, -jnp.inf)

            # Online softmax statistics, kept as (1, 1) f32 in VMEM scratch.
            m_prev = m_ref[...]
            m_new = jnp.maximum(m_prev, jnp.max(logits))
            alpha = jnp.exp(m_prev - m_new)
            p = jnp.exp(logits - m_new)          # unnormalised probabilities
            d_ref[...] = d_ref[...] * alpha + jnp.sum(p)

            # Unnormalised context accumulation (contract HW on the MXU).
            if mxu_context:
                contrib = lax.dot_general(
                    x, p, (((1,), (1,)), ((), ())),
                    preferred_element_type=jnp.float32)             # (C, 1)
            else:
                contrib = jnp.sum(x * p, axis=-1, keepdims=True)    # (C, 1)
            ctx_ref[...] = ctx_ref[...] * alpha + contrib
            m_ref[...] = m_new

            # After the last HW tile: tiny channel_add branch (once per batch).
            @pl.when(t == nt - 1)
            def _channel_add():
                # Deferred softmax normalisation: scale the C context values
                # (exact division) instead of the HW attention values.
                ctx = ctx_ref[...] / d_ref[...]                      # (C, 1)

                y = jnp.dot(w1_ref[...], ctx,
                            preferred_element_type=jnp.float32) + b1_ref[...]
                # LayerNorm([C, 1, 1]) == normalise over the C values.
                mu = jnp.mean(y)
                var = jnp.mean((y - mu) * (y - mu))
                y = (y - mu) * lax.rsqrt(var + LN_EPS)
                y = y * g_ref[...] + beta_ref[...]
                y = jnp.maximum(y, 0.0)                              # ReLU
                y = jnp.dot(w2_ref[...], y,
                            preferred_element_type=jnp.float32) + b2_ref[...]
                term_ref[...] = y                                    # (C, 1)

        # ------------- phase 1: broadcast residual add ------------------------
        @pl.when(ph == 1)
        def _residual():
            x = x_ref[0].astype(jnp.float32)
            out_ref[0] = (x + term_ref[...]).astype(out_ref.dtype)

    return kernel


def _gc_pallas_call(B, C, HW_pad, hw_tile, dtype, *, hw_valid,
                    single_buffer_weights, mxu_context, vmem_limit_bytes):
    n_tiles = HW_pad // hw_tile
    need_mask = HW_pad != hw_valid
    kernel = _make_gc_kernel(hw_tile, hw_valid, need_mask, mxu_context)

    weight_kwargs = {}
    if single_buffer_weights:
        # Grid-invariant operands: fetched once, no need for double buffering.
        weight_kwargs["pipeline_mode"] = pl.Buffered(1)

    def _const_spec(shape):
        zero = tuple(0 for _ in shape)
        return pl.BlockSpec(shape, lambda b, ph, t: zero, **weight_kwargs)

    x_spec = pl.BlockSpec((1, C, hw_tile), lambda b, ph, t: (b, 0, t))
    # Phase 0 never writes the output; collapsing its block index onto
    # (b, 0, 0) keeps each output tile resident until phase 1 writes it, so
    # every output tile is DMA'd to HBM exactly once (lane-dense stores).
    out_spec = pl.BlockSpec((1, C, hw_tile), lambda b, ph, t: (b, 0, t * ph))

    grid_spec = pltpu.PrefetchScalarGridSpec(
        num_scalar_prefetch=0,
        grid=(B, 2, n_tiles),
        in_specs=[
            x_spec,                  # x            (B, C, HW_pad)
            _const_spec((1, C)),     # conv_mask W  (1, C)
            _const_spec((C, C)),     # conv1 W      (C, C)
            _const_spec((C, 1)),     # conv1 b      (C, 1)
            _const_spec((C, 1)),     # LN gamma     (C, 1)
            _const_spec((C, 1)),     # LN beta      (C, 1)
            _const_spec((C, C)),     # conv2 W      (C, C)
            _const_spec((C, 1)),     # conv2 b      (C, 1)
        ],
        out_specs=out_spec,
        scratch_shapes=[
            pltpu.VMEM((1, 1), jnp.float32),   # running softmax max
            pltpu.VMEM((1, 1), jnp.float32),   # running softmax denominator
            pltpu.VMEM((C, 1), jnp.float32),   # unnormalised context accumulator
            pltpu.VMEM((C, 1), jnp.float32),   # channel-add term
        ],
    )

    return pl.pallas_call(
        kernel,
        out_shape=jax.ShapeDtypeStruct((B, C, HW_pad), dtype),
        grid_spec=grid_spec,
        compiler_params=pltpu.CompilerParams(
            dimension_semantics=("parallel", "arbitrary", "arbitrary"),
            vmem_limit_bytes=int(vmem_limit_bytes),
        ),
    )


def gc_module_pallas(x, params):
    """GCModule forward: x (B, C, H, W) -> (B, C, H, W). bf16 or f32 x."""
    B, C, H, W = x.shape
    HW = H * W
    x_flat = x.reshape(B, C, HW)

    itemsize = jnp.dtype(x.dtype).itemsize
    vmem_budget = _vmem_budget_bytes()
    hw_tile, n_tiles = _choose_hw_tiling(C, HW, itemsize, vmem_budget)
    HW_pad = hw_tile * n_tiles
    if HW_pad != HW:
        x_flat = jnp.pad(x_flat, ((0, 0), (0, 0), (0, HW_pad - HW)))

    args = (x_flat, params["w_mask"], params["w1"], params["b1"],
            params["ln_gamma"], params["ln_beta"], params["w2"], params["b2"])

    # Preferred configuration first; fall back to more conservative lowerings
    # if a feature (single-buffered operand / transposed-rhs dot) is not
    # available in the installed Mosaic.
    configs = (
        dict(single_buffer_weights=True, mxu_context=True),
        dict(single_buffer_weights=False, mxu_context=True),
        dict(single_buffer_weights=False, mxu_context=False),
    )
    out, last_err = None, None
    for cfg in configs:
        try:
            call = _gc_pallas_call(B, C, HW_pad, hw_tile, x.dtype,
                                   hw_valid=HW, vmem_limit_bytes=vmem_budget,
                                   **cfg)
            out = jax.block_until_ready(call(*args))
            break
        except Exception as err:  # pragma: no cover - conservative fallback
            last_err, out = err, None
    if out is None:
        raise last_err

    return out[:, :, :HW].reshape(B, C, H, W)


def gc_module_reference(x, params):
    """Pure-JAX reference mirroring the PyTorch forward (att pooling)."""
    B, C, H, W = x.shape
    HW = H * W
    xf = x.reshape(B, C, HW).astype(jnp.float32)

    logits = jnp.einsum("oc,bcs->bos", params["w_mask"], xf)      # (B,1,HW)
    attn = jax.nn.softmax(logits, axis=-1)                        # (B,1,HW)
    context = jnp.einsum("bcs,bos->bc", xf, attn)[..., None]      # (B,C,1)

    y = jnp.einsum("oc,bci->boi", params["w1"], context) + params["b1"][None]
    mean = jnp.mean(y, axis=(1, 2), keepdims=True)
    var = jnp.mean((y - mean) ** 2, axis=(1, 2), keepdims=True)
    y = (y - mean) / jnp.sqrt(var + LN_EPS)
    y = y * params["ln_gamma"][None] + params["ln_beta"][None]
    y = jnp.maximum(y, 0.0)
    y = jnp.einsum("oc,bci->boi", params["w2"], y) + params["b2"][None]

    return xf.reshape(B, C, H, W) + y[..., None]                  # (B,C,H,W)


def init_params(key, channel):
    k1, k2, k3, k4, k5 = jax.random.split(key, 5)
    scale = 1.0 / jnp.sqrt(channel)
    return {
        # conv_mask: Conv2d(C, 1, k=1, bias=False) -> weight (1, C)
        "w_mask": jax.random.normal(k1, (1, channel), jnp.float32) * scale,
        # channel_add_conv[0]: Conv2d(C, C, k=1) -> weight (C, C), bias (C, 1)
        "w1": jax.random.normal(k2, (channel, channel), jnp.float32) * scale,
        "b1": jax.random.normal(k3, (channel, 1), jnp.float32) * scale,
        # channel_add_conv[1]: LayerNorm([C,1,1]) default init
        "ln_gamma": jnp.ones((channel, 1), jnp.float32),
        "ln_beta": jnp.zeros((channel, 1), jnp.float32),
        # channel_add_conv[3]: Conv2d(C, C, k=1) -> weight (C, C), bias (C, 1)
        "w2": jax.random.normal(k4, (channel, channel), jnp.float32) * scale,
        "b2": jax.random.normal(k5, (channel, 1), jnp.float32) * scale,
    }


if __name__ == "__main__":
    key = jax.random.PRNGKey(0)
    kx, kx2, kp = jax.random.split(key, 3)

    B, C = 2, 8
    params = init_params(kp, C)

    # Test 1: tile-aligned spatial size, f32 I/O.
    H, W = 16, 16
    x = jax.random.normal(kx, (B, C, H, W), jnp.float32)
    out = jax.block_until_ready(gc_module_pallas(x, params))
    ref = gc_module_reference(x, params)
    assert out.shape == (B, C, H, W)
    assert jnp.allclose(out, ref, atol=1e-4, rtol=1e-4), "mismatch (aligned case)"

    # Test 2: spatial size not a multiple of 128 lanes -> padded + masked softmax.
    H2, W2 = 9, 7
    x2 = jax.random.normal(kx2, (B, C, H2, W2), jnp.float32)
    out2 = jax.block_until_ready(gc_module_pallas(x2, params))
    ref2 = gc_module_reference(x2, params)
    assert jnp.allclose(out2, ref2, atol=1e-4, rtol=1e-4), "mismatch (masked case)"

    # Test 3: bf16 at the HBM interface (v6e/v7x bandwidth optimisation);
    # stats / LayerNorm / matmul accumulation stay f32 inside the kernel.
    xb = x.astype(jnp.bfloat16)
    outb = jax.block_until_ready(gc_module_pallas(xb, params))
    refb = gc_module_reference(xb.astype(jnp.float32), params)
    assert outb.dtype == jnp.bfloat16
    assert jnp.allclose(outb.astype(jnp.float32), refb, atol=1e-1, rtol=1e-1), \
        "mismatch (bf16 case)"

    print("KERNEL_OK")
</pallas_src>

<mosaic_0001>
module attributes {stable_mosaic.version = 11 : i64} {
  func.func @kernel(%arg0: i32, %arg1: i32, %arg2: i32, %arg3: memref<1x8x256xf32, #tpu.memory_space<vmem>>, %arg4: memref<1x8xf32, #tpu.memory_space<vmem>>, %arg5: memref<8x8xf32, #tpu.memory_space<vmem>>, %arg6: memref<8x1xf32, #tpu.memory_space<vmem>>, %arg7: memref<8x1xf32, #tpu.memory_space<vmem>>, %arg8: memref<8x1xf32, #tpu.memory_space<vmem>>, %arg9: memref<8x8xf32, #tpu.memory_space<vmem>>, %arg10: memref<8x1xf32, #tpu.memory_space<vmem>>, %arg11: memref<1x8x256xf32, #tpu.memory_space<vmem>>, %arg12: memref<1x1xf32, #tpu.memory_space<vmem>>, %arg13: memref<1x1xf32, #tpu.memory_space<vmem>>, %arg14: memref<8x1xf32, #tpu.memory_space<vmem>>, %arg15: memref<8x1xf32, #tpu.memory_space<vmem>>) attributes {dimension_semantics = [#tpu.dimension_semantics<parallel>, #tpu.dimension_semantics<arbitrary>, #tpu.dimension_semantics<arbitrary>], iteration_bounds = array<i64: 2, 2, 1>, scalar_prefetch = 0 : i64, scratch_operands = 4 : i64, tpu.core_type = #tpu.core_type<tc>, window_params = [{transform_indices = @transform_0, window_bounds = array<i64: 1, 8, 256>}, {pipeline_mode = #tpu.pipeline_mode<synchronous>, transform_indices = @transform_1, window_bounds = array<i64: 1, 8>}, {pipeline_mode = #tpu.pipeline_mode<synchronous>, transform_indices = @transform_2, window_bounds = array<i64: 8, 8>}, {pipeline_mode = #tpu.pipeline_mode<synchronous>, transform_indices = @transform_3, window_bounds = array<i64: 8, 1>}, {pipeline_mode = #tpu.pipeline_mode<synchronous>, transform_indices = @transform_4, window_bounds = array<i64: 8, 1>}, {pipeline_mode = #tpu.pipeline_mode<synchronous>, transform_indices = @transform_5, window_bounds = array<i64: 8, 1>}, {pipeline_mode = #tpu.pipeline_mode<synchronous>, transform_indices = @transform_6, window_bounds = array<i64: 8, 8>}, {pipeline_mode = #tpu.pipeline_mode<synchronous>, transform_indices = @transform_7, window_bounds = array<i64: 8, 1>}, {transform_indices = @transform_8, window_bounds = array<i64: 1, 8, 256>}]} {
    %c0_i32 = arith.constant 0 : i32
    %0 = arith.cmpi eq, %arg1, %c0_i32 : i32
    %1 = arith.extui %0 : i1 to i32
    %c0_i32_0 = arith.constant 0 : i32
    %2 = arith.cmpi ne, %1, %c0_i32_0 : i32
    scf.if %2 {
      %c0_i32_2 = arith.constant 0 : i32
      %6 = arith.cmpi eq, %arg2, %c0_i32_2 : i32
      %7 = arith.extui %6 : i1 to i32
      %c0_i32_3 = arith.constant 0 : i32
      %8 = arith.cmpi ne, %7, %c0_i32_3 : i32
      scf.if %8 {
        %cst_25 = arith.constant 0xFF800000 : f32
        %44 = vector.broadcast %cst_25 : f32 to vector<1x1xf32>
        %c0_26 = arith.constant 0 : index
        %c0_27 = arith.constant 0 : index
        %45 = vector.load %arg12[%c0_26, %c0_27] : memref<1x1xf32, #tpu.memory_space<vmem>>, vector<1x1xf32>
        tpu.vector_store %arg12[%c0_26, %c0_27], %44 {strides = array<i32>} : memref<1x1xf32, #tpu.memory_space<vmem>>, vector<1x1xf32>,
        %cst_28 = arith.constant 0.000000e+00 : f32
        %46 = vector.broadcast %cst_28 : f32 to vector<1x1xf32>
        %c0_29 = arith.constant 0 : index
        %c0_30 = arith.constant 0 : index
        %47 = vector.load %arg13[%c0_29, %c0_30] : memref<1x1xf32, #tpu.memory_space<vmem>>, vector<1x1xf32>
        tpu.vector_store %arg13[%c0_29, %c0_30], %46 {strides = array<i32>} : memref<1x1xf32, #tpu.memory_space<vmem>>, vector<1x1xf32>,
        %cst_31 = arith.constant 0.000000e+00 : f32
        %48 = vector.broadcast %cst_31 : f32 to vector<8x1xf32>
        %c0_32 = arith.constant 0 : index
        %c0_33 = arith.constant 0 : index
        %49 = vector.load %arg14[%c0_32, %c0_33] : memref<8x1xf32, #tpu.memory_space<vmem>>, vector<8x1xf32>
        tpu.vector_store %arg14[%c0_32, %c0_33], %48 {strides = array<i32>} : memref<8x1xf32, #tpu.memory_space<vmem>>, vector<8x1xf32>,
      } else {
      }
      %c0 = arith.constant 0 : index
      %c0_4 = arith.constant 0 : index
      %c0_5 = arith.constant 0 : index
      %9 = vector.load %arg3[%c0, %c0_4, %c0_5] : memref<1x8x256xf32, #tpu.memory_space<vmem>>, vector<1x8x256xf32>
      %10 = vector.shape_cast %9 : vector<1x8x256xf32> to vector<8x256xf32>
      %c0_6 = arith.constant 0 : index
      %c0_7 = arith.constant 0 : index
      %11 = vector.load %arg4[%c0_6, %c0_7] : memref<1x8xf32, #tpu.memory_space<vmem>>, vector<1x8xf32>
      %cst = arith.constant dense<0.000000e+00> : vector<1x256xf32>
      %12 = tpu.matmul %11, %10, %cst {dimension_numbers = #tpu.dot_dimension_numbers<[1], [0], [0], [1], [0, 0, 1, 1], [], []>} : vector<1x8xf32>, vector<8x256xf32>, vector<1x256xf32> -> vector<1x256xf32>
      %c0_8 = arith.constant 0 : index
      %c0_9 = arith.constant 0 : index
      %13 = vector.load %arg12[%c0_8, %c0_9] : memref<1x1xf32, #tpu.memory_space<vmem>>, vector<1x1xf32>
      %14 = vector.shape_cast %12 : vector<1x256xf32> to vector<1x1x256xf32>
      %cst_10 = arith.constant dense<0xFF800000> : vector<1xf32>
      %15 = vector.multi_reduction <maximumf>, %14, %cst_10 [1, 2] : vector<1x1x256xf32> to vector<1xf32>
      %16 = vector.shape_cast %15 : vector<1xf32> to vector<1x1x1xf32>
      %17 = vector.extract %16[0, 0, 0] : f32 from vector<1x1x1xf32>
      %18 = vector.broadcast %17 : f32 to vector<1x1xf32>
      %19 = arith.maximumf %13, %18 : vector<1x1xf32>
      %20 = arith.subf %13, %19 : vector<1x1xf32>
      %21 = math.exp %20 : vector<1x1xf32>
      %22 = vector.broadcast %19 : vector<1x1xf32> to vector<1x256xf32>
      %23 = arith.subf %12, %22 : vector<1x256xf32>
      %24 = math.exp %23 : vector<1x256xf32>
      %c0_11 = arith.constant 0 : index
      %c0_12 = arith.constant 0 : index
      %25 = vector.load %arg13[%c0_11, %c0_12] : memref<1x1xf32, #tpu.memory_space<vmem>>, vector<1x1xf32>
      %26 = arith.mulf %25, %21 : vector<1x1xf32>
      %27 = vector.shape_cast %24 : vector<1x256xf32> to vector<1x1x256xf32>
      %cst_13 = arith.constant dense<0.000000e+00> : vector<1xf32>
      %28 = vector.multi_reduction <add>, %27, %cst_13 [1, 2] : vector<1x1x256xf32> to vector<1xf32>
      %29 = vector.shape_cast %28 : vector<1xf32> to vector<1x1x1xf32>
      %30 = vector.extract %29[0, 0, 0] : f32 from vector<1x1x1xf32>
      %31 = vector.broadcast %30 : f32 to vector<1x1xf32>
      %32 = arith.addf %26, %31 : vector<1x1xf32>
      %c0_14 = arith.constant 0 : index
      %c0_15 = arith.constant 0 : index
      %33 = vector.load %arg13[%c0_14, %c0_15] : memref<1x1xf32, #tpu.memory_space<vmem>>, vector<1x1xf32>
      tpu.vector_store %arg13[%c0_14, %c0_15], %32 {strides = array<i32>} : memref<1x1xf32, #tpu.memory_space<vmem>>, vector<1x1xf32>,
      %cst_16 = arith.constant dense<0.000000e+00> : vector<8x1xf32>
      %34 = tpu.matmul %10, %24, %cst_16 {dimension_numbers = #tpu.dot_dimension_numbers<[1], [1], [0], [0], [0, 0, 1, 0], [], []>} : vector<8x256xf32>, vector<1x256xf32>, vector<8x1xf32> -> vector<8x1xf32>
      %c0_17 = arith.constant 0 : index
      %c0_18 = arith.constant 0 : index
      %35 = vector.load %arg14[%c0_17, %c0_18] : memref<8x1xf32, #tpu.memory_space<vmem>>, vector<8x1xf32>
      %36 = vector.broadcast %21 : vector<1x1xf32> to vector<8x1xf32>
      %37 = arith.mulf %35, %36 : vector<8x1xf32>
      %38 = arith.addf %37, %34 : vector<8x1xf32>
      %c0_19 = arith.constant 0 : index
      %c0_20 = arith.constant 0 : index
      %39 = vector.load %arg14[%c0_19, %c0_20] : memref<8x1xf32, #tpu.memory_space<vmem>>, vector<8x1xf32>
      tpu.vector_store %arg14[%c0_19, %c0_20], %38 {strides = array<i32>} : memref<8x1xf32, #tpu.memory_space<vmem>>, vector<8x1xf32>,
      %c0_21 = arith.constant 0 : index
      %c0_22 = arith.constant 0 : index
      %40 = vector.load %arg12[%c0_21, %c0_22] : memref<1x1xf32, #tpu.memory_space<vmem>>, vector<1x1xf32>
      tpu.vector_store %arg12[%c0_21, %c0_22], %19 {strides = array<i32>} : memref<1x1xf32, #tpu.memory_space<vmem>>, vector<1x1xf32>,
      %c0_i32_23 = arith.constant 0 : i32
      %41 = arith.cmpi eq, %arg2, %c0_i32_23 : i32
      %42 = arith.extui %41 : i1 to i32
      %c0_i32_24 = arith.constant 0 : i32
      %43 = arith.cmpi ne, %42, %c0_i32_24 : i32
      scf.if %43 {
        %c0_25 = arith.constant 0 : index
        %c0_26 = arith.constant 0 : index
        %44 = vector.load %arg14[%c0_25, %c0_26] : memref<8x1xf32, #tpu.memory_space<vmem>>, vector<8x1xf32>
        %c0_27 = arith.constant 0 : index
        %c0_28 = arith.constant 0 : index
        %45 = vector.load %arg13[%c0_27, %c0_28] : memref<1x1xf32, #tpu.memory_space<vmem>>, vector<1x1xf32>
        %46 = vector.broadcast %45 : vector<1x1xf32> to vector<8x1xf32>
        %47 = arith.divf %44, %46 : vector<8x1xf32>
        %c0_29 = arith.constant 0 : index
        %c0_30 = arith.constant 0 : index
        %48 = vector.load %arg5[%c0_29, %c0_30] : memref<8x8xf32, #tpu.memory_space<vmem>>, vector<8x8xf32>
        %cst_31 = arith.constant dense<0.000000e+00> : vector<8x1xf32>
        %49 = tpu.matmul %48, %47, %cst_31 {dimension_numbers = #tpu.dot_dimension_numbers<[1], [0], [0], [1], [0, 0, 1, 1], [], []>} : vector<8x8xf32>, vector<8x1xf32>, vector<8x1xf32> -> vector<8x1xf32>
        %c0_32 = arith.constant 0 : index
        %c0_33 = arith.constant 0 : index
        %50 = vector.load %arg6[%c0_32, %c0_33] : memref<8x1xf32, #tpu.memory_space<vmem>>, vector<8x1xf32>
        %51 = arith.addf %49, %50 : vector<8x1xf32>
        %52 = vector.shape_cast %51 : vector<8x1xf32> to vector<1x8x1xf32>
        %cst_34 = arith.constant dense<0.000000e+00> : vector<1xf32>
        %53 = vector.multi_reduction <add>, %52, %cst_34 [1, 2] : vector<1x8x1xf32> to vector<1xf32>
        %54 = vector.shape_cast %53 : vector<1xf32> to vector<1x1x1xf32>
        %55 = vector.extract %54[0, 0, 0] : f32 from vector<1x1x1xf32>
        %cst_35 = arith.constant 8.000000e+00 : f32
        %56 = arith.divf %55, %cst_35 : f32
        %57 = vector.broadcast %56 : f32 to vector<8x1xf32>
        %58 = arith.subf %51, %57 : vector<8x1xf32>
        %59 = vector.broadcast %56 : f32 to vector<8x1xf32>
        %60 = arith.subf %51, %59 : vector<8x1xf32>
        %61 = arith.mulf %58, %60 : vector<8x1xf32>
        %62 = vector.shape_cast %61 : vector<8x1xf32> to vector<1x8x1xf32>
        %cst_36 = arith.constant dense<0.000000e+00> : vector<1xf32>
        %63 = vector.multi_reduction <add>, %62, %cst_36 [1, 2] : vector<1x8x1xf32> to vector<1xf32>
        %64 = vector.shape_cast %63 : vector<1xf32> to vector<1x1x1xf32>
        %65 = vector.extract %64[0, 0, 0] : f32 from vector<1x1x1xf32>
        %cst_37 = arith.constant 8.000000e+00 : f32
        %66 = arith.divf %65, %cst_37 : f32
        %67 = vector.broadcast %56 : f32 to vector<8x1xf32>
        %68 = arith.subf %51, %67 : vector<8x1xf32>
        %cst_38 = arith.constant 9.99999974E-6 : f32
        %69 = arith.addf %66, %cst_38 : f32
        %70 = math.rsqrt %69 : f32
        %71 = vector.broadcast %70 : f32 to vector<8x1xf32>
        %72 = arith.mulf %68, %71 : vector<8x1xf32>
        %c0_39 = arith.constant 0 : index
        %c0_40 = arith.constant 0 : index
        %73 = vector.load %arg7[%c0_39, %c0_40] : memref<8x1xf32, #tpu.memory_space<vmem>>, vector<8x1xf32>
        %74 = arith.mulf %72, %73 : vector<8x1xf32>
        %c0_41 = arith.constant 0 : index
        %c0_42 = arith.constant 0 : index
        %75 = vector.load %arg8[%c0_41, %c0_42] : memref<8x1xf32, #tpu.memory_space<vmem>>, vector<8x1xf32>
        %76 = arith.addf %74, %75 : vector<8x1xf32>
        %cst_43 = arith.constant 0.000000e+00 : f32
        %77 = vector.broadcast %cst_43 : f32 to vector<8x1xf32>
        %78 = arith.maximumf %76, %77 : vector<8x1xf32>
        %c0_44 = arith.constant 0 : index
        %c0_45 = arith.constant 0 : index
        %79 = vector.load %arg9[%c0_44, %c0_45] : memref<8x8xf32, #tpu.memory_space<vmem>>, vector<8x8xf32>
        %cst_46 = arith.constant dense<0.000000e+00> : vector<8x1xf32>
        %80 = tpu.matmul %79, %78, %cst_46 {dimension_numbers = #tpu.dot_dimension_numbers<[1], [0], [0], [1], [0, 0, 1, 1], [], []>} : vector<8x8xf32>, vector<8x1xf32>, vector<8x1xf32> -> vector<8x1xf32>
        %c0_47 = arith.constant 0 : index
        %c0_48 = arith.constant 0 : index
        %81 = vector.load %arg10[%c0_47, %c0_48] : memref<8x1xf32, #tpu.memory_space<vmem>>, vector<8x1xf32>
        %82 = arith.addf %80, %81 : vector<8x1xf32>
        %c0_49 = arith.constant 0 : index
        %c0_50 = arith.constant 0 : index
        %83 = vector.load %arg15[%c0_49, %c0_50] : memref<8x1xf32, #tpu.memory_space<vmem>>, vector<8x1xf32>
        tpu.vector_store %arg15[%c0_49, %c0_50], %82 {strides = array<i32>} : memref<8x1xf32, #tpu.memory_space<vmem>>, vector<8x1xf32>,
      } else {
      }
    } else {
    }
    %c1_i32 = arith.constant 1 : i32
    %3 = arith.cmpi eq, %arg1, %c1_i32 : i32
    %4 = arith.extui %3 : i1 to i32
    %c0_i32_1 = arith.constant 0 : i32
    %5 = arith.cmpi ne, %4, %c0_i32_1 : i32
    scf.if %5 {
      %c0 = arith.constant 0 : index
      %c0_2 = arith.constant 0 : index
      %c0_3 = arith.constant 0 : index
      %6 = vector.load %arg3[%c0, %c0_2, %c0_3] : memref<1x8x256xf32, #tpu.memory_space<vmem>>, vector<1x8x256xf32>
      %7 = vector.shape_cast %6 : vector<1x8x256xf32> to vector<8x256xf32>
      %c0_4 = arith.constant 0 : index
      %c0_5 = arith.constant 0 : index
      %8 = vector.load %arg15[%c0_4, %c0_5] : memref<8x1xf32, #tpu.memory_space<vmem>>, vector<8x1xf32>
      %9 = vector.broadcast %8 : vector<8x1xf32> to vector<8x256xf32>
      %10 = arith.addf %7, %9 : vector<8x256xf32>
      %c0_6 = arith.constant 0 : index
      %c0_7 = arith.constant 0 : index
      %c0_8 = arith.constant 0 : index
      %11 = vector.load %arg11[%c0_6, %c0_7, %c0_8] : memref<1x8x256xf32, #tpu.memory_space<vmem>>, vector<1x8x256xf32>
      %12 = vector.shape_cast %11 : vector<1x8x256xf32> to vector<8x256xf32>
      %13 = vector.shape_cast %10 : vector<8x256xf32> to vector<1x8x256xf32>
      tpu.vector_store %arg11[%c0_6, %c0_7, %c0_8], %13 {strides = array<i32>} : memref<1x8x256xf32, #tpu.memory_space<vmem>>, vector<1x8x256xf32>,
    } else {
    }
    return
  }
  func.func @transform_0(%arg0: i32, %arg1: i32, %arg2: i32) -> (i32, i32, i32) {
    %c0_i32 = arith.constant 0 : i32
    %c0_i32_0 = arith.constant 0 : i32
    return %arg0, %c0_i32, %arg2 : i32, i32, i32
  }
  func.func @transform_1(%arg0: i32, %arg1: i32, %arg2: i32) -> (i32, i32) {
    %c0_i32 = arith.constant 0 : i32
    %c0_i32_0 = arith.constant 0 : i32
    %c0_i32_1 = arith.constant 0 : i32
    return %c0_i32, %c0_i32_0 : i32, i32
  }
  func.func @transform_2(%arg0: i32, %arg1: i32, %arg2: i32) -> (i32, i32) {
    %c0_i32 = arith.constant 0 : i32
    %c0_i32_0 = arith.constant 0 : i32
    %c0_i32_1 = arith.constant 0 : i32
    return %c0_i32, %c0_i32_0 : i32, i32
  }
  func.func @transform_3(%arg0: i32, %arg1: i32, %arg2: i32) -> (i32, i32) {
    %c0_i32 = arith.constant 0 : i32
    %c0_i32_0 = arith.constant 0 : i32
    %c0_i32_1 = arith.constant 0 : i32
    return %c0_i32, %c0_i32_0 : i32, i32
  }
  func.func @transform_4(%arg0: i32, %arg1: i32, %arg2: i32) -> (i32, i32) {
    %c0_i32 = arith.constant 0 : i32
    %c0_i32_0 = arith.constant 0 : i32
    %c0_i32_1 = arith.constant 0 : i32
    return %c0_i32, %c0_i32_0 : i32, i32
  }
  func.func @transform_5(%arg0: i32, %arg1: i32, %arg2: i32) -> (i32, i32) {
    %c0_i32 = arith.constant 0 : i32
    %c0_i32_0 = arith.constant 0 : i32
    %c0_i32_1 = arith.constant 0 : i32
    return %c0_i32, %c0_i32_0 : i32, i32
  }
  func.func @transform_6(%arg0: i32, %arg1: i32, %arg2: i32) -> (i32, i32) {
    %c0_i32 = arith.constant 0 : i32
    %c0_i32_0 = arith.constant 0 : i32
    %c0_i32_1 = arith.constant 0 : i32
    return %c0_i32, %c0_i32_0 : i32, i32
  }
  func.func @transform_7(%arg0: i32, %arg1: i32, %arg2: i32) -> (i32, i32) {
    %c0_i32 = arith.constant 0 : i32
    %c0_i32_0 = arith.constant 0 : i32
    %c0_i32_1 = arith.constant 0 : i32
    return %c0_i32, %c0_i32_0 : i32, i32
  }
  func.func @transform_8(%arg0: i32, %arg1: i32, %arg2: i32) -> (i32, i32, i32) {
    %0 = arith.muli %arg2, %arg1 : i32
    %c0_i32 = arith.constant 0 : i32
    %c0_i32_0 = arith.constant 0 : i32
    return %arg0, %c0_i32, %0 : i32, i32, i32
  }
}

module attributes {stable_mosaic.version = 11 : i64} {
  func.func @kernel(%arg0: i32, %arg1: i32, %arg2: i32, %arg3: memref<1x8x256xf32, #tpu.memory_space<vmem>>, %arg4: memref<1x8xf32, #tpu.memory_space<vmem>>, %arg5: memref<8x8xf32, #tpu.memory_space<vmem>>, %arg6: memref<8x1xf32, #tpu.memory_space<vmem>>, %arg7: memref<8x1xf32, #tpu.memory_space<vmem>>, %arg8: memref<8x1xf32, #tpu.memory_space<vmem>>, %arg9: memref<8x8xf32, #tpu.memory_space<vmem>>, %arg10: memref<8x1xf32, #tpu.memory_space<vmem>>, %arg11: memref<1x8x256xf32, #tpu.memory_space<vmem>>, %arg12: memref<1x1xf32, #tpu.memory_space<vmem>>, %arg13: memref<1x1xf32, #tpu.memory_space<vmem>>, %arg14: memref<8x1xf32, #tpu.memory_space<vmem>>, %arg15: memref<8x1xf32, #tpu.memory_space<vmem>>) attributes {dimension_semantics = [#tpu.dimension_semantics<parallel>, #tpu.dimension_semantics<arbitrary>, #tpu.dimension_semantics<arbitrary>], iteration_bounds = array<i64: 2, 2, 1>, scalar_prefetch = 0 : i64, scratch_operands = 4 : i64, tpu.core_type = #tpu.core_type<tc>, window_params = [{transform_indices = @transform_0, window_bounds = array<i64: 1, 8, 256>}, {pipeline_mode = #tpu.pipeline_mode<synchronous>, transform_indices = @transform_1, window_bounds = array<i64: 1, 8>}, {pipeline_mode = #tpu.pipeline_mode<synchronous>, transform_indices = @transform_2, window_bounds = array<i64: 8, 8>}, {pipeline_mode = #tpu.pipeline_mode<synchronous>, transform_indices = @transform_3, window_bounds = array<i64: 8, 1>}, {pipeline_mode = #tpu.pipeline_mode<synchronous>, transform_indices = @transform_4, window_bounds = array<i64: 8, 1>}, {pipeline_mode = #tpu.pipeline_mode<synchronous>, transform_indices = @transform_5, window_bounds = array<i64: 8, 1>}, {pipeline_mode = #tpu.pipeline_mode<synchronous>, transform_indices = @transform_6, window_bounds = array<i64: 8, 8>}, {pipeline_mode = #tpu.pipeline_mode<synchronous>, transform_indices = @transform_7, window_bounds = array<i64: 8, 1>}, {transform_indices = @transform_8, window_bounds = array<i64: 1, 8, 256>}]} {
    %c0_i32 = arith.constant 0 : i32
    %0 = arith.cmpi eq, %arg1, %c0_i32 : i32
    %1 = arith.extui %0 : i1 to i32
    %c0_i32_0 = arith.constant 0 : i32
    %2 = arith.cmpi ne, %1, %c0_i32_0 : i32
    scf.if %2 {
      %c0_i32_2 = arith.constant 0 : i32
      %6 = arith.cmpi eq, %arg2, %c0_i32_2 : i32
      %7 = arith.extui %6 : i1 to i32
      %c0_i32_3 = arith.constant 0 : i32
      %8 = arith.cmpi ne, %7, %c0_i32_3 : i32
      scf.if %8 {
        %cst_25 = arith.constant 0xFF800000 : f32
        %44 = vector.broadcast %cst_25 : f32 to vector<1x1xf32>
        %c0_26 = arith.constant 0 : index
        %c0_27 = arith.constant 0 : index
        %45 = vector.load %arg12[%c0_26, %c0_27] : memref<1x1xf32, #tpu.memory_space<vmem>>, vector<1x1xf32>
        tpu.vector_store %arg12[%c0_26, %c0_27], %44 {strides = array<i32>} : memref<1x1xf32, #tpu.memory_space<vmem>>, vector<1x1xf32>,
        %cst_28 = arith.constant 0.000000e+00 : f32
        %46 = vector.broadcast %cst_28 : f32 to vector<1x1xf32>
        %c0_29 = arith.constant 0 : index
        %c0_30 = arith.constant 0 : index
        %47 = vector.load %arg13[%c0_29, %c0_30] : memref<1x1xf32, #tpu.memory_space<vmem>>, vector<1x1xf32>
        tpu.vector_store %arg13[%c0_29, %c0_30], %46 {strides = array<i32>} : memref<1x1xf32, #tpu.memory_space<vmem>>, vector<1x1xf32>,
        %cst_31 = arith.constant 0.000000e+00 : f32
        %48 = vector.broadcast %cst_31 : f32 to vector<8x1xf32>
        %c0_32 = arith.constant 0 : index
        %c0_33 = arith.constant 0 : index
        %49 = vector.load %arg14[%c0_32, %c0_33] : memref<8x1xf32, #tpu.memory_space<vmem>>, vector<8x1xf32>
        tpu.vector_store %arg14[%c0_32, %c0_33], %48 {strides = array<i32>} : memref<8x1xf32, #tpu.memory_space<vmem>>, vector<8x1xf32>,
      } else {
      }
      %c0 = arith.constant 0 : index
      %c0_4 = arith.constant 0 : index
      %c0_5 = arith.constant 0 : index
      %9 = vector.load %arg3[%c0, %c0_4, %c0_5] : memref<1x8x256xf32, #tpu.memory_space<vmem>>, vector<1x8x256xf32>
      %10 = vector.shape_cast %9 : vector<1x8x256xf32> to vector<8x256xf32>
      %c0_6 = arith.constant 0 : index
      %c0_7 = arith.constant 0 : index
      %11 = vector.load %arg4[%c0_6, %c0_7] : memref<1x8xf32, #tpu.memory_space<vmem>>, vector<1x8xf32>
      %cst = arith.constant dense<0.000000e+00> : vector<1x256xf32>
      %12 = tpu.matmul %11, %10, %cst {dimension_numbers = #tpu.dot_dimension_numbers<[1], [0], [0], [1], [0, 0, 1, 1], [], []>} : vector<1x8xf32>, vector<8x256xf32>, vector<1x256xf32> -> vector<1x256xf32>
      %c0_8 = arith.constant 0 : index
      %c0_9 = arith.constant 0 : index
      %13 = vector.load %arg12[%c0_8, %c0_9] : memref<1x1xf32, #tpu.memory_space<vmem>>, vector<1x1xf32>
      %14 = vector.shape_cast %12 : vector<1x256xf32> to vector<1x1x256xf32>
      %cst_10 = arith.constant dense<0xFF800000> : vector<1xf32>
      %15 = vector.multi_reduction <maximumf>, %14, %cst_10 [1, 2] : vector<1x1x256xf32> to vector<1xf32>
      %16 = vector.shape_cast %15 : vector<1xf32> to vector<1x1x1xf32>
      %17 = vector.extract %16[0, 0, 0] : f32 from vector<1x1x1xf32>
      %18 = vector.broadcast %17 : f32 to vector<1x1xf32>
      %19 = arith.maximumf %13, %18 : vector<1x1xf32>
      %20 = arith.subf %13, %19 : vector<1x1xf32>
      %21 = math.exp %20 : vector<1x1xf32>
      %22 = vector.broadcast %19 : vector<1x1xf32> to vector<1x256xf32>
      %23 = arith.subf %12, %22 : vector<1x256xf32>
      %24 = math.exp %23 : vector<1x256xf32>
      %c0_11 = arith.constant 0 : index
      %c0_12 = arith.constant 0 : index
      %25 = vector.load %arg13[%c0_11, %c0_12] : memref<1x1xf32, #tpu.memory_space<vmem>>, vector<1x1xf32>
      %26 = arith.mulf %25, %21 : vector<1x1xf32>
      %27 = vector.shape_cast %24 : vector<1x256xf32> to vector<1x1x256xf32>
      %cst_13 = arith.constant dense<0.000000e+00> : vector<1xf32>
      %28 = vector.multi_reduction <add>, %27, %cst_13 [1, 2] : vector<1x1x256xf32> to vector<1xf32>
      %29 = vector.shape_cast %28 : vector<1xf32> to vector<1x1x1xf32>
      %30 = vector.extract %29[0, 0, 0] : f32 from vector<1x1x1xf32>
      %31 = vector.broadcast %30 : f32 to vector<1x1xf32>
      %32 = arith.addf %26, %31 : vector<1x1xf32>
      %c0_14 = arith.constant 0 : index
      %c0_15 = arith.constant 0 : index
      %33 = vector.load %arg13[%c0_14, %c0_15] : memref<1x1xf32, #tpu.memory_space<vmem>>, vector<1x1xf32>
      tpu.vector_store %arg13[%c0_14, %c0_15], %32 {strides = array<i32>} : memref<1x1xf32, #tpu.memory_space<vmem>>, vector<1x1xf32>,
      %cst_16 = arith.constant dense<0.000000e+00> : vector<8x1xf32>
      %34 = tpu.matmul %10, %24, %cst_16 {dimension_numbers = #tpu.dot_dimension_numbers<[1], [1], [0], [0], [0, 0, 1, 0], [], []>} : vector<8x256xf32>, vector<1x256xf32>, vector<8x1xf32> -> vector<8x1xf32>
      %c0_17 = arith.constant 0 : index
      %c0_18 = arith.constant 0 : index
      %35 = vector.load %arg14[%c0_17, %c0_18] : memref<8x1xf32, #tpu.memory_space<vmem>>, vector<8x1xf32>
      %36 = vector.broadcast %21 : vector<1x1xf32> to vector<8x1xf32>
      %37 = arith.mulf %35, %36 : vector<8x1xf32>
      %38 = arith.addf %37, %34 : vector<8x1xf32>
      %c0_19 = arith.constant 0 : index
      %c0_20 = arith.constant 0 : index
      %39 = vector.load %arg14[%c0_19, %c0_20] : memref<8x1xf32, #tpu.memory_space<vmem>>, vector<8x1xf32>
      tpu.vector_store %arg14[%c0_19, %c0_20], %38 {strides = array<i32>} : memref<8x1xf32, #tpu.memory_space<vmem>>, vector<8x1xf32>,
      %c0_21 = arith.constant 0 : index
      %c0_22 = arith.constant 0 : index
      %40 = vector.load %arg12[%c0_21, %c0_22] : memref<1x1xf32, #tpu.memory_space<vmem>>, vector<1x1xf32>
      tpu.vector_store %arg12[%c0_21, %c0_22], %19 {strides = array<i32>} : memref<1x1xf32, #tpu.memory_space<vmem>>, vector<1x1xf32>,
      %c0_i32_23 = arith.constant 0 : i32
      %41 = arith.cmpi eq, %arg2, %c0_i32_23 : i32
      %42 = arith.extui %41 : i1 to i32
      %c0_i32_24 = arith.constant 0 : i32
      %43 = arith.cmpi ne, %42, %c0_i32_24 : i32
      scf.if %43 {
        %c0_25 = arith.constant 0 : index
        %c0_26 = arith.constant 0 : index
        %44 = vector.load %arg14[%c0_25, %c0_26] : memref<8x1xf32, #tpu.memory_space<vmem>>, vector<8x1xf32>
        %c0_27 = arith.constant 0 : index
        %c0_28 = arith.constant 0 : index
        %45 = vector.load %arg13[%c0_27, %c0_28] : memref<1x1xf32, #tpu.memory_space<vmem>>, vector<1x1xf32>
        %46 = vector.broadcast %45 : vector<1x1xf32> to vector<8x1xf32>
        %47 = arith.divf %44, %46 : vector<8x1xf32>
        %c0_29 = arith.constant 0 : index
        %c0_30 = arith.constant 0 : index
        %48 = vector.load %arg5[%c0_29, %c0_30] : memref<8x8xf32, #tpu.memory_space<vmem>>, vector<8x8xf32>
        %cst_31 = arith.constant dense<0.000000e+00> : vector<8x1xf32>
        %49 = tpu.matmul %48, %47, %cst_31 {dimension_numbers = #tpu.dot_dimension_numbers<[1], [0], [0], [1], [0, 0, 1, 1], [], []>} : vector<8x8xf32>, vector<8x1xf32>, vector<8x1xf32> -> vector<8x1xf32>
        %c0_32 = arith.constant 0 : index
        %c0_33 = arith.constant 0 : index
        %50 = vector.load %arg6[%c0_32, %c0_33] : memref<8x1xf32, #tpu.memory_space<vmem>>, vector<8x1xf32>
        %51 = arith.addf %49, %50 : vector<8x1xf32>
        %52 = vector.shape_cast %51 : vector<8x1xf32> to vector<1x8x1xf32>
        %cst_34 = arith.constant dense<0.000000e+00> : vector<1xf32>
        %53 = vector.multi_reduction <add>, %52, %cst_34 [1, 2] : vector<1x8x1xf32> to vector<1xf32>
        %54 = vector.shape_cast %53 : vector<1xf32> to vector<1x1x1xf32>
        %55 = vector.extract %54[0, 0, 0] : f32 from vector<1x1x1xf32>
        %cst_35 = arith.constant 8.000000e+00 : f32
        %56 = arith.divf %55, %cst_35 : f32
        %57 = vector.broadcast %56 : f32 to vector<8x1xf32>
        %58 = arith.subf %51, %57 : vector<8x1xf32>
        %59 = vector.broadcast %56 : f32 to vector<8x1xf32>
        %60 = arith.subf %51, %59 : vector<8x1xf32>
        %61 = arith.mulf %58, %60 : vector<8x1xf32>
        %62 = vector.shape_cast %61 : vector<8x1xf32> to vector<1x8x1xf32>
        %cst_36 = arith.constant dense<0.000000e+00> : vector<1xf32>
        %63 = vector.multi_reduction <add>, %62, %cst_36 [1, 2] : vector<1x8x1xf32> to vector<1xf32>
        %64 = vector.shape_cast %63 : vector<1xf32> to vector<1x1x1xf32>
        %65 = vector.extract %64[0, 0, 0] : f32 from vector<1x1x1xf32>
        %cst_37 = arith.constant 8.000000e+00 : f32
        %66 = arith.divf %65, %cst_37 : f32
        %67 = vector.broadcast %56 : f32 to vector<8x1xf32>
        %68 = arith.subf %51, %67 : vector<8x1xf32>
        %cst_38 = arith.constant 9.99999974E-6 : f32
        %69 = arith.addf %66, %cst_38 : f32
        %70 = math.rsqrt %69 : f32
        %71 = vector.broadcast %70 : f32 to vector<8x1xf32>
        %72 = arith.mulf %68, %71 : vector<8x1xf32>
        %c0_39 = arith.constant 0 : index
        %c0_40 = arith.constant 0 : index
        %73 = vector.load %arg7[%c0_39, %c0_40] : memref<8x1xf32, #tpu.memory_space<vmem>>, vector<8x1xf32>
        %74 = arith.mulf %72, %73 : vector<8x1xf32>
        %c0_41 = arith.constant 0 : index
        %c0_42 = arith.constant 0 : index
        %75 = vector.load %arg8[%c0_41, %c0_42] : memref<8x1xf32, #tpu.memory_space<vmem>>, vector<8x1xf32>
        %76 = arith.addf %74, %75 : vector<8x1xf32>
        %cst_43 = arith.constant 0.000000e+00 : f32
        %77 = vector.broadcast %cst_43 : f32 to vector<8x1xf32>
        %78 = arith.maximumf %76, %77 : vector<8x1xf32>
        %c0_44 = arith.constant 0 : index
        %c0_45 = arith.constant 0 : index
        %79 = vector.load %arg9[%c0_44, %c0_45] : memref<8x8xf32, #tpu.memory_space<vmem>>, vector<8x8xf32>
        %cst_46 = arith.constant dense<0.000000e+00> : vector<8x1xf32>
        %80 = tpu.matmul %79, %78, %cst_46 {dimension_numbers = #tpu.dot_dimension_numbers<[1], [0], [0], [1], [0, 0, 1, 1], [], []>} : vector<8x8xf32>, vector<8x1xf32>, vector<8x1xf32> -> vector<8x1xf32>
        %c0_47 = arith.constant 0 : index
        %c0_48 = arith.constant 0 : index
        %81 = vector.load %arg10[%c0_47, %c0_48] : memref<8x1xf32, #tpu.memory_space<vmem>>, vector<8x1xf32>
        %82 = arith.addf %80, %81 : vector<8x1xf32>
        %c0_49 = arith.constant 0 : index
        %c0_50 = arith.constant 0 : index
        %83 = vector.load %arg15[%c0_49, %c0_50] : memref<8x1xf32, #tpu.memory_space<vmem>>, vector<8x1xf32>
        tpu.vector_store %arg15[%c0_49, %c0_50], %82 {strides = array<i32>} : memref<8x1xf32, #tpu.memory_space<vmem>>, vector<8x1xf32>,
      } else {
      }
    } else {
    }
    %c1_i32 = arith.constant 1 : i32
    %3 = arith.cmpi eq, %arg1, %c1_i32 : i32
    %4 = arith.extui %3 : i1 to i32
    %c0_i32_1 = arith.constant 0 : i32
    %5 = arith.cmpi ne, %4, %c0_i32_1 : i32
    scf.if %5 {
      %c0 = arith.constant 0 : index
      %c0_2 = arith.constant 0 : index
      %c0_3 = arith.constant 0 : index
      %6 = vector.load %arg3[%c0, %c0_2, %c0_3] : memref<1x8x256xf32, #tpu.memory_space<vmem>>, vector<1x8x256xf32>
      %7 = vector.shape_cast %6 : vector<1x8x256xf32> to vector<8x256xf32>
      %c0_4 = arith.constant 0 : index
      %c0_5 = arith.constant 0 : index
      %8 = vector.load %arg15[%c0_4, %c0_5] : memref<8x1xf32, #tpu.memory_space<vmem>>, vector<8x1xf32>
      %9 = vector.broadcast %8 : vector<8x1xf32> to vector<8x256xf32>
      %10 = arith.addf %7, %9 : vector<8x256xf32>
      %c0_6 = arith.constant 0 : index
      %c0_7 = arith.constant 0 : index
      %c0_8 = arith.constant 0 : index
      %11 = vector.load %arg11[%c0_6, %c0_7, %c0_8] : memref<1x8x256xf32, #tpu.memory_space<vmem>>, vector<1x8x256xf32>
      %12 = vector.shape_cast %11 : vector<1x8x256xf32> to vector<8x256xf32>
      %13 = vector.shape_cast %10 : vector<8x256xf32> to vector<1x8x256xf32>
      tpu.vector_store %arg11[%c0_6, %c0_7, %c0_8], %13 {strides = array<i32>} : memref<1x8x256xf32, #tpu.memory_space<vmem>>, vector<1x8x256xf32>,
    } else {
    }
    return
  }
  func.func @transform_0(%arg0: i32, %arg1: i32, %arg2: i32) -> (i32, i32, i32) {
    %c0_i32 = arith.constant 0 : i32
    %c0_i32_0 = arith.constant 0 : i32
    return %arg0, %c0_i32, %arg2 : i32, i32, i32
  }
  func.func @transform_1(%arg0: i32, %arg1: i32, %arg2: i32) -> (i32, i32) {
    %c0_i32 = arith.constant 0 : i32
    %c0_i32_0 = arith.constant 0 : i32
    %c0_i32_1 = arith.constant 0 : i32
    return %c0_i32, %c0_i32_0 : i32, i32
  }
  func.func @transform_2(%arg0: i32, %arg1: i32, %arg2: i32) -> (i32, i32) {
    %c0_i32 = arith.constant 0 : i32
    %c0_i32_0 = arith.constant 0 : i32
    %c0_i32_1 = arith.constant 0 : i32
    return %c0_i32, %c0_i32_0 : i32, i32
  }
  func.func @transform_3(%arg0: i32, %arg1: i32, %arg2: i32) -> (i32, i32) {
    %c0_i32 = arith.constant 0 : i32
    %c0_i32_0 = arith.constant 0 : i32
    %c0_i32_1 = arith.constant 0 : i32
    return %c0_i32, %c0_i32_0 : i32, i32
  }
  func.func @transform_4(%arg0: i32, %arg1: i32, %arg2: i32) -> (i32, i32) {
    %c0_i32 = arith.constant 0 : i32
    %c0_i32_0 = arith.constant 0 : i32
    %c0_i32_1 = arith.constant 0 : i32
    return %c0_i32, %c0_i32_0 : i32, i32
  }
  func.func @transform_5(%arg0: i32, %arg1: i32, %arg2: i32) -> (i32, i32) {
    %c0_i32 = arith.constant 0 : i32
    %c0_i32_0 = arith.constant 0 : i32
    %c0_i32_1 = arith.constant 0 : i32
    return %c0_i32, %c0_i32_0 : i32, i32
  }
  func.func @transform_6(%arg0: i32, %arg1: i32, %arg2: i32) -> (i32, i32) {
    %c0_i32 = arith.constant 0 : i32
    %c0_i32_0 = arith.constant 0 : i32
    %c0_i32_1 = arith.constant 0 : i32
    return %c0_i32, %c0_i32_0 : i32, i32
  }
  func.func @transform_7(%arg0: i32, %arg1: i32, %arg2: i32) -> (i32, i32) {
    %c0_i32 = arith.constant 0 : i32
    %c0_i32_0 = arith.constant 0 : i32
    %c0_i32_1 = arith.constant 0 : i32
    return %c0_i32, %c0_i32_0 : i32, i32
  }
  func.func @transform_8(%arg0: i32, %arg1: i32, %arg2: i32) -> (i32, i32, i32) {
    %0 = arith.muli %arg2, %arg1 : i32
    %c0_i32 = arith.constant 0 : i32
    %c0_i32_0 = arith.constant 0 : i32
    return %arg0, %c0_i32, %0 : i32, i32, i32
  }
}

module attributes {stable_mosaic.version = 11 : i64} {
  func.func @kernel(%arg0: i32, %arg1: i32, %arg2: i32, %arg3: memref<1x8x256xf32, #tpu.memory_space<vmem>>, %arg4: memref<1x8xf32, #tpu.memory_space<vmem>>, %arg5: memref<8x8xf32, #tpu.memory_space<vmem>>, %arg6: memref<8x1xf32, #tpu.memory_space<vmem>>, %arg7: memref<8x1xf32, #tpu.memory_space<vmem>>, %arg8: memref<8x1xf32, #tpu.memory_space<vmem>>, %arg9: memref<8x8xf32, #tpu.memory_space<vmem>>, %arg10: memref<8x1xf32, #tpu.memory_space<vmem>>, %arg11: memref<1x8x256xf32, #tpu.memory_space<vmem>>, %arg12: memref<1x1xf32, #tpu.memory_space<vmem>>, %arg13: memref<1x1xf32, #tpu.memory_space<vmem>>, %arg14: memref<8x1xf32, #tpu.memory_space<vmem>>, %arg15: memref<8x1xf32, #tpu.memory_space<vmem>>) attributes {dimension_semantics = [#tpu.dimension_semantics<parallel>, #tpu.dimension_semantics<arbitrary>, #tpu.dimension_semantics<arbitrary>], iteration_bounds = array<i64: 2, 2, 1>, scalar_prefetch = 0 : i64, scratch_operands = 4 : i64, tpu.core_type = #tpu.core_type<tc>, window_params = [{transform_indices = @transform_0, window_bounds = array<i64: 1, 8, 256>}, {pipeline_mode = #tpu.pipeline_mode<synchronous>, transform_indices = @transform_1, window_bounds = array<i64: 1, 8>}, {pipeline_mode = #tpu.pipeline_mode<synchronous>, transform_indices = @transform_2, window_bounds = array<i64: 8, 8>}, {pipeline_mode = #tpu.pipeline_mode<synchronous>, transform_indices = @transform_3, window_bounds = array<i64: 8, 1>}, {pipeline_mode = #tpu.pipeline_mode<synchronous>, transform_indices = @transform_4, window_bounds = array<i64: 8, 1>}, {pipeline_mode = #tpu.pipeline_mode<synchronous>, transform_indices = @transform_5, window_bounds = array<i64: 8, 1>}, {pipeline_mode = #tpu.pipeline_mode<synchronous>, transform_indices = @transform_6, window_bounds = array<i64: 8, 8>}, {pipeline_mode = #tpu.pipeline_mode<synchronous>, transform_indices = @transform_7, window_bounds = array<i64: 8, 1>}, {transform_indices = @transform_8, window_bounds = array<i64: 1, 8, 256>}]} {
    %c0_i32 = arith.constant 0 : i32
    %0 = arith.cmpi eq, %arg1, %c0_i32 : i32
    %1 = arith.extui %0 : i1 to i32
    %c0_i32_0 = arith.constant 0 : i32
    %2 = arith.cmpi ne, %1, %c0_i32_0 : i32
    scf.if %2 {
      %c0_i32_2 = arith.constant 0 : i32
      %6 = arith.cmpi eq, %arg2, %c0_i32_2 : i32
      %7 = arith.extui %6 : i1 to i32
      %c0_i32_3 = arith.constant 0 : i32
      %8 = arith.cmpi ne, %7, %c0_i32_3 : i32
      scf.if %8 {
        %cst_25 = arith.constant 0xFF800000 : f32
        %47 = vector.broadcast %cst_25 : f32 to vector<1x1xf32>
        %c0_26 = arith.constant 0 : index
        %c0_27 = arith.constant 0 : index
        %48 = vector.load %arg12[%c0_26, %c0_27] : memref<1x1xf32, #tpu.memory_space<vmem>>, vector<1x1xf32>
        tpu.vector_store %arg12[%c0_26, %c0_27], %47 {strides = array<i32>} : memref<1x1xf32, #tpu.memory_space<vmem>>, vector<1x1xf32>,
        %cst_28 = arith.constant 0.000000e+00 : f32
        %49 = vector.broadcast %cst_28 : f32 to vector<1x1xf32>
        %c0_29 = arith.constant 0 : index
        %c0_30 = arith.constant 0 : index
        %50 = vector.load %arg13[%c0_29, %c0_30] : memref<1x1xf32, #tpu.memory_space<vmem>>, vector<1x1xf32>
        tpu.vector_store %arg13[%c0_29, %c0_30], %49 {strides = array<i32>} : memref<1x1xf32, #tpu.memory_space<vmem>>, vector<1x1xf32>,
        %cst_31 = arith.constant 0.000000e+00 : f32
        %51 = vector.broadcast %cst_31 : f32 to vector<8x1xf32>
        %c0_32 = arith.constant 0 : index
        %c0_33 = arith.constant 0 : index
        %52 = vector.load %arg14[%c0_32, %c0_33] : memref<8x1xf32, #tpu.memory_space<vmem>>, vector<8x1xf32>
        tpu.vector_store %arg14[%c0_32, %c0_33], %51 {strides = array<i32>} : memref<8x1xf32, #tpu.memory_space<vmem>>, vector<8x1xf32>,
      } else {
      }
      %c0 = arith.constant 0 : index
      %c0_4 = arith.constant 0 : index
      %c0_5 = arith.constant 0 : index
      %9 = vector.load %arg3[%c0, %c0_4, %c0_5] : memref<1x8x256xf32, #tpu.memory_space<vmem>>, vector<1x8x256xf32>
      %10 = vector.shape_cast %9 : vector<1x8x256xf32> to vector<8x256xf32>
      %c0_6 = arith.constant 0 : index
      %c0_7 = arith.constant 0 : index
      %11 = vector.load %arg4[%c0_6, %c0_7] : memref<1x8xf32, #tpu.memory_space<vmem>>, vector<1x8xf32>
      %cst = arith.constant dense<0.000000e+00> : vector<1x256xf32>
      %12 = tpu.matmul %11, %10, %cst {dimension_numbers = #tpu.dot_dimension_numbers<[1], [0], [0], [1], [0, 0, 1, 1], [], []>} : vector<1x8xf32>, vector<8x256xf32>, vector<1x256xf32> -> vector<1x256xf32>
      %c0_8 = arith.constant 0 : index
      %c0_9 = arith.constant 0 : index
      %13 = vector.load %arg12[%c0_8, %c0_9] : memref<1x1xf32, #tpu.memory_space<vmem>>, vector<1x1xf32>
      %14 = vector.shape_cast %12 : vector<1x256xf32> to vector<1x1x256xf32>
      %cst_10 = arith.constant dense<0xFF800000> : vector<1xf32>
      %15 = vector.multi_reduction <maximumf>, %14, %cst_10 [1, 2] : vector<1x1x256xf32> to vector<1xf32>
      %16 = vector.shape_cast %15 : vector<1xf32> to vector<1x1x1xf32>
      %17 = vector.extract %16[0, 0, 0] : f32 from vector<1x1x1xf32>
      %18 = vector.broadcast %17 : f32 to vector<1x1xf32>
      %19 = arith.maximumf %13, %18 : vector<1x1xf32>
      %20 = arith.subf %13, %19 : vector<1x1xf32>
      %21 = math.exp %20 : vector<1x1xf32>
      %22 = vector.broadcast %19 : vector<1x1xf32> to vector<1x256xf32>
      %23 = arith.subf %12, %22 : vector<1x256xf32>
      %24 = math.exp %23 : vector<1x256xf32>
      %c0_11 = arith.constant 0 : index
      %c0_12 = arith.constant 0 : index
      %25 = vector.load %arg13[%c0_11, %c0_12] : memref<1x1xf32, #tpu.memory_space<vmem>>, vector<1x1xf32>
      %26 = arith.mulf %25, %21 : vector<1x1xf32>
      %27 = vector.shape_cast %24 : vector<1x256xf32> to vector<1x1x256xf32>
      %cst_13 = arith.constant dense<0.000000e+00> : vector<1xf32>
      %28 = vector.multi_reduction <add>, %27, %cst_13 [1, 2] : vector<1x1x256xf32> to vector<1xf32>
      %29 = vector.shape_cast %28 : vector<1xf32> to vector<1x1x1xf32>
      %30 = vector.extract %29[0, 0, 0] : f32 from vector<1x1x1xf32>
      %31 = vector.broadcast %30 : f32 to vector<1x1xf32>
      %32 = arith.addf %26, %31 : vector<1x1xf32>
      %c0_14 = arith.constant 0 : index
      %c0_15 = arith.constant 0 : index
      %33 = vector.load %arg13[%c0_14, %c0_15] : memref<1x1xf32, #tpu.memory_space<vmem>>, vector<1x1xf32>
      tpu.vector_store %arg13[%c0_14, %c0_15], %32 {strides = array<i32>} : memref<1x1xf32, #tpu.memory_space<vmem>>, vector<1x1xf32>,
      %34 = vector.broadcast %24 : vector<1x256xf32> to vector<8x256xf32>
      %35 = arith.mulf %10, %34 : vector<8x256xf32>
      %cst_16 = arith.constant dense<0.000000e+00> : vector<8xf32>
      %36 = vector.multi_reduction <add>, %35, %cst_16 [1] : vector<8x256xf32> to vector<8xf32>
      %37 = vector.shape_cast %36 : vector<8xf32> to vector<8x1xf32>
      %c0_17 = arith.constant 0 : index
      %c0_18 = arith.constant 0 : index
      %38 = vector.load %arg14[%c0_17, %c0_18] : memref<8x1xf32, #tpu.memory_space<vmem>>, vector<8x1xf32>
      %39 = vector.broadcast %21 : vector<1x1xf32> to vector<8x1xf32>
      %40 = arith.mulf %38, %39 : vector<8x1xf32>
      %41 = arith.addf %40, %37 : vector<8x1xf32>
      %c0_19 = arith.constant 0 : index
      %c0_20 = arith.constant 0 : index
      %42 = vector.load %arg14[%c0_19, %c0_20] : memref<8x1xf32, #tpu.memory_space<vmem>>, vector<8x1xf32>
      tpu.vector_store %arg14[%c0_19, %c0_20], %41 {strides = array<i32>} : memref<8x1xf32, #tpu.memory_space<vmem>>, vector<8x1xf32>,
      %c0_21 = arith.constant 0 : index
      %c0_22 = arith.constant 0 : index
      %43 = vector.load %arg12[%c0_21, %c0_22] : memref<1x1xf32, #tpu.memory_space<vmem>>, vector<1x1xf32>
      tpu.vector_store %arg12[%c0_21, %c0_22], %19 {strides = array<i32>} : memref<1x1xf32, #tpu.memory_space<vmem>>, vector<1x1xf32>,
      %c0_i32_23 = arith.constant 0 : i32
      %44 = arith.cmpi eq, %arg2, %c0_i32_23 : i32
      %45 = arith.extui %44 : i1 to i32
      %c0_i32_24 = arith.constant 0 : i32
      %46 = arith.cmpi ne, %45, %c0_i32_24 : i32
      scf.if %46 {
        %c0_25 = arith.constant 0 : index
        %c0_26 = arith.constant 0 : index
        %47 = vector.load %arg14[%c0_25, %c0_26] : memref<8x1xf32, #tpu.memory_space<vmem>>, vector<8x1xf32>
        %c0_27 = arith.constant 0 : index
        %c0_28 = arith.constant 0 : index
        %48 = vector.load %arg13[%c0_27, %c0_28] : memref<1x1xf32, #tpu.memory_space<vmem>>, vector<1x1xf32>
        %49 = vector.broadcast %48 : vector<1x1xf32> to vector<8x1xf32>
        %50 = arith.divf %47, %49 : vector<8x1xf32>
        %c0_29 = arith.constant 0 : index
        %c0_30 = arith.constant 0 : index
        %51 = vector.load %arg5[%c0_29, %c0_30] : memref<8x8xf32, #tpu.memory_space<vmem>>, vector<8x8xf32>
        %cst_31 = arith.constant dense<0.000000e+00> : vector<8x1xf32>
        %52 = tpu.matmul %51, %50, %cst_31 {dimension_numbers = #tpu.dot_dimension_numbers<[1], [0], [0], [1], [0, 0, 1, 1], [], []>} : vector<8x8xf32>, vector<8x1xf32>, vector<8x1xf32> -> vector<8x1xf32>
        %c0_32 = arith.constant 0 : index
        %c0_33 = arith.constant 0 : index
        %53 = vector.load %arg6[%c0_32, %c0_33] : memref<8x1xf32, #tpu.memory_space<vmem>>, vector<8x1xf32>
        %54 = arith.addf %52, %53 : vector<8x1xf32>
        %55 = vector.shape_cast %54 : vector<8x1xf32> to vector<1x8x1xf32>
        %cst_34 = arith.constant dense<0.000000e+00> : vector<1xf32>
        %56 = vector.multi_reduction <add>, %55, %cst_34 [1, 2] : vector<1x8x1xf32> to vector<1xf32>
        %57 = vector.shape_cast %56 : vector<1xf32> to vector<1x1x1xf32>
        %58 = vector.extract %57[0, 0, 0] : f32 from vector<1x1x1xf32>
        %cst_35 = arith.constant 8.000000e+00 : f32
        %59 = arith.divf %58, %cst_35 : f32
        %60 = vector.broadcast %59 : f32 to vector<8x1xf32>
        %61 = arith.subf %54, %60 : vector<8x1xf32>
        %62 = vector.broadcast %59 : f32 to vector<8x1xf32>
        %63 = arith.subf %54, %62 : vector<8x1xf32>
        %64 = arith.mulf %61, %63 : vector<8x1xf32>
        %65 = vector.shape_cast %64 : vector<8x1xf32> to vector<1x8x1xf32>
        %cst_36 = arith.constant dense<0.000000e+00> : vector<1xf32>
        %66 = vector.multi_reduction <add>, %65, %cst_36 [1, 2] : vector<1x8x1xf32> to vector<1xf32>
        %67 = vector.shape_cast %66 : vector<1xf32> to vector<1x1x1xf32>
        %68 = vector.extract %67[0, 0, 0] : f32 from vector<1x1x1xf32>
        %cst_37 = arith.constant 8.000000e+00 : f32
        %69 = arith.divf %68, %cst_37 : f32
        %70 = vector.broadcast %59 : f32 to vector<8x1xf32>
        %71 = arith.subf %54, %70 : vector<8x1xf32>
        %cst_38 = arith.constant 9.99999974E-6 : f32
        %72 = arith.addf %69, %cst_38 : f32
        %73 = math.rsqrt %72 : f32
        %74 = vector.broadcast %73 : f32 to vector<8x1xf32>
        %75 = arith.mulf %71, %74 : vector<8x1xf32>
        %c0_39 = arith.constant 0 : index
        %c0_40 = arith.constant 0 : index
        %76 = vector.load %arg7[%c0_39, %c0_40] : memref<8x1xf32, #tpu.memory_space<vmem>>, vector<8x1xf32>
        %77 = arith.mulf %75, %76 : vector<8x1xf32>
        %c0_41 = arith.constant 0 : index
        %c0_42 = arith.constant 0 : index
        %78 = vector.load %arg8[%c0_41, %c0_42] : memref<8x1xf32, #tpu.memory_space<vmem>>, vector<8x1xf32>
        %79 = arith.addf %77, %78 : vector<8x1xf32>
        %cst_43 = arith.constant 0.000000e+00 : f32
        %80 = vector.broadcast %cst_43 : f32 to vector<8x1xf32>
        %81 = arith.maximumf %79, %80 : vector<8x1xf32>
        %c0_44 = arith.constant 0 : index
        %c0_45 = arith.constant 0 : index
        %82 = vector.load %arg9[%c0_44, %c0_45] : memref<8x8xf32, #tpu.memory_space<vmem>>, vector<8x8xf32>
        %cst_46 = arith.constant dense<0.000000e+00> : vector<8x1xf32>
        %83 = tpu.matmul %82, %81, %cst_46 {dimension_numbers = #tpu.dot_dimension_numbers<[1], [0], [0], [1], [0, 0, 1, 1], [], []>} : vector<8x8xf32>, vector<8x1xf32>, vector<8x1xf32> -> vector<8x1xf32>
        %c0_47 = arith.constant 0 : index
        %c0_48 = arith.constant 0 : index
        %84 = vector.load %arg10[%c0_47, %c0_48] : memref<8x1xf32, #tpu.memory_space<vmem>>, vector<8x1xf32>
        %85 = arith.addf %83, %84 : vector<8x1xf32>
        %c0_49 = arith.constant 0 : index
        %c0_50 = arith.constant 0 : index
        %86 = vector.load %arg15[%c0_49, %c0_50] : memref<8x1xf32, #tpu.memory_space<vmem>>, vector<8x1xf32>
        tpu.vector_store %arg15[%c0_49, %c0_50], %85 {strides = array<i32>} : memref<8x1xf32, #tpu.memory_space<vmem>>, vector<8x1xf32>,
      } else {
      }
    } else {
    }
    %c1_i32 = arith.constant 1 : i32
    %3 = arith.cmpi eq, %arg1, %c1_i32 : i32
    %4 = arith.extui %3 : i1 to i32
    %c0_i32_1 = arith.constant 0 : i32
    %5 = arith.cmpi ne, %4, %c0_i32_1 : i32
    scf.if %5 {
      %c0 = arith.constant 0 : index
      %c0_2 = arith.constant 0 : index
      %c0_3 = arith.constant 0 : index
      %6 = vector.load %arg3[%c0, %c0_2, %c0_3] : memref<1x8x256xf32, #tpu.memory_space<vmem>>, vector<1x8x256xf32>
      %7 = vector.shape_cast %6 : vector<1x8x256xf32> to vector<8x256xf32>
      %c0_4 = arith.constant 0 : index
      %c0_5 = arith.constant 0 : index
      %8 = vector.load %arg15[%c0_4, %c0_5] : memref<8x1xf32, #tpu.memory_space<vmem>>, vector<8x1xf32>
      %9 = vector.broadcast %8 : vector<8x1xf32> to vector<8x256xf32>
      %10 = arith.addf %7, %9 : vector<8x256xf32>
      %c0_6 = arith.constant 0 : index
      %c0_7 = arith.constant 0 : index
      %c0_8 = arith.constant 0 : index
      %11 = vector.load %arg11[%c0_6, %c0_7, %c0_8] : memref<1x8x256xf32, #tpu.memory_space<vmem>>, vector<1x8x256xf32>
      %12 = vector.shape_cast %11 : vector<1x8x256xf32> to vector<8x256xf32>
      %13 = vector.shape_cast %10 : vector<8x256xf32> to vector<1x8x256xf32>
      tpu.vector_store %arg11[%c0_6, %c0_7, %c0_8], %13 {strides = array<i32>} : memref<1x8x256xf32, #tpu.memory_space<vmem>>, vector<1x8x256xf32>,
    } else {
    }
    return
  }
  func.func @transform_0(%arg0: i32, %arg1: i32, %arg2: i32) -> (i32, i32, i32) {
    %c0_i32 = arith.constant 0 : i32
    %c0_i32_0 = arith.constant 0 : i32
    return %arg0, %c0_i32, %arg2 : i32, i32, i32
  }
  func.func @transform_1(%arg0: i32, %arg1: i32, %arg2: i32) -> (i32, i32) {
    %c0_i32 = arith.constant 0 : i32
    %c0_i32_0 = arith.constant 0 : i32
    %c0_i32_1 = arith.constant 0 : i32
    return %c0_i32, %c0_i32_0 : i32, i32
  }
  func.func @transform_2(%arg0: i32, %arg1: i32, %arg2: i32) -> (i32, i32) {
    %c0_i32 = arith.constant 0 : i32
    %c0_i32_0 = arith.constant 0 : i32
    %c0_i32_1 = arith.constant 0 : i32
    return %c0_i32, %c0_i32_0 : i32, i32
  }
  func.func @transform_3(%arg0: i32, %arg1: i32, %arg2: i32) -> (i32, i32) {
    %c0_i32 = arith.constant 0 : i32
    %c0_i32_0 = arith.constant 0 : i32
    %c0_i32_1 = arith.constant 0 : i32
    return %c0_i32, %c0_i32_0 : i32, i32
  }
  func.func @transform_4(%arg0: i32, %arg1: i32, %arg2: i32) -> (i32, i32) {
    %c0_i32 = arith.constant 0 : i32
    %c0_i32_0 = arith.constant 0 : i32
    %c0_i32_1 = arith.constant 0 : i32
    return %c0_i32, %c0_i32_0 : i32, i32
  }
  func.func @transform_5(%arg0: i32, %arg1: i32, %arg2: i32) -> (i32, i32) {
    %c0_i32 = arith.constant 0 : i32
    %c0_i32_0 = arith.constant 0 : i32
    %c0_i32_1 = arith.constant 0 : i32
    return %c0_i32, %c0_i32_0 : i32, i32
  }
  func.func @transform_6(%arg0: i32, %arg1: i32, %arg2: i32) -> (i32, i32) {
    %c0_i32 = arith.constant 0 : i32
    %c0_i32_0 = arith.constant 0 : i32
    %c0_i32_1 = arith.constant 0 : i32
    return %c0_i32, %c0_i32_0 : i32, i32
  }
  func.func @transform_7(%arg0: i32, %arg1: i32, %arg2: i32) -> (i32, i32) {
    %c0_i32 = arith.constant 0 : i32
    %c0_i32_0 = arith.constant 0 : i32
    %c0_i32_1 = arith.constant 0 : i32
    return %c0_i32, %c0_i32_0 : i32, i32
  }
  func.func @transform_8(%arg0: i32, %arg1: i32, %arg2: i32) -> (i32, i32, i32) {
    %0 = arith.muli %arg2, %arg1 : i32
    %c0_i32 = arith.constant 0 : i32
    %c0_i32_0 = arith.constant 0 : i32
    return %arg0, %c0_i32, %0 : i32, i32, i32
  }
}

</mosaic_0001>

<llo_original>
// kernel: tpu_custom_call.1
$region0: #{tpu_custom_call.1}
  #allocation0 [shape = 'u32[]', space=smem, size = 0x4, offset = 0x4, fixed_abs, tag = 'smem constant byte address 0x4 - core index']
  #allocation1 [shape = 'u32[144,128]{1,0:T(1,128)}', space=vmem, size = 0x12000, scoped, tag = 'internal scratch']
  #allocation2 [shape = 'f32[1,1]{1,0:T(1,128)}', space=vmem, size = 0x200, scoped, tag = 'scratch operand']
  #allocation3 [shape = 'f32[1,1]{1,0:T(1,128)}', space=vmem, size = 0x200, scoped, tag = 'scratch operand']
  #allocation4 [shape = 'f32[8,1]{1,0:T(8,128)}', space=vmem, size = 0x1000, scoped, tag = 'scratch operand']
  #allocation5 [shape = 'f32[8,1]{1,0:T(8,128)}', space=vmem, size = 0x1000, scoped, tag = 'scratch operand']
  %s0 = inlined_call_operand.vmem [shape: f32[2,8,256], index: 0, kind: input, shape index: {}]
  %s1 = inlined_call_operand.vmem [shape: f32[1,8], index: 1, kind: input, shape index: {}]
  %s2 = inlined_call_operand.vmem [shape: f32[8,8], index: 2, kind: input, shape index: {}]
  %s3 = inlined_call_operand.vmem [shape: f32[8,1], index: 3, kind: input, shape index: {}]
  %s4 = inlined_call_operand.vmem [shape: f32[8,1], index: 4, kind: input, shape index: {}]
  %s5 = inlined_call_operand.vmem [shape: f32[8,1], index: 5, kind: input, shape index: {}]
  %s6 = inlined_call_operand.vmem [shape: f32[8,8], index: 6, kind: input, shape index: {}]
  %s7 = inlined_call_operand.vmem [shape: f32[8,1], index: 7, kind: input, shape index: {}]
  %s8 = inlined_call_operand.hbm [shape: f32[2,8,256], index: 8, kind: output, shape index: {}]
  %s9 = sld [smem:[#allocation0]]
  $region81: #{tpu_custom_call.1} parent=0
    _
  %s11 = ssub.s32 1, %s9
  %s12 = scalar_select 0, %s11, %s9
  $region1: #{tpu_custom_call.1} parent=0
    #allocation6 [shape = 'u8[16384]{0}', space=vmem, size = 0x4000, scoped, tag = 'output window, operand 0']
    #allocation7 [shape = 's32[2]{0}', space=sflag, size = 0x8, scoped, tag = 'scoped memory for tpu_custom_call.1']
    %13 = vsyncpa [#allocation7], 0
    %s14 = scalar_lea.sflag [#allocation7], 1
    %15 = vsyncpa %s14, 0
    loop: start=0, step=1, limit=6
    $region2: #{tpu_custom_call.1} parent=1 // loop_pre_header
      _
    $region3: #{tpu_custom_call.1} parent=1 // loop_header
      %s17 = sphi 0, %s21
      %p18 = scmp.ge.s32.totalorder %s17, 6
      %s24 = sphi 0, %s43
      %s25 = sphi 0, %s39
      %s26 = sphi 0, %s35
      %s27 = sphi 0, %s24
      %s28 = sphi 0, %s25
      %s29 = sphi 0, %s26
      %s30 = sphi 0, %s27
      %s31 = sphi 0, %s28
      %s32 = sphi 0, %s29
      %s48 = sphi 0, %s50
      %s51 = sphi 0, %s48
      %s52 = sphi 0, %s51
      %s68 = sphi 0, %s52
      %s72 = sphi 0, %s72
      %s74 = sphi 0, %s72
      %s75 = sphi 0, %s74
      %s89 = sphi 0, %s75
      %s93 = sphi 0, %s93
      %s95 = sphi 0, %s93
      %s96 = sphi 0, %s95
      %s110 = sphi 0, %s96
      %s114 = sphi 0, %s114
      %s116 = sphi 0, %s114
      %s117 = sphi 0, %s116
      %s131 = sphi 0, %s117
      %s135 = sphi 0, %s135
      %s137 = sphi 0, %s135
      %s138 = sphi 0, %s137
      %s152 = sphi 0, %s138
      %s156 = sphi 0, %s156
      %s158 = sphi 0, %s156
      %s159 = sphi 0, %s158
      %s173 = sphi 0, %s159
      %s177 = sphi 0, %s177
      %s179 = sphi 0, %s177
      %s180 = sphi 0, %s179
      %s194 = sphi 0, %s180
      %s198 = sphi 0, %s198
      %s200 = sphi 0, %s198
      %s201 = sphi 0, %s200
      %s215 = sphi 0, %s201
      %s225 = sphi 0, %s227
      %s228 = sphi 0, %s225
      %s229 = sphi 0, %s228
      %s245 = sphi 0, %s229
    $region4: #{tpu_custom_call.1} parent=1 // loop_header_branch
      %20 = sbr.rel (%p18) target = $region8
    $region5: #{tpu_custom_call.1} parent=1 // loop_body
      %s22 = ssub.s32 %s17, 1
      %s23 = ssub.s32 %s17, 2
      %s33 = sadd.s32 1, %s26
      %p34 = scmp.ge.s32.totalorder %s33, 1
      %s35 = scalar_select %p34, 0, %s33
      %s36 = sadd.s32 1, %s25
      %s37 = scalar_select %p34, %s36, %s25
      %p38 = scmp.ge.s32.totalorder %s37, 2
      %s39 = scalar_select %p38, 0, %s37
      %s40 = sadd.s32 1, %s24
      %s41 = scalar_select %p38, %s40, %s24
      %p42 = scmp.ge.s32.totalorder %s41, 2
      %s43 = scalar_select %p42, 0, %s41
      %s44 = ssub.s32 %s24, %s43
      %s45 = ssub.s32 %s26, %s35
      %s46 = sor.u32 %s44, %s45
      %p47 = scmp.eq.s32.totalorder %s46, 0
      %s49 = sadd.s32 %s48, 1
      %s50 = scalar_select %p47, %s48, %s49
      %p53 = pneg %p47
      %p54 = scmp.eq.s32.totalorder %s17, 3
      %p55 = por %p53, %p54
      %p56 = scmp.ne.s32.totalorder %s48, %s51
      %p57 = scmp.eq.s32.totalorder %s17, 0
      %p58 = por %p56, %p57
      %p59 = scmp.ne.s32.totalorder %s48, %s51
      %p60 = scmp.eq.s32.totalorder %s22, 3
      %p61 = por %p59, %p60
      %p62 = scmp.ne.s32.totalorder %s51, %s52
      %p63 = scmp.eq.s32.totalorder %s22, 0
      %p64 = por %p62, %p63
      %p65 = scmp.ne.s32.totalorder %s51, %s52
      %p66 = scmp.eq.s32.totalorder %s23, 3
      %p67 = por %p65, %p66
      %p69 = scmp.ne.s32.totalorder %s52, %s68
      %p70 = scmp.eq.s32.totalorder %s23, 0
      %p71 = por %p69, %p70
      %s73 = sadd.s32 %s72, 1
      %p76 = scmp.eq.s32.totalorder %s17, 3
      %p77 = scmp.ne.s32.totalorder %s72, %s74
      %p78 = scmp.eq.s32.totalorder %s17, 0
      %p79 = por %p77, %p78
      %p80 = scmp.ne.s32.totalorder %s72, %s74
      %p81 = scmp.eq.s32.totalorder %s22, 3
      %p82 = por %p80, %p81
      %p83 = scmp.ne.s32.totalorder %s74, %s75
      %p84 = scmp.eq.s32.totalorder %s22, 0
      %p85 = por %p83, %p84
      %p86 = scmp.ne.s32.totalorder %s74, %s75
      %p87 = scmp.eq.s32.totalorder %s23, 3
      %p88 = por %p86, %p87
      %p90 = scmp.ne.s32.totalorder %s75, %s89
      %p91 = scmp.eq.s32.totalorder %s23, 0
      %p92 = por %p90, %p91
      %s94 = sadd.s32 %s93, 1
      %p97 = scmp.eq.s32.totalorder %s17, 3
      %p98 = scmp.ne.s32.totalorder %s93, %s95
      %p99 = scmp.eq.s32.totalorder %s17, 0
      %p100 = por %p98, %p99
      %p101 = scmp.ne.s32.totalorder %s93, %s95
      %p102 = scmp.eq.s32.totalorder %s22, 3
      %p103 = por %p101, %p102
      %p104 = scmp.ne.s32.totalorder %s95, %s96
      %p105 = scmp.eq.s32.totalorder %s22, 0
      %p106 = por %p104, %p105
      %p107 = scmp.ne.s32.totalorder %s95, %s96
      %p108 = scmp.eq.s32.totalorder %s23, 3
      %p109 = por %p107, %p108
      %p111 = scmp.ne.s32.totalorder %s96, %s110
      %p112 = scmp.eq.s32.totalorder %s23, 0
      %p113 = por %p111, %p112
      %s115 = sadd.s32 %s114, 1
      %p118 = scmp.eq.s32.totalorder %s17, 3
      %p119 = scmp.ne.s32.totalorder %s114, %s116
      %p120 = scmp.eq.s32.totalorder %s17, 0
      %p121 = por %p119, %p120
      %p122 = scmp.ne.s32.totalorder %s114, %s116
      %p123 = scmp.eq.s32.totalorder %s22, 3
      %p124 = por %p122, %p123
      %p125 = scmp.ne.s32.totalorder %s116, %s117
      %p126 = scmp.eq.s32.totalorder %s22, 0
      %p127 = por %p125, %p126
      %p128 = scmp.ne.s32.totalorder %s116, %s117
      %p129 = scmp.eq.s32.totalorder %s23, 3
      %p130 = por %p128, %p129
      %p132 = scmp.ne.s32.totalorder %s117, %s131
      %p133 = scmp.eq.s32.totalorder %s23, 0
      %p134 = por %p132, %p133
      %s136 = sadd.s32 %s135, 1
      %p139 = scmp.eq.s32.totalorder %s17, 3
      %p140 = scmp.ne.s32.totalorder %s135, %s137
      %p141 = scmp.eq.s32.totalorder %s17, 0
      %p142 = por %p140, %p141
      %p143 = scmp.ne.s32.totalorder %s135, %s137
      %p144 = scmp.eq.s32.totalorder %s22, 3
      %p145 = por %p143, %p144
      %p146 = scmp.ne.s32.totalorder %s137, %s138
      %p147 = scmp.eq.s32.totalorder %s22, 0
      %p148 = por %p146, %p147
      %p149 = scmp.ne.s32.totalorder %s137, %s138
      %p150 = scmp.eq.s32.totalorder %s23, 3
      %p151 = por %p149, %p150
      %p153 = scmp.ne.s32.totalorder %s138, %s152
      %p154 = scmp.eq.s32.totalorder %s23, 0
      %p155 = por %p153, %p154
      %s157 = sadd.s32 %s156, 1
      %p160 = scmp.eq.s32.totalorder %s17, 3
      %p161 = scmp.ne.s32.totalorder %s156, %s158
      %p162 = scmp.eq.s32.totalorder %s17, 0
      %p163 = por %p161, %p162
      %p164 = scmp.ne.s32.totalorder %s156, %s158
      %p165 = scmp.eq.s32.totalorder %s22, 3
      %p166 = por %p164, %p165
      %p167 = scmp.ne.s32.totalorder %s158, %s159
      %p168 = scmp.eq.s32.totalorder %s22, 0
      %p169 = por %p167, %p168
      %p170 = scmp.ne.s32.totalorder %s158, %s159
      %p171 = scmp.eq.s32.totalorder %s23, 3
      %p172 = por %p170, %p171
      %p174 = scmp.ne.s32.totalorder %s159, %s173
      %p175 = scmp.eq.s32.totalorder %s23, 0
      %p176 = por %p174, %p175
      %s178 = sadd.s32 %s177, 1
      %p181 = scmp.eq.s32.totalorder %s17, 3
      %p182 = scmp.ne.s32.totalorder %s177, %s179
      %p183 = scmp.eq.s32.totalorder %s17, 0
      %p184 = por %p182, %p183
      %p185 = scmp.ne.s32.totalorder %s177, %s179
      %p186 = scmp.eq.s32.totalorder %s22, 3
      %p187 = por %p185, %p186
      %p188 = scmp.ne.s32.totalorder %s179, %s180
      %p189 = scmp.eq.s32.totalorder %s22, 0
      %p190 = por %p188, %p189
      %p191 = scmp.ne.s32.totalorder %s179, %s180
      %p192 = scmp.eq.s32.totalorder %s23, 3
      %p193 = por %p191, %p192
      %p195 = scmp.ne.s32.totalorder %s180, %s194
      %p196 = scmp.eq.s32.totalorder %s23, 0
      %p197 = por %p195, %p196
      %s199 = sadd.s32 %s198, 1
      %p202 = scmp.eq.s32.totalorder %s17, 3
      %p203 = scmp.ne.s32.totalorder %s198, %s200
      %p204 = scmp.eq.s32.totalorder %s17, 0
      %p205 = por %p203, %p204
      %p206 = scmp.ne.s32.totalorder %s198, %s200
      %p207 = scmp.eq.s32.totalorder %s22, 3
      %p208 = por %p206, %p207
      %p209 = scmp.ne.s32.totalorder %s200, %s201
      %p210 = scmp.eq.s32.totalorder %s22, 0
      %p211 = por %p209, %p210
      %p212 = scmp.ne.s32.totalorder %s200, %s201
      %p213 = scmp.eq.s32.totalorder %s23, 3
      %p214 = por %p212, %p213
      %p216 = scmp.ne.s32.totalorder %s201, %s215
      %p217 = scmp.eq.s32.totalorder %s23, 0
      %p218 = por %p216, %p217
      %s219 = smul.u32 %s26, %s25
      %s220 = smul.u32 %s35, %s39
      %s221 = ssub.s32 %s24, %s43
      %s222 = ssub.s32 %s219, %s220
      %s223 = sor.u32 %s221, %s222
      %p224 = scmp.eq.s32.totalorder %s223, 0
      %s226 = sadd.s32 %s225, 1
      %s227 = scalar_select %p224, %s225, %s226
      %p230 = pneg %p224
      %p231 = scmp.eq.s32.totalorder %s17, 3
      %p232 = por %p230, %p231
      %p233 = scmp.ne.s32.totalorder %s225, %s228
      %p234 = scmp.eq.s32.totalorder %s17, 0
      %p235 = por %p233, %p234
      %p236 = scmp.ne.s32.totalorder %s225, %s228
      %p237 = scmp.eq.s32.totalorder %s22, 3
      %p238 = por %p236, %p237
      %p239 = scmp.ne.s32.totalorder %s228, %s229
      %p240 = scmp.eq.s32.totalorder %s22, 0
      %p241 = por %p239, %p240
      %p242 = scmp.ne.s32.totalorder %s228, %s229
      %p243 = scmp.eq.s32.totalorder %s23, 3
      %p244 = por %p242, %p243
      %p246 = scmp.ne.s32.totalorder %s229, %s245
      %p247 = scmp.eq.s32.totalorder %s23, 0
      %p248 = por %p246, %p247
      %p249 = scmp.le.s32.totalorder 1, %s17
      %p250 = scmp.lt.s32.totalorder %s17, 5
      %p251 = pnand %p249, %p250
      %p252 = pneg %p251
      // Predicated region
      $region9: #{tpu_custom_call.1} parent=5 // pred_check
        _
      $region10: #{tpu_custom_call.1} parent=5 // pred_check_branch
        %254 = sbr.rel (%p251) target = $region12
      $region11: #{tpu_custom_call.1} parent=5 // pred_region
        %s255 = ssub.s32 %s17, 1
        // Predicated region
        $region13: #{tpu_custom_call.1} parent=11 // pred_check
          %p256 = pneg %p85
        $region14: #{tpu_custom_call.1} parent=11 // pred_check_branch
          %258 = sbr.rel (%p256) target = $region16
        $region15: #{tpu_custom_call.1} parent=11 // pred_region
          _
        $region16: #{tpu_custom_call.1} parent=11 // pred_fallthru
          _
        // Predicated region
        $region17: #{tpu_custom_call.1} parent=11 // pred_check
          %p259 = pneg %p106
        $region18: #{tpu_custom_call.1} parent=11 // pred_check_branch
          %261 = sbr.rel (%p259) target = $region20
        $region19: #{tpu_custom_call.1} parent=11 // pred_region
          _
        $region20: #{tpu_custom_call.1} parent=11 // pred_fallthru
          _
        // Predicated region
        $region21: #{tpu_custom_call.1} parent=11 // pred_check
          %p262 = pneg %p127
        $region22: #{tpu_custom_call.1} parent=11 // pred_check_branch
          %264 = sbr.rel (%p262) target = $region24
        $region23: #{tpu_custom_call.1} parent=11 // pred_region
          _
        $region24: #{tpu_custom_call.1} parent=11 // pred_fallthru
          _
        // Predicated region
        $region25: #{tpu_custom_call.1} parent=11 // pred_check
          %p265 = pneg %p148
        $region26: #{tpu_custom_call.1} parent=11 // pred_check_branch
          %267 = sbr.rel (%p265) target = $region28
        $region27: #{tpu_custom_call.1} parent=11 // pred_region
          _
        $region28: #{tpu_custom_call.1} parent=11 // pred_fallthru
          _
        // Predicated region
        $region29: #{tpu_custom_call.1} parent=11 // pred_check
          %p268 = pneg %p169
        $region30: #{tpu_custom_call.1} parent=11 // pred_check_branch
          %270 = sbr.rel (%p268) target = $region32
        $region31: #{tpu_custom_call.1} parent=11 // pred_region
          _
        $region32: #{tpu_custom_call.1} parent=11 // pred_fallthru
          _
        // Predicated region
        $region33: #{tpu_custom_call.1} parent=11 // pred_check
          %p271 = pneg %p190
        $region34: #{tpu_custom_call.1} parent=11 // pred_check_branch
          %273 = sbr.rel (%p271) target = $region36
        $region35: #{tpu_custom_call.1} parent=11 // pred_region
          _
        $region36: #{tpu_custom_call.1} parent=11 // pred_fallthru
          _
        // Predicated region
        $region37: #{tpu_custom_call.1} parent=11 // pred_check
          %p274 = pneg %p211
        $region38: #{tpu_custom_call.1} parent=11 // pred_check_branch
          %276 = sbr.rel (%p274) target = $region40
        $region39: #{tpu_custom_call.1} parent=11 // pred_region
          _
        $region40: #{tpu_custom_call.1} parent=11 // pred_fallthru
          _
      $region12: #{tpu_custom_call.1} parent=5 // pred_fallthru
        _
      %p277 = scmp.lt.s32.totalorder %s17, 4
      // Predicated region
      $region41: #{tpu_custom_call.1} parent=5 // pred_check
        %p278 = pneg %p277
      $region42: #{tpu_custom_call.1} parent=5 // pred_check_branch
        %280 = sbr.rel (%p278) target = $region44
      $region43: #{tpu_custom_call.1} parent=5 // pred_region
        // Predicated region
        $region45: #{tpu_custom_call.1} parent=43 // pred_check
          %p281 = pneg %p58
        $region46: #{tpu_custom_call.1} parent=43 // pred_check_branch
          %283 = sbr.rel (%p281) target = $region48
        $region47: #{tpu_custom_call.1} parent=43 // pred_region
          %s284 = smul.u32 2, %s26
          %p285 = scmp.lt.s32.totalorder %s24, 1
          %s286 = scalar_select %p285, %s24, 1
          %p287 = scmp.lt.s32.totalorder %s284, 1
          %s288 = scalar_select %p287, %s284, 1
          %s289 = smul.addr %s286, 2
          %s290 = sadd.s32 %s288, %s289
          %s291 = smul.addr %s290, 8
          %s292 = scalar_lea.vmem %s0, %s291
          %s293 = smul.u32 2, %s26
        $region48: #{tpu_custom_call.1} parent=43 // pred_fallthru
          _
      $region44: #{tpu_custom_call.1} parent=5 // pred_fallthru
        _
      %p294 = scmp.le.s32.totalorder 1, %s17
      %p295 = scmp.lt.s32.totalorder %s17, 5
      %p296 = pnand %p294, %p295
      %p297 = pneg %p296
      // Predicated region
      $region49: #{tpu_custom_call.1} parent=5 // pred_check
        _
      $region50: #{tpu_custom_call.1} parent=5 // pred_check_branch
        %299 = sbr.rel (%p296) target = $region52
      $region51: #{tpu_custom_call.1} parent=5 // pred_region
        %s300 = ssub.s32 %s17, 1
        %s301 = smul.u32 2, %s29
        %p302 = scmp.lt.s32.totalorder %s27, 1
        %s303 = scalar_select %p302, %s27, 1
        %p304 = scmp.lt.s32.totalorder %s301, 1
        %s305 = scalar_select %p304, %s301, 1
        %s306 = smul.addr %s303, 2
        %s307 = sadd.s32 %s305, %s306
        %s308 = smul.addr %s307, 8
        %s309 = scalar_lea.vmem %s0, %s308
        %p310 = pneg %p64
        %p311 = pneg %p61
        %p312 = pneg %p85
        %p313 = pneg %p82
        %p314 = pneg %p106
        %p315 = pneg %p103
        %p316 = pneg %p127
        %p317 = pneg %p124
        %p318 = pneg %p148
        %p319 = pneg %p145
        %p320 = pneg %p169
        %p321 = pneg %p166
        %p322 = pneg %p190
        %p323 = pneg %p187
        %p324 = pneg %p211
        %p325 = pneg %p208
        %p326 = pneg %p241
        %p327 = pneg %p238
        %s328 = sand.u32 %s228, 1
        %s329 = scalar_lea.sflag [#allocation7], %s328
        %s330 = sand.u32 %s228, 1
        %s331 = smul.addr %s330, 16
        %s332 = scalar_lea.vmem [#allocation6], %s331
        %s333 = smul.u32 2, %s29
        %p334 = scmp.lt.s32.totalorder %s27, 1
        %s335 = scalar_select %p334, %s27, 1
        %p336 = scmp.lt.s32.totalorder %s333, 1
        %s337 = scalar_select %p336, %s333, 1
        %s338 = smul.addr %s335, 2
        %s339 = sadd.s32 %s337, %s338
        %s340 = smul.addr %s339, 8
        %s341 = scalar_lea.vmem %s0, %s340
        %s342 = smul.u32 2, %s29
        %s343 = smul.u32 %s29, %s28
        %s344 = smul.u32 2, %s343
        %p345 = scmp.eq.s32.totalorder %s28, 0
        // Predicated region
        $region53: #{tpu_custom_call.1} parent=51 // pred_check
          %p346 = pneg %p345
        $region54: #{tpu_custom_call.1} parent=51 // pred_check_branch
          %348 = sbr.rel (%p346) target = $region56
        $region55: #{tpu_custom_call.1} parent=51 // pred_region
          %p349 = scmp.eq.s32.totalorder %s29, 0
          // Predicated region
          $region57: #{tpu_custom_call.1} parent=55 // pred_check
            %p350 = pneg %p349
          $region58: #{tpu_custom_call.1} parent=55 // pred_check_branch
            %352 = sbr.rel (%p350) target = $region60
          $region59: #{tpu_custom_call.1} parent=55 // pred_region
            %vm353 = vcmask 0
            %354 = vst.msk [vmem:[#allocation2] sm:$0x1] %vm353, -inf
            %355 = vst.msk [vmem:[#allocation3] sm:$0x1] %vm353, 0.0
            %vm356 = vcmask 7168
            %357 = vst.msk [vmem:[#allocation4] sm:$0xff] %vm356, 0.0
          $region60: #{tpu_custom_call.1} parent=55 // pred_fallthru
            _
          %v358 = vld [vmem:[%s341] sm:$0xff]
          %v359 = vld [vmem:[%s341 + $0x8] sm:$0xff]
          %v360 = vld [vmem:[%s1] sm:$0x1]
          %vm361 = vcmask 64512
          %v363 = vsel %vm361, %v360, 0
          %365 = vmatprep.subr.mxu0 %v359
          %366 = vmatpush1.msra.mxu0 %v358
          %367 = vmatprep.subr.mxu0 0.0
          %368 = vmatpush1.msra.mxu0 0.0
          %369 = vmatprep.subr.mxu0 0.0
          %370 = vmatpush1.msra.mxu0 0.0
          %371 = vmatprep.subr.mxu0 0.0
          %372 = vmatpush1.msra.mxu0 0.0
          %373 = vmatprep.subr.mxu0 0.0
          %374 = vmatpush1.msra.mxu0 0.0
          %375 = vmatprep.subr.mxu0 0.0
          %376 = vmatpush1.msra.mxu0 0.0
          %377 = vmatprep.subr.mxu0 0.0
          %378 = vmatpush1.msra.mxu0 0.0
          %379 = vmatprep.subr.mxu0 0.0
          %380 = vmatpush1.msra.mxu0 0.0
          %381 = vmatprep.subr.mxu0 0.0
          %382 = vmatpush1.msra.mxu0 0.0
          %383 = vmatprep.subr.mxu0 0.0
          %384 = vmatpush1.msra.mxu0 0.0
          %385 = vmatprep.subr.mxu0 0.0
          %386 = vmatpush1.msra.mxu0 0.0
          %387 = vmatprep.subr.mxu0 0.0
          %388 = vmatpush1.msra.mxu0 0.0
          %389 = vmatprep.subr.mxu0 0.0
          %390 = vmatpush1.msra.mxu0 0.0
          %391 = vmatprep.subr.mxu0 0.0
          %392 = vmatpush1.msra.mxu0 0.0
          %393 = vmatprep.subr.mxu0 0.0
          %394 = vmatpush1.msra.mxu0 0.0
          %395 = vmatprep.subr.mxu0 0.0
          %396 = vmatpush1.msra.mxu0 0.0
          %397 = vmatprep.subr.mxu0 0.0
          %398 = vmatpush1.msra.mxu0 0.0
          %399 = vmatprep.subr.mxu0 0.0
          %400 = vmatpush1.msra.mxu0 0.0
          %401 = vmatprep.subr.mxu0 0.0
          %402 = vmatpush1.msra.mxu0 0.0
          %403 = vmatprep.subr.mxu0 0.0
          %404 = vmatpush1.msra.mxu0 0.0
          %405 = vmatprep.subr.mxu0 0.0
          %406 = vmatpush1.msra.mxu0 0.0
          %407 = vmatprep.subr.mxu0 0.0
          %408 = vmatpush1.msra.mxu0 0.0
          %409 = vmatprep.subr.mxu0 0.0
          %410 = vmatpush1.msra.mxu0 0.0
          %411 = vmatprep.subr.mxu0 0.0
          %412 = vmatpush1.msra.mxu0 0.0
          %413 = vmatprep.subr.mxu0 0.0
          %414 = vmatpush1.msra.mxu0 0.0
          %415 = vmatprep.subr.mxu0 0.0
          %416 = vmatpush1.msra.mxu0 0.0
          %417 = vmatprep.subr.mxu0 0.0
          %418 = vmatpush1.msra.mxu0 0.0
          %419 = vmatprep.subr.mxu0 0.0
          %420 = vmatpush1.msra.mxu0 0.0
          %421 = vmatprep.subr.mxu0 0.0
          %422 = vmatpush1.msra.mxu0 0.0
          %423 = vmatprep.subr.mxu0 0.0
          %424 = vmatpush1.msra.mxu0 0.0
          %425 = vmatprep.subr.mxu0 0.0
          %426 = vmatpush1.msra.mxu0 0.0
          %427 = vmatprep.subr.mxu0 0.0
          %428 = vmatpush1.msra.mxu0 0.0
          %429 = vmatprep.mubr.f32.mxu0 0.0
          %430 = vmatmul.mubr.f32.gmra.mrb[0].mxu0 %v363
          %v431 = vpop.f32.mrb[0].mxu0
          %v432 = vadd.f32 0.0, %v431
          %v433 = vpop.f32.mrb[0].mxu0
          %v434 = vadd.f32 0.0, %v433
          %435 = vdwg.mxu0
          %v436 = vld [vmem:[#allocation2] sm:$0x1]
          %vm437 = vcmask 1040384
          %v438 = vsel %vm437, %v432, -inf
          %v439 = vsel %vm437, %v434, -inf
          %v440 = vmax.f32 %v438, %v439
          %441 = vmax.xlane.f32.xlu0 %v440
          %v442 = vpop.xlane.xlu0 %441
          %v443 = vrot.slane %v442, 4
          %v444 = vmax.f32 %v442, %v443
          %v445 = vrot.slane %v444, 2
          %v446 = vmax.f32 %v444, %v445
          %v447 = vrot.slane %v446, 1
          %v448 = vmax.f32 %v446, %v447
          %s449 = vtos %v448
          %v450 = vstv %s449
          %v451 = vmax.f32 %v436, %v450
          %v452 = vsub.f32 %v436, %v451
          %v453 = vmul.f32 %v452, 1.442695
          %v454 = vpow.pop %v453
          %456 = vset.pattern.permute.xlu0 0
          %457 = vperm.xlu0 %456, %v451
          %v458 = vpop.permute.xlu0 %457
          %v460 = vlaneseq
          %v461 = vshrl.u32 %v460, 7
          %v462 = vsub.s32 0, %v461
          %v463 = vrot.slane %v458, %v462
          %v464 = vsub.f32 %v432, %v463
          %v465 = vsub.f32 %v434, %v463
          %v466 = vmul.f32 %v464, 1.442695
          %v467 = vpow.pop %v466
          %v468 = vmul.f32 %v465, 1.442695
          %v469 = vpow.pop %v468
          %v470 = vld [vmem:[#allocation3] sm:$0x1]
          %v471 = vmul.f32 %v470, %v454
          %v472 = vsel %vm437, %v467, 0.0
          %v473 = vsel %vm437, %v469, 0.0
          %v474 = vadd.f32 %v472, %v473
          %475 = vadd.xlane.f32.xlu0 %v474
          %v476 = vpop.xlane.xlu0 %475
          %v477 = vrot.slane %v476, 4
          %v478 = vadd.f32 %v476, %v477
          %v479 = vrot.slane %v478, 2
          %v480 = vadd.f32 %v478, %v479
          %v481 = vrot.slane %v480, 1
          %v482 = vadd.f32 %v480, %v481
          %s483 = vtos %v482
          %v484 = vstv %s483
          %v485 = vadd.f32 %v471, %v484
          %vm486 = vcmask 0
          %487 = vst.msk [vmem:[#allocation3] sm:$0x1] %vm486, %v485
          %v488 = vlaneseq
          %v489 = vshrl.u32 %v488, 7
          %v490 = vsub.s32 0, %v489
          %v491 = vrot.slane %v467, %v490
          %v492 = vlaneseq
          %v493 = vshrl.u32 %v492, 7
          %v494 = vsub.s32 0, %v493
          %v495 = vrot.slane %v469, %v494
          %v496 = vmul.f32 %v358, %v491
          %v497 = vmul.f32 %v359, %v495
          %v498 = vadd.f32 %v496, %v497
          %499 = vadd.xlane.f32.xlu0 %v498
          %v500 = vpop.xlane.xlu0 %499
          %v501 = vld [vmem:[#allocation4] sm:$0xff]
          %v503 = vlaneseq
          %v504 = vshrl.u32 %v503, 7
          %v505 = vsub.s32 0, %v504
          %v506 = vrot.slane %v454, %v505
          %v508 = vmul.f32 %v501, %v506
          %v509 = vadd.f32 %v508, %v500
          %vm510 = vcmask 7168
          %511 = vst.msk [vmem:[#allocation4] sm:$0xff] %vm510, %v509
          %512 = vst.msk [vmem:[#allocation2] sm:$0x1] %vm486, %v451
          // Predicated region
          $region61: #{tpu_custom_call.1} parent=55 // pred_check
            %p513 = pneg %p349
          $region62: #{tpu_custom_call.1} parent=55 // pred_check_branch
            %515 = sbr.rel (%p513) target = $region64
          $region63: #{tpu_custom_call.1} parent=55 // pred_region
            %v516 = vld [vmem:[#allocation4] sm:$0xff]
            %v517 = vld [vmem:[#allocation3] sm:$0x1]
            %v519 = vlaneseq
            %v520 = vshrl.u32 %v519, 7
            %v521 = vsub.s32 0, %v520
            %v522 = vrot.slane %v517, %v521
            %v524 = vrcp.pop %v522
            %v525 = vmul.f32 %v516, %v524
            %v526 = vld [vmem:[%s2] sm:$0xff]
            %v527 = vld [vmem:[%s3] sm:$0xff]
            %v529 = vsel %vm361, %v526, 0
            %531 = vmatprep.subr.mxu0 0.0
            %532 = vmatpush1.msra.mxu0 %v525
            %533 = vmatprep.subr.mxu0 0.0
            %534 = vmatpush1.msra.mxu0 0.0
            %535 = vmatprep.subr.mxu0 0.0
            %536 = vmatpush1.msra.mxu0 0.0
            %537 = vmatprep.subr.mxu0 0.0
            %538 = vmatpush1.msra.mxu0 0.0
            %539 = vmatprep.subr.mxu0 0.0
            %540 = vmatpush1.msra.mxu0 0.0
            %541 = vmatprep.subr.mxu0 0.0
            %542 = vmatpush1.msra.mxu0 0.0
            %543 = vmatprep.subr.mxu0 0.0
            %544 = vmatpush1.msra.mxu0 0.0
            %545 = vmatprep.subr.mxu0 0.0
            %546 = vmatpush1.msra.mxu0 0.0
            %547 = vmatprep.subr.mxu0 0.0
            %548 = vmatpush1.msra.mxu0 0.0
            %549 = vmatprep.subr.mxu0 0.0
            %550 = vmatpush1.msra.mxu0 0.0
            %551 = vmatprep.subr.mxu0 0.0
            %552 = vmatpush1.msra.mxu0 0.0
            %553 = vmatprep.subr.mxu0 0.0
            %554 = vmatpush1.msra.mxu0 0.0
            %555 = vmatprep.subr.mxu0 0.0
            %556 = vmatpush1.msra.mxu0 0.0
            %557 = vmatprep.subr.mxu0 0.0
            %558 = vmatpush1.msra.mxu0 0.0
            %559 = vmatprep.subr.mxu0 0.0
            %560 = vmatpush1.msra.mxu0 0.0
            %561 = vmatprep.subr.mxu0 0.0
            %562 = vmatpush1.msra.mxu0 0.0
            %563 = vmatprep.subr.mxu0 0.0
            %564 = vmatpush1.msra.mxu0 0.0
            %565 = vmatprep.subr.mxu0 0.0
            %566 = vmatpush1.msra.mxu0 0.0
            %567 = vmatprep.subr.mxu0 0.0
            %568 = vmatpush1.msra.mxu0 0.0
            %569 = vmatprep.subr.mxu0 0.0
            %570 = vmatpush1.msra.mxu0 0.0
            %571 = vmatprep.subr.mxu0 0.0
            %572 = vmatpush1.msra.mxu0 0.0
            %573 = vmatprep.subr.mxu0 0.0
            %574 = vmatpush1.msra.mxu0 0.0
            %575 = vmatprep.subr.mxu0 0.0
            %576 = vmatpush1.msra.mxu0 0.0
            %577 = vmatprep.subr.mxu0 0.0
            %578 = vmatpush1.msra.mxu0 0.0
            %579 = vmatprep.subr.mxu0 0.0
            %580 = vmatpush1.msra.mxu0 0.0
            %581 = vmatprep.subr.mxu0 0.0
            %582 = vmatpush1.msra.mxu0 0.0
            %583 = vmatprep.subr.mxu0 0.0
            %584 = vmatpush1.msra.mxu0 0.0
            %585 = vmatprep.subr.mxu0 0.0
            %586 = vmatpush1.msra.mxu0 0.0
            %587 = vmatprep.subr.mxu0 0.0
            %588 = vmatpush1.msra.mxu0 0.0
            %589 = vmatprep.subr.mxu0 0.0
            %590 = vmatpush1.msra.mxu0 0.0
            %591 = vmatprep.subr.mxu0 0.0
            %592 = vmatpush1.msra.mxu0 0.0
            %593 = vmatprep.subr.mxu0 0.0
            %594 = vmatpush1.msra.mxu0 0.0
            %595 = vmatprep.mubr.f32.mxu0 0.0
            %596 = vmatmul.mubr.f32.gmra.mrb[0].mxu0 %v529
            %v597 = vpop.f32.mrb[0].mxu0
            %v598 = vadd.f32 %v527, %v597
            %v599 = vpop.f32.mrb[0].mxu0
            %600 = vdwg.mxu0
            %v601 = vsel %vm510, %v598, 0.0
            %602 = vadd.xlane.f32.xlu0 %v601
            %v603 = vpop.xlane.xlu0 %602
            %v604 = vrot.slane %v603, 4
            %v605 = vadd.f32 %v603, %v604
            %v606 = vrot.slane %v605, 2
            %v607 = vadd.f32 %v605, %v606
            %v608 = vrot.slane %v607, 1
            %v609 = vadd.f32 %v607, %v608
            %s610 = vtos %v609
            %v611 = vrcp.pop 8.0
            %s612 = vtos %v611
            %s613 = smul.f32 %s610, %s612
            %v614 = vstv %s613
            %v615 = vsub.f32 %v598, %v614
            %v616 = vmul.f32 %v615, %v615
            %v617 = vsel %vm510, %v616, 0.0
            %618 = vadd.xlane.f32.xlu0 %v617
            %v619 = vpop.xlane.xlu0 %618
            %v620 = vrot.slane %v619, 4
            %v621 = vadd.f32 %v619, %v620
            %v622 = vrot.slane %v621, 2
            %v623 = vadd.f32 %v621, %v622
            %v624 = vrot.slane %v623, 1
            %v625 = vadd.f32 %v623, %v624
            %s626 = vtos %v625
            %v627 = vrcp.pop 8.0
            %s628 = vtos %v627
            %s629 = smul.f32 %s626, %s628
            %s630 = sadd.f32 %s629, 1e-05
            %v631 = vstv %s630
            %v632 = vrsqrt.pop %v631
            %s633 = vtos %v632
            %v634 = vstv %s633
            %v635 = vmul.f32 %v615, %v634
            %v636 = vld [vmem:[%s4] sm:$0xff]
            %v637 = vmul.f32 %v635, %v636
            %v638 = vld [vmem:[%s5] sm:$0xff]
            %v639 = vadd.f32 %v637, %v638
            %v640 = vmax.f32 %v639, 0.0
            %v641 = vld [vmem:[%s6] sm:$0xff]
            %v642 = vld [vmem:[%s7] sm:$0xff]
            %v644 = vsel %vm361, %v641, 0
            %646 = vmatprep.subr.mxu0 0.0
            %647 = vmatpush1.msra.mxu0 %v640
            %648 = vmatprep.subr.mxu0 0.0
            %649 = vmatpush1.msra.mxu0 0.0
            %650 = vmatprep.subr.mxu0 0.0
            %651 = vmatpush1.msra.mxu0 0.0
            %652 = vmatprep.subr.mxu0 0.0
            %653 = vmatpush1.msra.mxu0 0.0
            %654 = vmatprep.subr.mxu0 0.0
            %655 = vmatpush1.msra.mxu0 0.0
            %656 = vmatprep.subr.mxu0 0.0
            %657 = vmatpush1.msra.mxu0 0.0
            %658 = vmatprep.subr.mxu0 0.0
            %659 = vmatpush1.msra.mxu0 0.0
            %660 = vmatprep.subr.mxu0 0.0
            %661 = vmatpush1.msra.mxu0 0.0
            %662 = vmatprep.subr.mxu0 0.0
            %663 = vmatpush1.msra.mxu0 0.0
            %664 = vmatprep.subr.mxu0 0.0
            %665 = vmatpush1.msra.mxu0 0.0
            %666 = vmatprep.subr.mxu0 0.0
            %667 = vmatpush1.msra.mxu0 0.0
            %668 = vmatprep.subr.mxu0 0.0
            %669 = vmatpush1.msra.mxu0 0.0
            %670 = vmatprep.subr.mxu0 0.0
            %671 = vmatpush1.msra.mxu0 0.0
            %672 = vmatprep.subr.mxu0 0.0
            %673 = vmatpush1.msra.mxu0 0.0
            %674 = vmatprep.subr.mxu0 0.0
            %675 = vmatpush1.msra.mxu0 0.0
            %676 = vmatprep.subr.mxu0 0.0
            %677 = vmatpush1.msra.mxu0 0.0
            %678 = vmatprep.subr.mxu0 0.0
            %679 = vmatpush1.msra.mxu0 0.0
            %680 = vmatprep.subr.mxu0 0.0
            %681 = vmatpush1.msra.mxu0 0.0
            %682 = vmatprep.subr.mxu0 0.0
            %683 = vmatpush1.msra.mxu0 0.0
            %684 = vmatprep.subr.mxu0 0.0
            %685 = vmatpush1.msra.mxu0 0.0
            %686 = vmatprep.subr.mxu0 0.0
            %687 = vmatpush1.msra.mxu0 0.0
            %688 = vmatprep.subr.mxu0 0.0
            %689 = vmatpush1.msra.mxu0 0.0
            %690 = vmatprep.subr.mxu0 0.0
            %691 = vmatpush1.msra.mxu0 0.0
            %692 = vmatprep.subr.mxu0 0.0
            %693 = vmatpush1.msra.mxu0 0.0
            %694 = vmatprep.subr.mxu0 0.0
            %695 = vmatpush1.msra.mxu0 0.0
            %696 = vmatprep.subr.mxu0 0.0
            %697 = vmatpush1.msra.mxu0 0.0
            %698 = vmatprep.subr.mxu0 0.0
            %699 = vmatpush1.msra.mxu0 0.0
            %700 = vmatprep.subr.mxu0 0.0
            %701 = vmatpush1.msra.mxu0 0.0
            %702 = vmatprep.subr.mxu0 0.0
            %703 = vmatpush1.msra.mxu0 0.0
            %704 = vmatprep.subr.mxu0 0.0
            %705 = vmatpush1.msra.mxu0 0.0
            %706 = vmatprep.subr.mxu0 0.0
            %707 = vmatpush1.msra.mxu0 0.0
            %708 = vmatprep.subr.mxu0 0.0
            %709 = vmatpush1.msra.mxu0 0.0
            %710 = vmatprep.mubr.f32.mxu0 0.0
            %711 = vmatmul.mubr.f32.gmra.mrb[0].mxu0 %v644
            %v712 = vpop.f32.mrb[0].mxu0
            %v713 = vadd.f32 %v642, %v712
            %v714 = vpop.f32.mrb[0].mxu0
            %715 = vdwg.mxu0
            %716 = vst.msk [vmem:[#allocation5] sm:$0xff] %vm510, %v713
          $region64: #{tpu_custom_call.1} parent=55 // pred_fallthru
            _
        $region56: #{tpu_custom_call.1} parent=51 // pred_fallthru
          _
        %p717 = scmp.eq.s32.totalorder %s28, 1
        // Predicated region
        $region65: #{tpu_custom_call.1} parent=51 // pred_check
          %p718 = pneg %p717
        $region66: #{tpu_custom_call.1} parent=51 // pred_check_branch
          %720 = sbr.rel (%p718) target = $region68
        $region67: #{tpu_custom_call.1} parent=51 // pred_region
          %v721 = vld [vmem:[%s341] sm:$0xff]
          %v722 = vld [vmem:[%s341 + $0x8] sm:$0xff]
          %v723 = vld [vmem:[#allocation5] sm:$0xff]
          %725 = vset.pattern.permute.xlu0 0
          %726 = vperm.xlu0 %725, %v723
          %v727 = vpop.permute.xlu0 %726
          %v729 = vadd.f32 %v721, %v727
          %v730 = vadd.f32 %v722, %v727
          %731 = vst [vmem:[%s332] sm:$0xff] %v729
          %732 = vst [vmem:[%s332 + $0x8] sm:$0xff] %v730
        $region68: #{tpu_custom_call.1} parent=51 // pred_fallthru
          _
        %s733 = sand.u32 %s228, 1
        %s734 = scalar_lea.sflag [#allocation7], %s733
        %s735 = sand.u32 %s228, 1
        %s736 = smul.addr %s735, 16
        %s737 = scalar_lea.vmem [#allocation6], %s736
        // Predicated region
        $region69: #{tpu_custom_call.1} parent=51 // pred_check
          %p738 = pneg %p238
        $region70: #{tpu_custom_call.1} parent=51 // pred_check_branch
          %740 = sbr.rel (%p738) target = $region72
        $region71: #{tpu_custom_call.1} parent=51 // pred_region
          %s741 = smul.u32 %s29, %s28
          %s742 = smul.u32 2, %s741
          %s744 = ssub.s32 256, 256
          %745 = vsyncadd %s734, %s744
          %s746 = smul.addr %s27, 2
          %s747 = sadd.s32 %s742, %s746
          %s748 = smul.addr %s747, 128
          %s749 = scalar_lea.hbm %s8, %s748
          %s751 = sshll.u32 %s737, 4
          %s752 = int_to_ptr.vmem [resolvable:$true] %s751
          %754 = dma.vmem_to_hbm [thread:$0]  %s752, 256, %s749, %s734
        $region72: #{tpu_custom_call.1} parent=51 // pred_fallthru
          _
      $region52: #{tpu_custom_call.1} parent=5 // pred_fallthru
        _
      %p755 = scmp.le.s32.totalorder 2, %s17
      // Predicated region
      $region73: #{tpu_custom_call.1} parent=5 // pred_check
        %p756 = pneg %p755
      $region74: #{tpu_custom_call.1} parent=5 // pred_check_branch
        %758 = sbr.rel (%p756) target = $region76
      $region75: #{tpu_custom_call.1} parent=5 // pred_region
        %s759 = ssub.s32 %s17, 2
        // Predicated region
        $region77: #{tpu_custom_call.1} parent=75 // pred_check
          %p760 = pneg %p244
        $region78: #{tpu_custom_call.1} parent=75 // pred_check_branch
          %762 = sbr.rel (%p760) target = $region80
        $region79: #{tpu_custom_call.1} parent=75 // pred_region
          %s763 = sand.u32 %s229, 1
          %s764 = scalar_lea.sflag [#allocation7], %s763
          %s765 = sand.u32 %s229, 1
          %s766 = smul.addr %s765, 16
          %s767 = scalar_lea.vmem [#allocation6], %s766
          %768 = dma.done %s764, 256
        $region80: #{tpu_custom_call.1} parent=75 // pred_fallthru
          _
      $region76: #{tpu_custom_call.1} parent=5 // pred_fallthru
        _
    $region6: #{tpu_custom_call.1} parent=1 // loop_footer
      %s21 = sadd.s32 1, %s17
    $region7: #{tpu_custom_call.1} parent=1 // loop_footer_branch
      %16 = sbr.rel target = $region3
    $region8: #{tpu_custom_call.1} parent=1 // loop_exit
      _
    %769 = vsyncpa [#allocation7], 1
    %s770 = scalar_lea.sflag [#allocation7], 1
    %771 = vsyncpa %s770, 1

// kernel: tpu_custom_call.1
$region0: #{tpu_custom_call.1}
  #allocation0 [shape = 'u32[]', space=smem, size = 0x4, offset = 0x4, fixed_abs, tag = 'smem constant byte address 0x4 - core index']
  #allocation1 [shape = 'u32[144,128]{1,0:T(1,128)}', space=vmem, size = 0x12000, scoped, tag = 'internal scratch']
  #allocation2 [shape = 'f32[1,1]{1,0:T(1,128)}', space=vmem, size = 0x200, scoped, tag = 'scratch operand']
  #allocation3 [shape = 'f32[1,1]{1,0:T(1,128)}', space=vmem, size = 0x200, scoped, tag = 'scratch operand']
  #allocation4 [shape = 'f32[8,1]{1,0:T(8,128)}', space=vmem, size = 0x1000, scoped, tag = 'scratch operand']
  #allocation5 [shape = 'f32[8,1]{1,0:T(8,128)}', space=vmem, size = 0x1000, scoped, tag = 'scratch operand']
  %s0 = inlined_call_operand.vmem [shape: f32[2,8,256], index: 0, kind: input, shape index: {}]
  %s1 = inlined_call_operand.vmem [shape: f32[1,8], index: 1, kind: input, shape index: {}]
  %s2 = inlined_call_operand.vmem [shape: f32[8,8], index: 2, kind: input, shape index: {}]
  %s3 = inlined_call_operand.vmem [shape: f32[8,1], index: 3, kind: input, shape index: {}]
  %s4 = inlined_call_operand.vmem [shape: f32[8,1], index: 4, kind: input, shape index: {}]
  %s5 = inlined_call_operand.vmem [shape: f32[8,1], index: 5, kind: input, shape index: {}]
  %s6 = inlined_call_operand.vmem [shape: f32[8,8], index: 6, kind: input, shape index: {}]
  %s7 = inlined_call_operand.vmem [shape: f32[8,1], index: 7, kind: input, shape index: {}]
  %s8 = inlined_call_operand.hbm [shape: f32[2,8,256], index: 8, kind: output, shape index: {}]
  %s9 = sld [smem:[#allocation0]]
  $region81: #{tpu_custom_call.1} parent=0
    _
  %s11 = ssub.s32 1, %s9
  %s12 = scalar_select 0, %s11, %s9
  $region1: #{tpu_custom_call.1} parent=0
    #allocation6 [shape = 'u8[16384]{0}', space=vmem, size = 0x4000, scoped, tag = 'output window, operand 0']
    #allocation7 [shape = 's32[2]{0}', space=sflag, size = 0x8, scoped, tag = 'scoped memory for tpu_custom_call.1']
    %13 = vsyncpa [#allocation7], 0
    %s14 = scalar_lea.sflag [#allocation7], 1
    %15 = vsyncpa %s14, 0
    loop: start=0, step=1, limit=6
    $region2: #{tpu_custom_call.1} parent=1 // loop_pre_header
      _
    $region3: #{tpu_custom_call.1} parent=1 // loop_header
      %s17 = sphi 0, %s21
      %p18 = scmp.ge.s32.totalorder %s17, 6
      %s24 = sphi 0, %s43
      %s25 = sphi 0, %s39
      %s26 = sphi 0, %s35
      %s27 = sphi 0, %s24
      %s28 = sphi 0, %s25
      %s29 = sphi 0, %s26
      %s30 = sphi 0, %s27
      %s31 = sphi 0, %s28
      %s32 = sphi 0, %s29
      %s48 = sphi 0, %s50
      %s51 = sphi 0, %s48
      %s52 = sphi 0, %s51
      %s68 = sphi 0, %s52
      %s72 = sphi 0, %s72
      %s74 = sphi 0, %s72
      %s75 = sphi 0, %s74
      %s89 = sphi 0, %s75
      %s93 = sphi 0, %s93
      %s95 = sphi 0, %s93
      %s96 = sphi 0, %s95
      %s110 = sphi 0, %s96
      %s114 = sphi 0, %s114
      %s116 = sphi 0, %s114
      %s117 = sphi 0, %s116
      %s131 = sphi 0, %s117
      %s135 = sphi 0, %s135
      %s137 = sphi 0, %s135
      %s138 = sphi 0, %s137
      %s152 = sphi 0, %s138
      %s156 = sphi 0, %s156
      %s158 = sphi 0, %s156
      %s159 = sphi 0, %s158
      %s173 = sphi 0, %s159
      %s177 = sphi 0, %s177
      %s179 = sphi 0, %s177
      %s180 = sphi 0, %s179
      %s194 = sphi 0, %s180
      %s198 = sphi 0, %s198
      %s200 = sphi 0, %s198
      %s201 = sphi 0, %s200
      %s215 = sphi 0, %s201
      %s225 = sphi 0, %s227
      %s228 = sphi 0, %s225
      %s229 = sphi 0, %s228
      %s245 = sphi 0, %s229
    $region4: #{tpu_custom_call.1} parent=1 // loop_header_branch
      %20 = sbr.rel (%p18) target = $region8
    $region5: #{tpu_custom_call.1} parent=1 // loop_body
      %s22 = ssub.s32 %s17, 1
      %s23 = ssub.s32 %s17, 2
      %s33 = sadd.s32 1, %s26
      %p34 = scmp.ge.s32.totalorder %s33, 1
      %s35 = scalar_select %p34, 0, %s33
      %s36 = sadd.s32 1, %s25
      %s37 = scalar_select %p34, %s36, %s25
      %p38 = scmp.ge.s32.totalorder %s37, 2
      %s39 = scalar_select %p38, 0, %s37
      %s40 = sadd.s32 1, %s24
      %s41 = scalar_select %p38, %s40, %s24
      %p42 = scmp.ge.s32.totalorder %s41, 2
      %s43 = scalar_select %p42, 0, %s41
      %s44 = ssub.s32 %s24, %s43
      %s45 = ssub.s32 %s26, %s35
      %s46 = sor.u32 %s44, %s45
      %p47 = scmp.eq.s32.totalorder %s46, 0
      %s49 = sadd.s32 %s48, 1
      %s50 = scalar_select %p47, %s48, %s49
      %p53 = pneg %p47
      %p54 = scmp.eq.s32.totalorder %s17, 3
      %p55 = por %p53, %p54
      %p56 = scmp.ne.s32.totalorder %s48, %s51
      %p57 = scmp.eq.s32.totalorder %s17, 0
      %p58 = por %p56, %p57
      %p59 = scmp.ne.s32.totalorder %s48, %s51
      %p60 = scmp.eq.s32.totalorder %s22, 3
      %p61 = por %p59, %p60
      %p62 = scmp.ne.s32.totalorder %s51, %s52
      %p63 = scmp.eq.s32.totalorder %s22, 0
      %p64 = por %p62, %p63
      %p65 = scmp.ne.s32.totalorder %s51, %s52
      %p66 = scmp.eq.s32.totalorder %s23, 3
      %p67 = por %p65, %p66
      %p69 = scmp.ne.s32.totalorder %s52, %s68
      %p70 = scmp.eq.s32.totalorder %s23, 0
      %p71 = por %p69, %p70
      %s73 = sadd.s32 %s72, 1
      %p76 = scmp.eq.s32.totalorder %s17, 3
      %p77 = scmp.ne.s32.totalorder %s72, %s74
      %p78 = scmp.eq.s32.totalorder %s17, 0
      %p79 = por %p77, %p78
      %p80 = scmp.ne.s32.totalorder %s72, %s74
      %p81 = scmp.eq.s32.totalorder %s22, 3
      %p82 = por %p80, %p81
      %p83 = scmp.ne.s32.totalorder %s74, %s75
      %p84 = scmp.eq.s32.totalorder %s22, 0
      %p85 = por %p83, %p84
      %p86 = scmp.ne.s32.totalorder %s74, %s75
      %p87 = scmp.eq.s32.totalorder %s23, 3
      %p88 = por %p86, %p87
      %p90 = scmp.ne.s32.totalorder %s75, %s89
      %p91 = scmp.eq.s32.totalorder %s23, 0
      %p92 = por %p90, %p91
      %s94 = sadd.s32 %s93, 1
      %p97 = scmp.eq.s32.totalorder %s17, 3
      %p98 = scmp.ne.s32.totalorder %s93, %s95
      %p99 = scmp.eq.s32.totalorder %s17, 0
      %p100 = por %p98, %p99
      %p101 = scmp.ne.s32.totalorder %s93, %s95
      %p102 = scmp.eq.s32.totalorder %s22, 3
      %p103 = por %p101, %p102
      %p104 = scmp.ne.s32.totalorder %s95, %s96
      %p105 = scmp.eq.s32.totalorder %s22, 0
      %p106 = por %p104, %p105
      %p107 = scmp.ne.s32.totalorder %s95, %s96
      %p108 = scmp.eq.s32.totalorder %s23, 3
      %p109 = por %p107, %p108
      %p111 = scmp.ne.s32.totalorder %s96, %s110
      %p112 = scmp.eq.s32.totalorder %s23, 0
      %p113 = por %p111, %p112
      %s115 = sadd.s32 %s114, 1
      %p118 = scmp.eq.s32.totalorder %s17, 3
      %p119 = scmp.ne.s32.totalorder %s114, %s116
      %p120 = scmp.eq.s32.totalorder %s17, 0
      %p121 = por %p119, %p120
      %p122 = scmp.ne.s32.totalorder %s114, %s116
      %p123 = scmp.eq.s32.totalorder %s22, 3
      %p124 = por %p122, %p123
      %p125 = scmp.ne.s32.totalorder %s116, %s117
      %p126 = scmp.eq.s32.totalorder %s22, 0
      %p127 = por %p125, %p126
      %p128 = scmp.ne.s32.totalorder %s116, %s117
      %p129 = scmp.eq.s32.totalorder %s23, 3
      %p130 = por %p128, %p129
      %p132 = scmp.ne.s32.totalorder %s117, %s131
      %p133 = scmp.eq.s32.totalorder %s23, 0
      %p134 = por %p132, %p133
      %s136 = sadd.s32 %s135, 1
      %p139 = scmp.eq.s32.totalorder %s17, 3
      %p140 = scmp.ne.s32.totalorder %s135, %s137
      %p141 = scmp.eq.s32.totalorder %s17, 0
      %p142 = por %p140, %p141
      %p143 = scmp.ne.s32.totalorder %s135, %s137
      %p144 = scmp.eq.s32.totalorder %s22, 3
      %p145 = por %p143, %p144
      %p146 = scmp.ne.s32.totalorder %s137, %s138
      %p147 = scmp.eq.s32.totalorder %s22, 0
      %p148 = por %p146, %p147
      %p149 = scmp.ne.s32.totalorder %s137, %s138
      %p150 = scmp.eq.s32.totalorder %s23, 3
      %p151 = por %p149, %p150
      %p153 = scmp.ne.s32.totalorder %s138, %s152
      %p154 = scmp.eq.s32.totalorder %s23, 0
      %p155 = por %p153, %p154
      %s157 = sadd.s32 %s156, 1
      %p160 = scmp.eq.s32.totalorder %s17, 3
      %p161 = scmp.ne.s32.totalorder %s156, %s158
      %p162 = scmp.eq.s32.totalorder %s17, 0
      %p163 = por %p161, %p162
      %p164 = scmp.ne.s32.totalorder %s156, %s158
      %p165 = scmp.eq.s32.totalorder %s22, 3
      %p166 = por %p164, %p165
      %p167 = scmp.ne.s32.totalorder %s158, %s159
      %p168 = scmp.eq.s32.totalorder %s22, 0
      %p169 = por %p167, %p168
      %p170 = scmp.ne.s32.totalorder %s158, %s159
      %p171 = scmp.eq.s32.totalorder %s23, 3
      %p172 = por %p170, %p171
      %p174 = scmp.ne.s32.totalorder %s159, %s173
      %p175 = scmp.eq.s32.totalorder %s23, 0
      %p176 = por %p174, %p175
      %s178 = sadd.s32 %s177, 1
      %p181 = scmp.eq.s32.totalorder %s17, 3
      %p182 = scmp.ne.s32.totalorder %s177, %s179
      %p183 = scmp.eq.s32.totalorder %s17, 0
      %p184 = por %p182, %p183
      %p185 = scmp.ne.s32.totalorder %s177, %s179
      %p186 = scmp.eq.s32.totalorder %s22, 3
      %p187 = por %p185, %p186
      %p188 = scmp.ne.s32.totalorder %s179, %s180
      %p189 = scmp.eq.s32.totalorder %s22, 0
      %p190 = por %p188, %p189
      %p191 = scmp.ne.s32.totalorder %s179, %s180
      %p192 = scmp.eq.s32.totalorder %s23, 3
      %p193 = por %p191, %p192
      %p195 = scmp.ne.s32.totalorder %s180, %s194
      %p196 = scmp.eq.s32.totalorder %s23, 0
      %p197 = por %p195, %p196
      %s199 = sadd.s32 %s198, 1
      %p202 = scmp.eq.s32.totalorder %s17, 3
      %p203 = scmp.ne.s32.totalorder %s198, %s200
      %p204 = scmp.eq.s32.totalorder %s17, 0
      %p205 = por %p203, %p204
      %p206 = scmp.ne.s32.totalorder %s198, %s200
      %p207 = scmp.eq.s32.totalorder %s22, 3
      %p208 = por %p206, %p207
      %p209 = scmp.ne.s32.totalorder %s200, %s201
      %p210 = scmp.eq.s32.totalorder %s22, 0
      %p211 = por %p209, %p210
      %p212 = scmp.ne.s32.totalorder %s200, %s201
      %p213 = scmp.eq.s32.totalorder %s23, 3
      %p214 = por %p212, %p213
      %p216 = scmp.ne.s32.totalorder %s201, %s215
      %p217 = scmp.eq.s32.totalorder %s23, 0
      %p218 = por %p216, %p217
      %s219 = smul.u32 %s26, %s25
      %s220 = smul.u32 %s35, %s39
      %s221 = ssub.s32 %s24, %s43
      %s222 = ssub.s32 %s219, %s220
      %s223 = sor.u32 %s221, %s222
      %p224 = scmp.eq.s32.totalorder %s223, 0
      %s226 = sadd.s32 %s225, 1
      %s227 = scalar_select %p224, %s225, %s226
      %p230 = pneg %p224
      %p231 = scmp.eq.s32.totalorder %s17, 3
      %p232 = por %p230, %p231
      %p233 = scmp.ne.s32.totalorder %s225, %s228
      %p234 = scmp.eq.s32.totalorder %s17, 0
      %p235 = por %p233, %p234
      %p236 = scmp.ne.s32.totalorder %s225, %s228
      %p237 = scmp.eq.s32.totalorder %s22, 3
      %p238 = por %p236, %p237
      %p239 = scmp.ne.s32.totalorder %s228, %s229
      %p240 = scmp.eq.s32.totalorder %s22, 0
      %p241 = por %p239, %p240
      %p242 = scmp.ne.s32.totalorder %s228, %s229
      %p243 = scmp.eq.s32.totalorder %s23, 3
      %p244 = por %p242, %p243
      %p246 = scmp.ne.s32.totalorder %s229, %s245
      %p247 = scmp.eq.s32.totalorder %s23, 0
      %p248 = por %p246, %p247
      %p249 = scmp.le.s32.totalorder 1, %s17
      %p250 = scmp.lt.s32.totalorder %s17, 5
      %p251 = pnand %p249, %p250
      %p252 = pneg %p251
      // Predicated region
      $region9: #{tpu_custom_call.1} parent=5 // pred_check
        _
      $region10: #{tpu_custom_call.1} parent=5 // pred_check_branch
        %254 = sbr.rel (%p251) target = $region12
      $region11: #{tpu_custom_call.1} parent=5 // pred_region
        %s255 = ssub.s32 %s17, 1
        // Predicated region
        $region13: #{tpu_custom_call.1} parent=11 // pred_check
          %p256 = pneg %p85
        $region14: #{tpu_custom_call.1} parent=11 // pred_check_branch
          %258 = sbr.rel (%p256) target = $region16
        $region15: #{tpu_custom_call.1} parent=11 // pred_region
          _
        $region16: #{tpu_custom_call.1} parent=11 // pred_fallthru
          _
        // Predicated region
        $region17: #{tpu_custom_call.1} parent=11 // pred_check
          %p259 = pneg %p106
        $region18: #{tpu_custom_call.1} parent=11 // pred_check_branch
          %261 = sbr.rel (%p259) target = $region20
        $region19: #{tpu_custom_call.1} parent=11 // pred_region
          _
        $region20: #{tpu_custom_call.1} parent=11 // pred_fallthru
          _
        // Predicated region
        $region21: #{tpu_custom_call.1} parent=11 // pred_check
          %p262 = pneg %p127
        $region22: #{tpu_custom_call.1} parent=11 // pred_check_branch
          %264 = sbr.rel (%p262) target = $region24
        $region23: #{tpu_custom_call.1} parent=11 // pred_region
          _
        $region24: #{tpu_custom_call.1} parent=11 // pred_fallthru
          _
        // Predicated region
        $region25: #{tpu_custom_call.1} parent=11 // pred_check
          %p265 = pneg %p148
        $region26: #{tpu_custom_call.1} parent=11 // pred_check_branch
          %267 = sbr.rel (%p265) target = $region28
        $region27: #{tpu_custom_call.1} parent=11 // pred_region
          _
        $region28: #{tpu_custom_call.1} parent=11 // pred_fallthru
          _
        // Predicated region
        $region29: #{tpu_custom_call.1} parent=11 // pred_check
          %p268 = pneg %p169
        $region30: #{tpu_custom_call.1} parent=11 // pred_check_branch
          %270 = sbr.rel (%p268) target = $region32
        $region31: #{tpu_custom_call.1} parent=11 // pred_region
          _
        $region32: #{tpu_custom_call.1} parent=11 // pred_fallthru
          _
        // Predicated region
        $region33: #{tpu_custom_call.1} parent=11 // pred_check
          %p271 = pneg %p190
        $region34: #{tpu_custom_call.1} parent=11 // pred_check_branch
          %273 = sbr.rel (%p271) target = $region36
        $region35: #{tpu_custom_call.1} parent=11 // pred_region
          _
        $region36: #{tpu_custom_call.1} parent=11 // pred_fallthru
          _
        // Predicated region
        $region37: #{tpu_custom_call.1} parent=11 // pred_check
          %p274 = pneg %p211
        $region38: #{tpu_custom_call.1} parent=11 // pred_check_branch
          %276 = sbr.rel (%p274) target = $region40
        $region39: #{tpu_custom_call.1} parent=11 // pred_region
          _
        $region40: #{tpu_custom_call.1} parent=11 // pred_fallthru
          _
      $region12: #{tpu_custom_call.1} parent=5 // pred_fallthru
        _
      %p277 = scmp.lt.s32.totalorder %s17, 4
      // Predicated region
      $region41: #{tpu_custom_call.1} parent=5 // pred_check
        %p278 = pneg %p277
      $region42: #{tpu_custom_call.1} parent=5 // pred_check_branch
        %280 = sbr.rel (%p278) target = $region44
      $region43: #{tpu_custom_call.1} parent=5 // pred_region
        // Predicated region
        $region45: #{tpu_custom_call.1} parent=43 // pred_check
          %p281 = pneg %p58
        $region46: #{tpu_custom_call.1} parent=43 // pred_check_branch
          %283 = sbr.rel (%p281) target = $region48
        $region47: #{tpu_custom_call.1} parent=43 // pred_region
          %s284 = smul.u32 2, %s26
          %p285 = scmp.lt.s32.totalorder %s24, 1
          %s286 = scalar_select %p285, %s24, 1
          %p287 = scmp.lt.s32.totalorder %s284, 1
          %s288 = scalar_select %p287, %s284, 1
          %s289 = smul.addr %s286, 2
          %s290 = sadd.s32 %s288, %s289
          %s291 = smul.addr %s290, 8
          %s292 = scalar_lea.vmem %s0, %s291
          %s293 = smul.u32 2, %s26
        $region48: #{tpu_custom_call.1} parent=43 // pred_fallthru
          _
      $region44: #{tpu_custom_call.1} parent=5 // pred_fallthru
        _
      %p294 = scmp.le.s32.totalorder 1, %s17
      %p295 = scmp.lt.s32.totalorder %s17, 5
      %p296 = pnand %p294, %p295
      %p297 = pneg %p296
      // Predicated region
      $region49: #{tpu_custom_call.1} parent=5 // pred_check
        _
      $region50: #{tpu_custom_call.1} parent=5 // pred_check_branch
        %299 = sbr.rel (%p296) target = $region52
      $region51: #{tpu_custom_call.1} parent=5 // pred_region
        %s300 = ssub.s32 %s17, 1
        %s301 = smul.u32 2, %s29
        %p302 = scmp.lt.s32.totalorder %s27, 1
        %s303 = scalar_select %p302, %s27, 1
        %p304 = scmp.lt.s32.totalorder %s301, 1
        %s305 = scalar_select %p304, %s301, 1
        %s306 = smul.addr %s303, 2
        %s307 = sadd.s32 %s305, %s306
        %s308 = smul.addr %s307, 8
        %s309 = scalar_lea.vmem %s0, %s308
        %p310 = pneg %p64
        %p311 = pneg %p61
        %p312 = pneg %p85
        %p313 = pneg %p82
        %p314 = pneg %p106
        %p315 = pneg %p103
        %p316 = pneg %p127
        %p317 = pneg %p124
        %p318 = pneg %p148
        %p319 = pneg %p145
        %p320 = pneg %p169
        %p321 = pneg %p166
        %p322 = pneg %p190
        %p323 = pneg %p187
        %p324 = pneg %p211
        %p325 = pneg %p208
        %p326 = pneg %p241
        %p327 = pneg %p238
        %s328 = sand.u32 %s228, 1
        %s329 = scalar_lea.sflag [#allocation7], %s328
        %s330 = sand.u32 %s228, 1
        %s331 = smul.addr %s330, 16
        %s332 = scalar_lea.vmem [#allocation6], %s331
        %s333 = smul.u32 2, %s29
        %p334 = scmp.lt.s32.totalorder %s27, 1
        %s335 = scalar_select %p334, %s27, 1
        %p336 = scmp.lt.s32.totalorder %s333, 1
        %s337 = scalar_select %p336, %s333, 1
        %s338 = smul.addr %s335, 2
        %s339 = sadd.s32 %s337, %s338
        %s340 = smul.addr %s339, 8
        %s341 = scalar_lea.vmem %s0, %s340
        %s342 = smul.u32 2, %s29
        %s343 = smul.u32 %s29, %s28
        %s344 = smul.u32 2, %s343
        %p345 = scmp.eq.s32.totalorder %s28, 0
        // Predicated region
        $region53: #{tpu_custom_call.1} parent=51 // pred_check
          %p346 = pneg %p345
        $region54: #{tpu_custom_call.1} parent=51 // pred_check_branch
          %348 = sbr.rel (%p346) target = $region56
        $region55: #{tpu_custom_call.1} parent=51 // pred_region
          %p349 = scmp.eq.s32.totalorder %s29, 0
          // Predicated region
          $region57: #{tpu_custom_call.1} parent=55 // pred_check
            %p350 = pneg %p349
          $region58: #{tpu_custom_call.1} parent=55 // pred_check_branch
            %352 = sbr.rel (%p350) target = $region60
          $region59: #{tpu_custom_call.1} parent=55 // pred_region
            %vm353 = vcmask 0
            %354 = vst.msk [vmem:[#allocation2] sm:$0x1] %vm353, -inf
            %355 = vst.msk [vmem:[#allocation3] sm:$0x1] %vm353, 0.0
            %vm356 = vcmask 7168
            %357 = vst.msk [vmem:[#allocation4] sm:$0xff] %vm356, 0.0
          $region60: #{tpu_custom_call.1} parent=55 // pred_fallthru
            _
          %v358 = vld [vmem:[%s341] sm:$0xff]
          %v359 = vld [vmem:[%s341 + $0x8] sm:$0xff]
          %v360 = vld [vmem:[%s1] sm:$0x1]
          %vm361 = vcmask 64512
          %v363 = vsel %vm361, %v360, 0
          %365 = vmatprep.subr.mxu0 %v359
          %366 = vmatpush1.msra.mxu0 %v358
          %367 = vmatprep.subr.mxu0 0.0
          %368 = vmatpush1.msra.mxu0 0.0
          %369 = vmatprep.subr.mxu0 0.0
          %370 = vmatpush1.msra.mxu0 0.0
          %371 = vmatprep.subr.mxu0 0.0
          %372 = vmatpush1.msra.mxu0 0.0
          %373 = vmatprep.subr.mxu0 0.0
          %374 = vmatpush1.msra.mxu0 0.0
          %375 = vmatprep.subr.mxu0 0.0
          %376 = vmatpush1.msra.mxu0 0.0
          %377 = vmatprep.subr.mxu0 0.0
          %378 = vmatpush1.msra.mxu0 0.0
          %379 = vmatprep.subr.mxu0 0.0
          %380 = vmatpush1.msra.mxu0 0.0
          %381 = vmatprep.subr.mxu0 0.0
          %382 = vmatpush1.msra.mxu0 0.0
          %383 = vmatprep.subr.mxu0 0.0
          %384 = vmatpush1.msra.mxu0 0.0
          %385 = vmatprep.subr.mxu0 0.0
          %386 = vmatpush1.msra.mxu0 0.0
          %387 = vmatprep.subr.mxu0 0.0
          %388 = vmatpush1.msra.mxu0 0.0
          %389 = vmatprep.subr.mxu0 0.0
          %390 = vmatpush1.msra.mxu0 0.0
          %391 = vmatprep.subr.mxu0 0.0
          %392 = vmatpush1.msra.mxu0 0.0
          %393 = vmatprep.subr.mxu0 0.0
          %394 = vmatpush1.msra.mxu0 0.0
          %395 = vmatprep.subr.mxu0 0.0
          %396 = vmatpush1.msra.mxu0 0.0
          %397 = vmatprep.subr.mxu0 0.0
          %398 = vmatpush1.msra.mxu0 0.0
          %399 = vmatprep.subr.mxu0 0.0
          %400 = vmatpush1.msra.mxu0 0.0
          %401 = vmatprep.subr.mxu0 0.0
          %402 = vmatpush1.msra.mxu0 0.0
          %403 = vmatprep.subr.mxu0 0.0
          %404 = vmatpush1.msra.mxu0 0.0
          %405 = vmatprep.subr.mxu0 0.0
          %406 = vmatpush1.msra.mxu0 0.0
          %407 = vmatprep.subr.mxu0 0.0
          %408 = vmatpush1.msra.mxu0 0.0
          %409 = vmatprep.subr.mxu0 0.0
          %410 = vmatpush1.msra.mxu0 0.0
          %411 = vmatprep.subr.mxu0 0.0
          %412 = vmatpush1.msra.mxu0 0.0
          %413 = vmatprep.subr.mxu0 0.0
          %414 = vmatpush1.msra.mxu0 0.0
          %415 = vmatprep.subr.mxu0 0.0
          %416 = vmatpush1.msra.mxu0 0.0
          %417 = vmatprep.subr.mxu0 0.0
          %418 = vmatpush1.msra.mxu0 0.0
          %419 = vmatprep.subr.mxu0 0.0
          %420 = vmatpush1.msra.mxu0 0.0
          %421 = vmatprep.subr.mxu0 0.0
          %422 = vmatpush1.msra.mxu0 0.0
          %423 = vmatprep.subr.mxu0 0.0
          %424 = vmatpush1.msra.mxu0 0.0
          %425 = vmatprep.subr.mxu0 0.0
          %426 = vmatpush1.msra.mxu0 0.0
          %427 = vmatprep.subr.mxu0 0.0
          %428 = vmatpush1.msra.mxu0 0.0
          %429 = vmatprep.mubr.f32.mxu0 0.0
          %430 = vmatmul.mubr.f32.gmra.mrb[0].mxu0 %v363
          %v431 = vpop.f32.mrb[0].mxu0
          %v432 = vadd.f32 0.0, %v431
          %v433 = vpop.f32.mrb[0].mxu0
          %v434 = vadd.f32 0.0, %v433
          %435 = vdwg.mxu0
          %v436 = vld [vmem:[#allocation2] sm:$0x1]
          %vm437 = vcmask 1040384
          %v438 = vsel %vm437, %v432, -inf
          %v439 = vsel %vm437, %v434, -inf
          %v440 = vmax.f32 %v438, %v439
          %441 = vmax.xlane.f32.xlu0 %v440
          %v442 = vpop.xlane.xlu0 %441
          %v443 = vrot.slane %v442, 4
          %v444 = vmax.f32 %v442, %v443
          %v445 = vrot.slane %v444, 2
          %v446 = vmax.f32 %v444, %v445
          %v447 = vrot.slane %v446, 1
          %v448 = vmax.f32 %v446, %v447
          %s449 = vtos %v448
          %v450 = vstv %s449
          %v451 = vmax.f32 %v436, %v450
          %v452 = vsub.f32 %v436, %v451
          %v453 = vmul.f32 %v452, 1.442695
          %v454 = vpow.pop %v453
          %456 = vset.pattern.permute.xlu0 0
          %457 = vperm.xlu0 %456, %v451
          %v458 = vpop.permute.xlu0 %457
          %v460 = vlaneseq
          %v461 = vshrl.u32 %v460, 7
          %v462 = vsub.s32 0, %v461
          %v463 = vrot.slane %v458, %v462
          %v464 = vsub.f32 %v432, %v463
          %v465 = vsub.f32 %v434, %v463
          %v466 = vmul.f32 %v464, 1.442695
          %v467 = vpow.pop %v466
          %v468 = vmul.f32 %v465, 1.442695
          %v469 = vpow.pop %v468
          %v470 = vld [vmem:[#allocation3] sm:$0x1]
          %v471 = vmul.f32 %v470, %v454
          %v472 = vsel %vm437, %v467, 0.0
          %v473 = vsel %vm437, %v469, 0.0
          %v474 = vadd.f32 %v472, %v473
          %475 = vadd.xlane.f32.xlu0 %v474
          %v476 = vpop.xlane.xlu0 %475
          %v477 = vrot.slane %v476, 4
          %v478 = vadd.f32 %v476, %v477
          %v479 = vrot.slane %v478, 2
          %v480 = vadd.f32 %v478, %v479
          %v481 = vrot.slane %v480, 1
          %v482 = vadd.f32 %v480, %v481
          %s483 = vtos %v482
          %v484 = vstv %s483
          %v485 = vadd.f32 %v471, %v484
          %vm486 = vcmask 0
          %487 = vst.msk [vmem:[#allocation3] sm:$0x1] %vm486, %v485
          %v488 = vlaneseq
          %v489 = vshrl.u32 %v488, 7
          %v490 = vsub.s32 0, %v489
          %v491 = vrot.slane %v467, %v490
          %v492 = vlaneseq
          %v493 = vshrl.u32 %v492, 7
          %v494 = vsub.s32 0, %v493
          %v495 = vrot.slane %v469, %v494
          %v496 = vmul.f32 %v358, %v491
          %v497 = vmul.f32 %v359, %v495
          %v498 = vadd.f32 %v496, %v497
          %499 = vadd.xlane.f32.xlu0 %v498
          %v500 = vpop.xlane.xlu0 %499
          %v501 = vld [vmem:[#allocation4] sm:$0xff]
          %v503 = vlaneseq
          %v504 = vshrl.u32 %v503, 7
          %v505 = vsub.s32 0, %v504
          %v506 = vrot.slane %v454, %v505
          %v508 = vmul.f32 %v501, %v506
          %v509 = vadd.f32 %v508, %v500
          %vm510 = vcmask 7168
          %511 = vst.msk [vmem:[#allocation4] sm:$0xff] %vm510, %v509
          %512 = vst.msk [vmem:[#allocation2] sm:$0x1] %vm486, %v451
          // Predicated region
          $region61: #{tpu_custom_call.1} parent=55 // pred_check
            %p513 = pneg %p349
          $region62: #{tpu_custom_call.1} parent=55 // pred_check_branch
            %515 = sbr.rel (%p513) target = $region64
          $region63: #{tpu_custom_call.1} parent=55 // pred_region
            %v516 = vld [vmem:[#allocation4] sm:$0xff]
            %v517 = vld [vmem:[#allocation3] sm:$0x1]
            %v519 = vlaneseq
            %v520 = vshrl.u32 %v519, 7
            %v521 = vsub.s32 0, %v520
            %v522 = vrot.slane %v517, %v521
            %v524 = vrcp.pop %v522
            %v525 = vmul.f32 %v516, %v524
            %v526 = vld [vmem:[%s2] sm:$0xff]
            %v527 = vld [vmem:[%s3] sm:$0xff]
            %v529 = vsel %vm361, %v526, 0
            %531 = vmatprep.subr.mxu0 0.0
            %532 = vmatpush1.msra.mxu0 %v525
            %533 = vmatprep.subr.mxu0 0.0
            %534 = vmatpush1.msra.mxu0 0.0
            %535 = vmatprep.subr.mxu0 0.0
            %536 = vmatpush1.msra.mxu0 0.0
            %537 = vmatprep.subr.mxu0 0.0
            %538 = vmatpush1.msra.mxu0 0.0
            %539 = vmatprep.subr.mxu0 0.0
            %540 = vmatpush1.msra.mxu0 0.0
            %541 = vmatprep.subr.mxu0 0.0
            %542 = vmatpush1.msra.mxu0 0.0
            %543 = vmatprep.subr.mxu0 0.0
            %544 = vmatpush1.msra.mxu0 0.0
            %545 = vmatprep.subr.mxu0 0.0
            %546 = vmatpush1.msra.mxu0 0.0
            %547 = vmatprep.subr.mxu0 0.0
            %548 = vmatpush1.msra.mxu0 0.0
            %549 = vmatprep.subr.mxu0 0.0
            %550 = vmatpush1.msra.mxu0 0.0
            %551 = vmatprep.subr.mxu0 0.0
            %552 = vmatpush1.msra.mxu0 0.0
            %553 = vmatprep.subr.mxu0 0.0
            %554 = vmatpush1.msra.mxu0 0.0
            %555 = vmatprep.subr.mxu0 0.0
            %556 = vmatpush1.msra.mxu0 0.0
            %557 = vmatprep.subr.mxu0 0.0
            %558 = vmatpush1.msra.mxu0 0.0
            %559 = vmatprep.subr.mxu0 0.0
            %560 = vmatpush1.msra.mxu0 0.0
            %561 = vmatprep.subr.mxu0 0.0
            %562 = vmatpush1.msra.mxu0 0.0
            %563 = vmatprep.subr.mxu0 0.0
            %564 = vmatpush1.msra.mxu0 0.0
            %565 = vmatprep.subr.mxu0 0.0
            %566 = vmatpush1.msra.mxu0 0.0
            %567 = vmatprep.subr.mxu0 0.0
            %568 = vmatpush1.msra.mxu0 0.0
            %569 = vmatprep.subr.mxu0 0.0
            %570 = vmatpush1.msra.mxu0 0.0
            %571 = vmatprep.subr.mxu0 0.0
            %572 = vmatpush1.msra.mxu0 0.0
            %573 = vmatprep.subr.mxu0 0.0
            %574 = vmatpush1.msra.mxu0 0.0
            %575 = vmatprep.subr.mxu0 0.0
            %576 = vmatpush1.msra.mxu0 0.0
            %577 = vmatprep.subr.mxu0 0.0
            %578 = vmatpush1.msra.mxu0 0.0
            %579 = vmatprep.subr.mxu0 0.0
            %580 = vmatpush1.msra.mxu0 0.0
            %581 = vmatprep.subr.mxu0 0.0
            %582 = vmatpush1.msra.mxu0 0.0
            %583 = vmatprep.subr.mxu0 0.0
            %584 = vmatpush1.msra.mxu0 0.0
            %585 = vmatprep.subr.mxu0 0.0
            %586 = vmatpush1.msra.mxu0 0.0
            %587 = vmatprep.subr.mxu0 0.0
            %588 = vmatpush1.msra.mxu0 0.0
            %589 = vmatprep.subr.mxu0 0.0
            %590 = vmatpush1.msra.mxu0 0.0
            %591 = vmatprep.subr.mxu0 0.0
            %592 = vmatpush1.msra.mxu0 0.0
            %593 = vmatprep.subr.mxu0 0.0
            %594 = vmatpush1.msra.mxu0 0.0
            %595 = vmatprep.mubr.f32.mxu0 0.0
            %596 = vmatmul.mubr.f32.gmra.mrb[0].mxu0 %v529
            %v597 = vpop.f32.mrb[0].mxu0
            %v598 = vadd.f32 %v527, %v597
            %v599 = vpop.f32.mrb[0].mxu0
            %600 = vdwg.mxu0
            %v601 = vsel %vm510, %v598, 0.0
            %602 = vadd.xlane.f32.xlu0 %v601
            %v603 = vpop.xlane.xlu0 %602
            %v604 = vrot.slane %v603, 4
            %v605 = vadd.f32 %v603, %v604
            %v606 = vrot.slane %v605, 2
            %v607 = vadd.f32 %v605, %v606
            %v608 = vrot.slane %v607, 1
            %v609 = vadd.f32 %v607, %v608
            %s610 = vtos %v609
            %v611 = vrcp.pop 8.0
            %s612 = vtos %v611
            %s613 = smul.f32 %s610, %s612
            %v614 = vstv %s613
            %v615 = vsub.f32 %v598, %v614
            %v616 = vmul.f32 %v615, %v615
            %v617 = vsel %vm510, %v616, 0.0
            %618 = vadd.xlane.f32.xlu0 %v617
            %v619 = vpop.xlane.xlu0 %618
            %v620 = vrot.slane %v619, 4
            %v621 = vadd.f32 %v619, %v620
            %v622 = vrot.slane %v621, 2
            %v623 = vadd.f32 %v621, %v622
            %v624 = vrot.slane %v623, 1
            %v625 = vadd.f32 %v623, %v624
            %s626 = vtos %v625
            %v627 = vrcp.pop 8.0
            %s628 = vtos %v627
            %s629 = smul.f32 %s626, %s628
            %s630 = sadd.f32 %s629, 1e-05
            %v631 = vstv %s630
            %v632 = vrsqrt.pop %v631
            %s633 = vtos %v632
            %v634 = vstv %s633
            %v635 = vmul.f32 %v615, %v634
            %v636 = vld [vmem:[%s4] sm:$0xff]
            %v637 = vmul.f32 %v635, %v636
            %v638 = vld [vmem:[%s5] sm:$0xff]
            %v639 = vadd.f32 %v637, %v638
            %v640 = vmax.f32 %v639, 0.0
            %v641 = vld [vmem:[%s6] sm:$0xff]
            %v642 = vld [vmem:[%s7] sm:$0xff]
            %v644 = vsel %vm361, %v641, 0
            %646 = vmatprep.subr.mxu0 0.0
            %647 = vmatpush1.msra.mxu0 %v640
            %648 = vmatprep.subr.mxu0 0.0
            %649 = vmatpush1.msra.mxu0 0.0
            %650 = vmatprep.subr.mxu0 0.0
            %651 = vmatpush1.msra.mxu0 0.0
            %652 = vmatprep.subr.mxu0 0.0
            %653 = vmatpush1.msra.mxu0 0.0
            %654 = vmatprep.subr.mxu0 0.0
            %655 = vmatpush1.msra.mxu0 0.0
            %656 = vmatprep.subr.mxu0 0.0
            %657 = vmatpush1.msra.mxu0 0.0
            %658 = vmatprep.subr.mxu0 0.0
            %659 = vmatpush1.msra.mxu0 0.0
            %660 = vmatprep.subr.mxu0 0.0
            %661 = vmatpush1.msra.mxu0 0.0
            %662 = vmatprep.subr.mxu0 0.0
            %663 = vmatpush1.msra.mxu0 0.0
            %664 = vmatprep.subr.mxu0 0.0
            %665 = vmatpush1.msra.mxu0 0.0
            %666 = vmatprep.subr.mxu0 0.0
            %667 = vmatpush1.msra.mxu0 0.0
            %668 = vmatprep.subr.mxu0 0.0
            %669 = vmatpush1.msra.mxu0 0.0
            %670 = vmatprep.subr.mxu0 0.0
            %671 = vmatpush1.msra.mxu0 0.0
            %672 = vmatprep.subr.mxu0 0.0
            %673 = vmatpush1.msra.mxu0 0.0
            %674 = vmatprep.subr.mxu0 0.0
            %675 = vmatpush1.msra.mxu0 0.0
            %676 = vmatprep.subr.mxu0 0.0
            %677 = vmatpush1.msra.mxu0 0.0
            %678 = vmatprep.subr.mxu0 0.0
            %679 = vmatpush1.msra.mxu0 0.0
            %680 = vmatprep.subr.mxu0 0.0
            %681 = vmatpush1.msra.mxu0 0.0
            %682 = vmatprep.subr.mxu0 0.0
            %683 = vmatpush1.msra.mxu0 0.0
            %684 = vmatprep.subr.mxu0 0.0
            %685 = vmatpush1.msra.mxu0 0.0
            %686 = vmatprep.subr.mxu0 0.0
            %687 = vmatpush1.msra.mxu0 0.0
            %688 = vmatprep.subr.mxu0 0.0
            %689 = vmatpush1.msra.mxu0 0.0
            %690 = vmatprep.subr.mxu0 0.0
            %691 = vmatpush1.msra.mxu0 0.0
            %692 = vmatprep.subr.mxu0 0.0
            %693 = vmatpush1.msra.mxu0 0.0
            %694 = vmatprep.subr.mxu0 0.0
            %695 = vmatpush1.msra.mxu0 0.0
            %696 = vmatprep.subr.mxu0 0.0
            %697 = vmatpush1.msra.mxu0 0.0
            %698 = vmatprep.subr.mxu0 0.0
            %699 = vmatpush1.msra.mxu0 0.0
            %700 = vmatprep.subr.mxu0 0.0
            %701 = vmatpush1.msra.mxu0 0.0
            %702 = vmatprep.subr.mxu0 0.0
            %703 = vmatpush1.msra.mxu0 0.0
            %704 = vmatprep.subr.mxu0 0.0
            %705 = vmatpush1.msra.mxu0 0.0
            %706 = vmatprep.subr.mxu0 0.0
            %707 = vmatpush1.msra.mxu0 0.0
            %708 = vmatprep.subr.mxu0 0.0
            %709 = vmatpush1.msra.mxu0 0.0
            %710 = vmatprep.mubr.f32.mxu0 0.0
            %711 = vmatmul.mubr.f32.gmra.mrb[0].mxu0 %v644
            %v712 = vpop.f32.mrb[0].mxu0
            %v713 = vadd.f32 %v642, %v712
            %v714 = vpop.f32.mrb[0].mxu0
            %715 = vdwg.mxu0
            %716 = vst.msk [vmem:[#allocation5] sm:$0xff] %vm510, %v713
          $region64: #{tpu_custom_call.1} parent=55 // pred_fallthru
            _
        $region56: #{tpu_custom_call.1} parent=51 // pred_fallthru
          _
        %p717 = scmp.eq.s32.totalorder %s28, 1
        // Predicated region
        $region65: #{tpu_custom_call.1} parent=51 // pred_check
          %p718 = pneg %p717
        $region66: #{tpu_custom_call.1} parent=51 // pred_check_branch
          %720 = sbr.rel (%p718) target = $region68
        $region67: #{tpu_custom_call.1} parent=51 // pred_region
          %v721 = vld [vmem:[%s341] sm:$0xff]
          %v722 = vld [vmem:[%s341 + $0x8] sm:$0xff]
          %v723 = vld [vmem:[#allocation5] sm:$0xff]
          %725 = vset.pattern.permute.xlu0 0
          %726 = vperm.xlu0 %725, %v723
          %v727 = vpop.permute.xlu0 %726
          %v729 = vadd.f32 %v721, %v727
          %v730 = vadd.f32 %v722, %v727
          %731 = vst [vmem:[%s332] sm:$0xff] %v729
          %732 = vst [vmem:[%s332 + $0x8] sm:$0xff] %v730
        $region68: #{tpu_custom_call.1} parent=51 // pred_fallthru
          _
        %s733 = sand.u32 %s228, 1
        %s734 = scalar_lea.sflag [#allocation7], %s733
        %s735 = sand.u32 %s228, 1
        %s736 = smul.addr %s735, 16
        %s737 = scalar_lea.vmem [#allocation6], %s736
        // Predicated region
        $region69: #{tpu_custom_call.1} parent=51 // pred_check
          %p738 = pneg %p238
        $region70: #{tpu_custom_call.1} parent=51 // pred_check_branch
          %740 = sbr.rel (%p738) target = $region72
        $region71: #{tpu_custom_call.1} parent=51 // pred_region
          %s741 = smul.u32 %s29, %s28
          %s742 = smul.u32 2, %s741
          %s744 = ssub.s32 256, 256
          %745 = vsyncadd %s734, %s744
          %s746 = smul.addr %s27, 2
          %s747 = sadd.s32 %s742, %s746
          %s748 = smul.addr %s747, 128
          %s749 = scalar_lea.hbm %s8, %s748
          %s751 = sshll.u32 %s737, 4
          %s752 = int_to_ptr.vmem [resolvable:$true] %s751
          %754 = dma.vmem_to_hbm [thread:$0]  %s752, 256, %s749, %s734
        $region72: #{tpu_custom_call.1} parent=51 // pred_fallthru
          _
      $region52: #{tpu_custom_call.1} parent=5 // pred_fallthru
        _
      %p755 = scmp.le.s32.totalorder 2, %s17
      // Predicated region
      $region73: #{tpu_custom_call.1} parent=5 // pred_check
        %p756 = pneg %p755
      $region74: #{tpu_custom_call.1} parent=5 // pred_check_branch
        %758 = sbr.rel (%p756) target = $region76
      $region75: #{tpu_custom_call.1} parent=5 // pred_region
        %s759 = ssub.s32 %s17, 2
        // Predicated region
        $region77: #{tpu_custom_call.1} parent=75 // pred_check
          %p760 = pneg %p244
        $region78: #{tpu_custom_call.1} parent=75 // pred_check_branch
          %762 = sbr.rel (%p760) target = $region80
        $region79: #{tpu_custom_call.1} parent=75 // pred_region
          %s763 = sand.u32 %s229, 1
          %s764 = scalar_lea.sflag [#allocation7], %s763
          %s765 = sand.u32 %s229, 1
          %s766 = smul.addr %s765, 16
          %s767 = scalar_lea.vmem [#allocation6], %s766
          %768 = dma.done %s764, 256
        $region80: #{tpu_custom_call.1} parent=75 // pred_fallthru
          _
      $region76: #{tpu_custom_call.1} parent=5 // pred_fallthru
        _
    $region6: #{tpu_custom_call.1} parent=1 // loop_footer
      %s21 = sadd.s32 1, %s17
    $region7: #{tpu_custom_call.1} parent=1 // loop_footer_branch
      %16 = sbr.rel target = $region3
    $region8: #{tpu_custom_call.1} parent=1 // loop_exit
      _
    %769 = vsyncpa [#allocation7], 1
    %s770 = scalar_lea.sflag [#allocation7], 1
    %771 = vsyncpa %s770, 1

// kernel: tpu_custom_call.1
$region0: #{tpu_custom_call.1}
  #allocation0 [shape = 'u32[]', space=smem, size = 0x4, offset = 0x4, fixed_abs, tag = 'smem constant byte address 0x4 - core index']
  #allocation1 [shape = 'u32[144,128]{1,0:T(1,128)}', space=vmem, size = 0x12000, scoped, tag = 'internal scratch']
  #allocation2 [shape = 'f32[1,1]{1,0:T(1,128)}', space=vmem, size = 0x200, scoped, tag = 'scratch operand']
  #allocation3 [shape = 'f32[1,1]{1,0:T(1,128)}', space=vmem, size = 0x200, scoped, tag = 'scratch operand']
  #allocation4 [shape = 'f32[8,1]{1,0:T(8,128)}', space=vmem, size = 0x1000, scoped, tag = 'scratch operand']
  #allocation5 [shape = 'f32[8,1]{1,0:T(8,128)}', space=vmem, size = 0x1000, scoped, tag = 'scratch operand']
  %s0 = inlined_call_operand.vmem [shape: f32[2,8,256], index: 0, kind: input, shape index: {}]
  %s1 = inlined_call_operand.vmem [shape: f32[1,8], index: 1, kind: input, shape index: {}]
  %s2 = inlined_call_operand.vmem [shape: f32[8,8], index: 2, kind: input, shape index: {}]
  %s3 = inlined_call_operand.vmem [shape: f32[8,1], index: 3, kind: input, shape index: {}]
  %s4 = inlined_call_operand.vmem [shape: f32[8,1], index: 4, kind: input, shape index: {}]
  %s5 = inlined_call_operand.vmem [shape: f32[8,1], index: 5, kind: input, shape index: {}]
  %s6 = inlined_call_operand.vmem [shape: f32[8,8], index: 6, kind: input, shape index: {}]
  %s7 = inlined_call_operand.vmem [shape: f32[8,1], index: 7, kind: input, shape index: {}]
  %s8 = inlined_call_operand.hbm [shape: f32[2,8,256], index: 8, kind: output, shape index: {}]
  %s9 = sld [smem:[#allocation0]]
  $region81: #{tpu_custom_call.1} parent=0
    _
  %s11 = ssub.s32 1, %s9
  %s12 = scalar_select 0, %s11, %s9
  $region1: #{tpu_custom_call.1} parent=0
    #allocation6 [shape = 'u8[16384]{0}', space=vmem, size = 0x4000, scoped, tag = 'output window, operand 0']
    #allocation7 [shape = 's32[2]{0}', space=sflag, size = 0x8, scoped, tag = 'scoped memory for tpu_custom_call.1']
    %13 = vsyncpa [#allocation7], 0
    %s14 = scalar_lea.sflag [#allocation7], 1
    %15 = vsyncpa %s14, 0
    loop: start=0, step=1, limit=6
    $region2: #{tpu_custom_call.1} parent=1 // loop_pre_header
      _
    $region3: #{tpu_custom_call.1} parent=1 // loop_header
      %s17 = sphi 0, %s21
      %p18 = scmp.ge.s32.totalorder %s17, 6
      %s24 = sphi 0, %s43
      %s25 = sphi 0, %s39
      %s26 = sphi 0, %s35
      %s27 = sphi 0, %s24
      %s28 = sphi 0, %s25
      %s29 = sphi 0, %s26
      %s30 = sphi 0, %s27
      %s31 = sphi 0, %s28
      %s32 = sphi 0, %s29
      %s48 = sphi 0, %s50
      %s51 = sphi 0, %s48
      %s52 = sphi 0, %s51
      %s68 = sphi 0, %s52
      %s72 = sphi 0, %s72
      %s74 = sphi 0, %s72
      %s75 = sphi 0, %s74
      %s89 = sphi 0, %s75
      %s93 = sphi 0, %s93
      %s95 = sphi 0, %s93
      %s96 = sphi 0, %s95
      %s110 = sphi 0, %s96
      %s114 = sphi 0, %s114
      %s116 = sphi 0, %s114
      %s117 = sphi 0, %s116
      %s131 = sphi 0, %s117
      %s135 = sphi 0, %s135
      %s137 = sphi 0, %s135
      %s138 = sphi 0, %s137
      %s152 = sphi 0, %s138
      %s156 = sphi 0, %s156
      %s158 = sphi 0, %s156
      %s159 = sphi 0, %s158
      %s173 = sphi 0, %s159
      %s177 = sphi 0, %s177
      %s179 = sphi 0, %s177
      %s180 = sphi 0, %s179
      %s194 = sphi 0, %s180
      %s198 = sphi 0, %s198
      %s200 = sphi 0, %s198
      %s201 = sphi 0, %s200
      %s215 = sphi 0, %s201
      %s225 = sphi 0, %s227
      %s228 = sphi 0, %s225
      %s229 = sphi 0, %s228
      %s245 = sphi 0, %s229
    $region4: #{tpu_custom_call.1} parent=1 // loop_header_branch
      %20 = sbr.rel (%p18) target = $region8
    $region5: #{tpu_custom_call.1} parent=1 // loop_body
      %s22 = ssub.s32 %s17, 1
      %s23 = ssub.s32 %s17, 2
      %s33 = sadd.s32 1, %s26
      %p34 = scmp.ge.s32.totalorder %s33, 1
      %s35 = scalar_select %p34, 0, %s33
      %s36 = sadd.s32 1, %s25
      %s37 = scalar_select %p34, %s36, %s25
      %p38 = scmp.ge.s32.totalorder %s37, 2
      %s39 = scalar_select %p38, 0, %s37
      %s40 = sadd.s32 1, %s24
      %s41 = scalar_select %p38, %s40, %s24
      %p42 = scmp.ge.s32.totalorder %s41, 2
      %s43 = scalar_select %p42, 0, %s41
      %s44 = ssub.s32 %s24, %s43
      %s45 = ssub.s32 %s26, %s35
      %s46 = sor.u32 %s44, %s45
      %p47 = scmp.eq.s32.totalorder %s46, 0
      %s49 = sadd.s32 %s48, 1
      %s50 = scalar_select %p47, %s48, %s49
      %p53 = pneg %p47
      %p54 = scmp.eq.s32.totalorder %s17, 3
      %p55 = por %p53, %p54
      %p56 = scmp.ne.s32.totalorder %s48, %s51
      %p57 = scmp.eq.s32.totalorder %s17, 0
      %p58 = por %p56, %p57
      %p59 = scmp.ne.s32.totalorder %s48, %s51
      %p60 = scmp.eq.s32.totalorder %s22, 3
      %p61 = por %p59, %p60
      %p62 = scmp.ne.s32.totalorder %s51, %s52
      %p63 = scmp.eq.s32.totalorder %s22, 0
      %p64 = por %p62, %p63
      %p65 = scmp.ne.s32.totalorder %s51, %s52
      %p66 = scmp.eq.s32.totalorder %s23, 3
      %p67 = por %p65, %p66
      %p69 = scmp.ne.s32.totalorder %s52, %s68
      %p70 = scmp.eq.s32.totalorder %s23, 0
      %p71 = por %p69, %p70
      %s73 = sadd.s32 %s72, 1
      %p76 = scmp.eq.s32.totalorder %s17, 3
      %p77 = scmp.ne.s32.totalorder %s72, %s74
      %p78 = scmp.eq.s32.totalorder %s17, 0
      %p79 = por %p77, %p78
      %p80 = scmp.ne.s32.totalorder %s72, %s74
      %p81 = scmp.eq.s32.totalorder %s22, 3
      %p82 = por %p80, %p81
      %p83 = scmp.ne.s32.totalorder %s74, %s75
      %p84 = scmp.eq.s32.totalorder %s22, 0
      %p85 = por %p83, %p84
      %p86 = scmp.ne.s32.totalorder %s74, %s75
      %p87 = scmp.eq.s32.totalorder %s23, 3
      %p88 = por %p86, %p87
      %p90 = scmp.ne.s32.totalorder %s75, %s89
      %p91 = scmp.eq.s32.totalorder %s23, 0
      %p92 = por %p90, %p91
      %s94 = sadd.s32 %s93, 1
      %p97 = scmp.eq.s32.totalorder %s17, 3
      %p98 = scmp.ne.s32.totalorder %s93, %s95
      %p99 = scmp.eq.s32.totalorder %s17, 0
      %p100 = por %p98, %p99
      %p101 = scmp.ne.s32.totalorder %s93, %s95
      %p102 = scmp.eq.s32.totalorder %s22, 3
      %p103 = por %p101, %p102
      %p104 = scmp.ne.s32.totalorder %s95, %s96
      %p105 = scmp.eq.s32.totalorder %s22, 0
      %p106 = por %p104, %p105
      %p107 = scmp.ne.s32.totalorder %s95, %s96
      %p108 = scmp.eq.s32.totalorder %s23, 3
      %p109 = por %p107, %p108
      %p111 = scmp.ne.s32.totalorder %s96, %s110
      %p112 = scmp.eq.s32.totalorder %s23, 0
      %p113 = por %p111, %p112
      %s115 = sadd.s32 %s114, 1
      %p118 = scmp.eq.s32.totalorder %s17, 3
      %p119 = scmp.ne.s32.totalorder %s114, %s116
      %p120 = scmp.eq.s32.totalorder %s17, 0
      %p121 = por %p119, %p120
      %p122 = scmp.ne.s32.totalorder %s114, %s116
      %p123 = scmp.eq.s32.totalorder %s22, 3
      %p124 = por %p122, %p123
      %p125 = scmp.ne.s32.totalorder %s116, %s117
      %p126 = scmp.eq.s32.totalorder %s22, 0
      %p127 = por %p125, %p126
      %p128 = scmp.ne.s32.totalorder %s116, %s117
      %p129 = scmp.eq.s32.totalorder %s23, 3
      %p130 = por %p128, %p129
      %p132 = scmp.ne.s32.totalorder %s117, %s131
      %p133 = scmp.eq.s32.totalorder %s23, 0
      %p134 = por %p132, %p133
      %s136 = sadd.s32 %s135, 1
      %p139 = scmp.eq.s32.totalorder %s17, 3
      %p140 = scmp.ne.s32.totalorder %s135, %s137
      %p141 = scmp.eq.s32.totalorder %s17, 0
      %p142 = por %p140, %p141
      %p143 = scmp.ne.s32.totalorder %s135, %s137
      %p144 = scmp.eq.s32.totalorder %s22, 3
      %p145 = por %p143, %p144
      %p146 = scmp.ne.s32.totalorder %s137, %s138
      %p147 = scmp.eq.s32.totalorder %s22, 0
      %p148 = por %p146, %p147
      %p149 = scmp.ne.s32.totalorder %s137, %s138
      %p150 = scmp.eq.s32.totalorder %s23, 3
      %p151 = por %p149, %p150
      %p153 = scmp.ne.s32.totalorder %s138, %s152
      %p154 = scmp.eq.s32.totalorder %s23, 0
      %p155 = por %p153, %p154
      %s157 = sadd.s32 %s156, 1
      %p160 = scmp.eq.s32.totalorder %s17, 3
      %p161 = scmp.ne.s32.totalorder %s156, %s158
      %p162 = scmp.eq.s32.totalorder %s17, 0
      %p163 = por %p161, %p162
      %p164 = scmp.ne.s32.totalorder %s156, %s158
      %p165 = scmp.eq.s32.totalorder %s22, 3
      %p166 = por %p164, %p165
      %p167 = scmp.ne.s32.totalorder %s158, %s159
      %p168 = scmp.eq.s32.totalorder %s22, 0
      %p169 = por %p167, %p168
      %p170 = scmp.ne.s32.totalorder %s158, %s159
      %p171 = scmp.eq.s32.totalorder %s23, 3
      %p172 = por %p170, %p171
      %p174 = scmp.ne.s32.totalorder %s159, %s173
      %p175 = scmp.eq.s32.totalorder %s23, 0
      %p176 = por %p174, %p175
      %s178 = sadd.s32 %s177, 1
      %p181 = scmp.eq.s32.totalorder %s17, 3
      %p182 = scmp.ne.s32.totalorder %s177, %s179
      %p183 = scmp.eq.s32.totalorder %s17, 0
      %p184 = por %p182, %p183
      %p185 = scmp.ne.s32.totalorder %s177, %s179
      %p186 = scmp.eq.s32.totalorder %s22, 3
      %p187 = por %p185, %p186
      %p188 = scmp.ne.s32.totalorder %s179, %s180
      %p189 = scmp.eq.s32.totalorder %s22, 0
      %p190 = por %p188, %p189
      %p191 = scmp.ne.s32.totalorder %s179, %s180
      %p192 = scmp.eq.s32.totalorder %s23, 3
      %p193 = por %p191, %p192
      %p195 = scmp.ne.s32.totalorder %s180, %s194
      %p196 = scmp.eq.s32.totalorder %s23, 0
      %p197 = por %p195, %p196
      %s199 = sadd.s32 %s198, 1
      %p202 = scmp.eq.s32.totalorder %s17, 3
      %p203 = scmp.ne.s32.totalorder %s198, %s200
      %p204 = scmp.eq.s32.totalorder %s17, 0
      %p205 = por %p203, %p204
      %p206 = scmp.ne.s32.totalorder %s198, %s200
      %p207 = scmp.eq.s32.totalorder %s22, 3
      %p208 = por %p206, %p207
      %p209 = scmp.ne.s32.totalorder %s200, %s201
      %p210 = scmp.eq.s32.totalorder %s22, 0
      %p211 = por %p209, %p210
      %p212 = scmp.ne.s32.totalorder %s200, %s201
      %p213 = scmp.eq.s32.totalorder %s23, 3
      %p214 = por %p212, %p213
      %p216 = scmp.ne.s32.totalorder %s201, %s215
      %p217 = scmp.eq.s32.totalorder %s23, 0
      %p218 = por %p216, %p217
      %s219 = smul.u32 %s26, %s25
      %s220 = smul.u32 %s35, %s39
      %s221 = ssub.s32 %s24, %s43
      %s222 = ssub.s32 %s219, %s220
      %s223 = sor.u32 %s221, %s222
      %p224 = scmp.eq.s32.totalorder %s223, 0
      %s226 = sadd.s32 %s225, 1
      %s227 = scalar_select %p224, %s225, %s226
      %p230 = pneg %p224
      %p231 = scmp.eq.s32.totalorder %s17, 3
      %p232 = por %p230, %p231
      %p233 = scmp.ne.s32.totalorder %s225, %s228
      %p234 = scmp.eq.s32.totalorder %s17, 0
      %p235 = por %p233, %p234
      %p236 = scmp.ne.s32.totalorder %s225, %s228
      %p237 = scmp.eq.s32.totalorder %s22, 3
      %p238 = por %p236, %p237
      %p239 = scmp.ne.s32.totalorder %s228, %s229
      %p240 = scmp.eq.s32.totalorder %s22, 0
      %p241 = por %p239, %p240
      %p242 = scmp.ne.s32.totalorder %s228, %s229
      %p243 = scmp.eq.s32.totalorder %s23, 3
      %p244 = por %p242, %p243
      %p246 = scmp.ne.s32.totalorder %s229, %s245
      %p247 = scmp.eq.s32.totalorder %s23, 0
      %p248 = por %p246, %p247
      %p249 = scmp.le.s32.totalorder 1, %s17
      %p250 = scmp.lt.s32.totalorder %s17, 5
      %p251 = pnand %p249, %p250
      %p252 = pneg %p251
      // Predicated region
      $region9: #{tpu_custom_call.1} parent=5 // pred_check
        _
      $region10: #{tpu_custom_call.1} parent=5 // pred_check_branch
        %254 = sbr.rel (%p251) target = $region12
      $region11: #{tpu_custom_call.1} parent=5 // pred_region
        %s255 = ssub.s32 %s17, 1
        // Predicated region
        $region13: #{tpu_custom_call.1} parent=11 // pred_check
          %p256 = pneg %p85
        $region14: #{tpu_custom_call.1} parent=11 // pred_check_branch
          %258 = sbr.rel (%p256) target = $region16
        $region15: #{tpu_custom_call.1} parent=11 // pred_region
          _
        $region16: #{tpu_custom_call.1} parent=11 // pred_fallthru
          _
        // Predicated region
        $region17: #{tpu_custom_call.1} parent=11 // pred_check
          %p259 = pneg %p106
        $region18: #{tpu_custom_call.1} parent=11 // pred_check_branch
          %261 = sbr.rel (%p259) target = $region20
        $region19: #{tpu_custom_call.1} parent=11 // pred_region
          _
        $region20: #{tpu_custom_call.1} parent=11 // pred_fallthru
          _
        // Predicated region
        $region21: #{tpu_custom_call.1} parent=11 // pred_check
          %p262 = pneg %p127
        $region22: #{tpu_custom_call.1} parent=11 // pred_check_branch
          %264 = sbr.rel (%p262) target = $region24
        $region23: #{tpu_custom_call.1} parent=11 // pred_region
          _
        $region24: #{tpu_custom_call.1} parent=11 // pred_fallthru
          _
        // Predicated region
        $region25: #{tpu_custom_call.1} parent=11 // pred_check
          %p265 = pneg %p148
        $region26: #{tpu_custom_call.1} parent=11 // pred_check_branch
          %267 = sbr.rel (%p265) target = $region28
        $region27: #{tpu_custom_call.1} parent=11 // pred_region
          _
        $region28: #{tpu_custom_call.1} parent=11 // pred_fallthru
          _
        // Predicated region
        $region29: #{tpu_custom_call.1} parent=11 // pred_check
          %p268 = pneg %p169
        $region30: #{tpu_custom_call.1} parent=11 // pred_check_branch
          %270 = sbr.rel (%p268) target = $region32
        $region31: #{tpu_custom_call.1} parent=11 // pred_region
          _
        $region32: #{tpu_custom_call.1} parent=11 // pred_fallthru
          _
        // Predicated region
        $region33: #{tpu_custom_call.1} parent=11 // pred_check
          %p271 = pneg %p190
        $region34: #{tpu_custom_call.1} parent=11 // pred_check_branch
          %273 = sbr.rel (%p271) target = $region36
        $region35: #{tpu_custom_call.1} parent=11 // pred_region
          _
        $region36: #{tpu_custom_call.1} parent=11 // pred_fallthru
          _
        // Predicated region
        $region37: #{tpu_custom_call.1} parent=11 // pred_check
          %p274 = pneg %p211
        $region38: #{tpu_custom_call.1} parent=11 // pred_check_branch
          %276 = sbr.rel (%p274) target = $region40
        $region39: #{tpu_custom_call.1} parent=11 // pred_region
          _
        $region40: #{tpu_custom_call.1} parent=11 // pred_fallthru
          _
      $region12: #{tpu_custom_call.1} parent=5 // pred_fallthru
        _
      %p277 = scmp.lt.s32.totalorder %s17, 4
      // Predicated region
      $region41: #{tpu_custom_call.1} parent=5 // pred_check
        %p278 = pneg %p277
      $region42: #{tpu_custom_call.1} parent=5 // pred_check_branch
        %280 = sbr.rel (%p278) target = $region44
      $region43: #{tpu_custom_call.1} parent=5 // pred_region
        // Predicated region
        $region45: #{tpu_custom_call.1} parent=43 // pred_check
          %p281 = pneg %p58
        $region46: #{tpu_custom_call.1} parent=43 // pred_check_branch
          %283 = sbr.rel (%p281) target = $region48
        $region47: #{tpu_custom_call.1} parent=43 // pred_region
          %s284 = smul.u32 2, %s26
          %p285 = scmp.lt.s32.totalorder %s24, 1
          %s286 = scalar_select %p285, %s24, 1
          %p287 = scmp.lt.s32.totalorder %s284, 1
          %s288 = scalar_select %p287, %s284, 1
          %s289 = smul.addr %s286, 2
          %s290 = sadd.s32 %s288, %s289
          %s291 = smul.addr %s290, 8
          %s292 = scalar_lea.vmem %s0, %s291
          %s293 = smul.u32 2, %s26
        $region48: #{tpu_custom_call.1} parent=43 // pred_fallthru
          _
      $region44: #{tpu_custom_call.1} parent=5 // pred_fallthru
        _
      %p294 = scmp.le.s32.totalorder 1, %s17
      %p295 = scmp.lt.s32.totalorder %s17, 5
      %p296 = pnand %p294, %p295
      %p297 = pneg %p296
      // Predicated region
      $region49: #{tpu_custom_call.1} parent=5 // pred_check
        _
      $region50: #{tpu_custom_call.1} parent=5 // pred_check_branch
        %299 = sbr.rel (%p296) target = $region52
      $region51: #{tpu_custom_call.1} parent=5 // pred_region
        %s300 = ssub.s32 %s17, 1
        %s301 = smul.u32 2, %s29
        %p302 = scmp.lt.s32.totalorder %s27, 1
        %s303 = scalar_select %p302, %s27, 1
        %p304 = scmp.lt.s32.totalorder %s301, 1
        %s305 = scalar_select %p304, %s301, 1
        %s306 = smul.addr %s303, 2
        %s307 = sadd.s32 %s305, %s306
        %s308 = smul.addr %s307, 8
        %s309 = scalar_lea.vmem %s0, %s308
        %p310 = pneg %p64
        %p311 = pneg %p61
        %p312 = pneg %p85
        %p313 = pneg %p82
        %p314 = pneg %p106
        %p315 = pneg %p103
        %p316 = pneg %p127
        %p317 = pneg %p124
        %p318 = pneg %p148
        %p319 = pneg %p145
        %p320 = pneg %p169
        %p321 = pneg %p166
        %p322 = pneg %p190
        %p323 = pneg %p187
        %p324 = pneg %p211
        %p325 = pneg %p208
        %p326 = pneg %p241
        %p327 = pneg %p238
        %s328 = sand.u32 %s228, 1
        %s329 = scalar_lea.sflag [#allocation7], %s328
        %s330 = sand.u32 %s228, 1
        %s331 = smul.addr %s330, 16
        %s332 = scalar_lea.vmem [#allocation6], %s331
        %s333 = smul.u32 2, %s29
        %p334 = scmp.lt.s32.totalorder %s27, 1
        %s335 = scalar_select %p334, %s27, 1
        %p336 = scmp.lt.s32.totalorder %s333, 1
        %s337 = scalar_select %p336, %s333, 1
        %s338 = smul.addr %s335, 2
        %s339 = sadd.s32 %s337, %s338
        %s340 = smul.addr %s339, 8
        %s341 = scalar_lea.vmem %s0, %s340
        %s342 = smul.u32 2, %s29
        %s343 = smul.u32 %s29, %s28
        %s344 = smul.u32 2, %s343
        %p345 = scmp.eq.s32.totalorder %s28, 0
        // Predicated region
        $region53: #{tpu_custom_call.1} parent=51 // pred_check
          %p346 = pneg %p345
        $region54: #{tpu_custom_call.1} parent=51 // pred_check_branch
          %348 = sbr.rel (%p346) target = $region56
        $region55: #{tpu_custom_call.1} parent=51 // pred_region
          %p349 = scmp.eq.s32.totalorder %s29, 0
          // Predicated region
          $region57: #{tpu_custom_call.1} parent=55 // pred_check
            %p350 = pneg %p349
          $region58: #{tpu_custom_call.1} parent=55 // pred_check_branch
            %352 = sbr.rel (%p350) target = $region60
          $region59: #{tpu_custom_call.1} parent=55 // pred_region
            %vm353 = vcmask 0
            %354 = vst.msk [vmem:[#allocation2] sm:$0x1] %vm353, -inf
            %355 = vst.msk [vmem:[#allocation3] sm:$0x1] %vm353, 0.0
            %vm356 = vcmask 7168
            %357 = vst.msk [vmem:[#allocation4] sm:$0xff] %vm356, 0.0
          $region60: #{tpu_custom_call.1} parent=55 // pred_fallthru
            _
          %v358 = vld [vmem:[%s341] sm:$0xff]
          %v359 = vld [vmem:[%s341 + $0x8] sm:$0xff]
          %v360 = vld [vmem:[%s1] sm:$0x1]
          %vm361 = vcmask 64512
          %v363 = vsel %vm361, %v360, 0
          %365 = vmatprep.subr.mxu0 %v359
          %366 = vmatpush1.msra.mxu0 %v358
          %367 = vmatprep.subr.mxu0 0.0
          %368 = vmatpush1.msra.mxu0 0.0
          %369 = vmatprep.subr.mxu0 0.0
          %370 = vmatpush1.msra.mxu0 0.0
          %371 = vmatprep.subr.mxu0 0.0
          %372 = vmatpush1.msra.mxu0 0.0
          %373 = vmatprep.subr.mxu0 0.0
          %374 = vmatpush1.msra.mxu0 0.0
          %375 = vmatprep.subr.mxu0 0.0
          %376 = vmatpush1.msra.mxu0 0.0
          %377 = vmatprep.subr.mxu0 0.0
          %378 = vmatpush1.msra.mxu0 0.0
          %379 = vmatprep.subr.mxu0 0.0
          %380 = vmatpush1.msra.mxu0 0.0
          %381 = vmatprep.subr.mxu0 0.0
          %382 = vmatpush1.msra.mxu0 0.0
          %383 = vmatprep.subr.mxu0 0.0
          %384 = vmatpush1.msra.mxu0 0.0
          %385 = vmatprep.subr.mxu0 0.0
          %386 = vmatpush1.msra.mxu0 0.0
          %387 = vmatprep.subr.mxu0 0.0
          %388 = vmatpush1.msra.mxu0 0.0
          %389 = vmatprep.subr.mxu0 0.0
          %390 = vmatpush1.msra.mxu0 0.0
          %391 = vmatprep.subr.mxu0 0.0
          %392 = vmatpush1.msra.mxu0 0.0
          %393 = vmatprep.subr.mxu0 0.0
          %394 = vmatpush1.msra.mxu0 0.0
          %395 = vmatprep.subr.mxu0 0.0
          %396 = vmatpush1.msra.mxu0 0.0
          %397 = vmatprep.subr.mxu0 0.0
          %398 = vmatpush1.msra.mxu0 0.0
          %399 = vmatprep.subr.mxu0 0.0
          %400 = vmatpush1.msra.mxu0 0.0
          %401 = vmatprep.subr.mxu0 0.0
          %402 = vmatpush1.msra.mxu0 0.0
          %403 = vmatprep.subr.mxu0 0.0
          %404 = vmatpush1.msra.mxu0 0.0
          %405 = vmatprep.subr.mxu0 0.0
          %406 = vmatpush1.msra.mxu0 0.0
          %407 = vmatprep.subr.mxu0 0.0
          %408 = vmatpush1.msra.mxu0 0.0
          %409 = vmatprep.subr.mxu0 0.0
          %410 = vmatpush1.msra.mxu0 0.0
          %411 = vmatprep.subr.mxu0 0.0
          %412 = vmatpush1.msra.mxu0 0.0
          %413 = vmatprep.subr.mxu0 0.0
          %414 = vmatpush1.msra.mxu0 0.0
          %415 = vmatprep.subr.mxu0 0.0
          %416 = vmatpush1.msra.mxu0 0.0
          %417 = vmatprep.subr.mxu0 0.0
          %418 = vmatpush1.msra.mxu0 0.0
          %419 = vmatprep.subr.mxu0 0.0
          %420 = vmatpush1.msra.mxu0 0.0
          %421 = vmatprep.subr.mxu0 0.0
          %422 = vmatpush1.msra.mxu0 0.0
          %423 = vmatprep.subr.mxu0 0.0
          %424 = vmatpush1.msra.mxu0 0.0
          %425 = vmatprep.subr.mxu0 0.0
          %426 = vmatpush1.msra.mxu0 0.0
          %427 = vmatprep.subr.mxu0 0.0
          %428 = vmatpush1.msra.mxu0 0.0
          %429 = vmatprep.mubr.f32.mxu0 0.0
          %430 = vmatmul.mubr.f32.gmra.mrb[0].mxu0 %v363
          %v431 = vpop.f32.mrb[0].mxu0
          %v432 = vadd.f32 0.0, %v431
          %v433 = vpop.f32.mrb[0].mxu0
          %v434 = vadd.f32 0.0, %v433
          %435 = vdwg.mxu0
          %v436 = vld [vmem:[#allocation2] sm:$0x1]
          %vm437 = vcmask 1040384
          %v438 = vsel %vm437, %v432, -inf
          %v439 = vsel %vm437, %v434, -inf
          %v440 = vmax.f32 %v438, %v439
          %441 = vmax.xlane.f32.xlu0 %v440
          %v442 = vpop.xlane.xlu0 %441
          %v443 = vrot.slane %v442, 4
          %v444 = vmax.f32 %v442, %v443
          %v445 = vrot.slane %v444, 2
          %v446 = vmax.f32 %v444, %v445
          %v447 = vrot.slane %v446, 1
          %v448 = vmax.f32 %v446, %v447
          %s449 = vtos %v448
          %v450 = vstv %s449
          %v451 = vmax.f32 %v436, %v450
          %v452 = vsub.f32 %v436, %v451
          %v453 = vmul.f32 %v452, 1.442695
          %v454 = vpow.pop %v453
          %456 = vset.pattern.permute.xlu0 0
          %457 = vperm.xlu0 %456, %v451
          %v458 = vpop.permute.xlu0 %457
          %v460 = vlaneseq
          %v461 = vshrl.u32 %v460, 7
          %v462 = vsub.s32 0, %v461
          %v463 = vrot.slane %v458, %v462
          %v464 = vsub.f32 %v432, %v463
          %v465 = vsub.f32 %v434, %v463
          %v466 = vmul.f32 %v464, 1.442695
          %v467 = vpow.pop %v466
          %v468 = vmul.f32 %v465, 1.442695
          %v469 = vpow.pop %v468
          %v470 = vld [vmem:[#allocation3] sm:$0x1]
          %v471 = vmul.f32 %v470, %v454
          %v472 = vsel %vm437, %v467, 0.0
          %v473 = vsel %vm437, %v469, 0.0
          %v474 = vadd.f32 %v472, %v473
          %475 = vadd.xlane.f32.xlu0 %v474
          %v476 = vpop.xlane.xlu0 %475
          %v477 = vrot.slane %v476, 4
          %v478 = vadd.f32 %v476, %v477
          %v479 = vrot.slane %v478, 2
          %v480 = vadd.f32 %v478, %v479
          %v481 = vrot.slane %v480, 1
          %v482 = vadd.f32 %v480, %v481
          %s483 = vtos %v482
          %v484 = vstv %s483
          %v485 = vadd.f32 %v471, %v484
          %vm486 = vcmask 0
          %487 = vst.msk [vmem:[#allocation3] sm:$0x1] %vm486, %v485
          %v488 = vlaneseq
          %v489 = vshrl.u32 %v488, 7
          %v490 = vsub.s32 0, %v489
          %v491 = vrot.slane %v467, %v490
          %v492 = vlaneseq
          %v493 = vshrl.u32 %v492, 7
          %v494 = vsub.s32 0, %v493
          %v495 = vrot.slane %v469, %v494
          %v496 = vmul.f32 %v358, %v491
          %v497 = vmul.f32 %v359, %v495
          %v498 = vadd.f32 %v496, %v497
          %499 = vadd.xlane.f32.xlu0 %v498
          %v500 = vpop.xlane.xlu0 %499
          %v501 = vld [vmem:[#allocation4] sm:$0xff]
          %v503 = vlaneseq
          %v504 = vshrl.u32 %v503, 7
          %v505 = vsub.s32 0, %v504
          %v506 = vrot.slane %v454, %v505
          %v508 = vmul.f32 %v501, %v506
          %v509 = vadd.f32 %v508, %v500
          %vm510 = vcmask 7168
          %511 = vst.msk [vmem:[#allocation4] sm:$0xff] %vm510, %v509
          %512 = vst.msk [vmem:[#allocation2] sm:$0x1] %vm486, %v451
          // Predicated region
          $region61: #{tpu_custom_call.1} parent=55 // pred_check
            %p513 = pneg %p349
          $region62: #{tpu_custom_call.1} parent=55 // pred_check_branch
            %515 = sbr.rel (%p513) target = $region64
          $region63: #{tpu_custom_call.1} parent=55 // pred_region
            %v516 = vld [vmem:[#allocation4] sm:$0xff]
            %v517 = vld [vmem:[#allocation3] sm:$0x1]
            %v519 = vlaneseq
            %v520 = vshrl.u32 %v519, 7
            %v521 = vsub.s32 0, %v520
            %v522 = vrot.slane %v517, %v521
            %v524 = vrcp.pop %v522
            %v525 = vmul.f32 %v516, %v524
            %v526 = vld [vmem:[%s2] sm:$0xff]
            %v527 = vld [vmem:[%s3] sm:$0xff]
            %v529 = vsel %vm361, %v526, 0
            %531 = vmatprep.subr.mxu0 0.0
            %532 = vmatpush1.msra.mxu0 %v525
            %533 = vmatprep.subr.mxu0 0.0
            %534 = vmatpush1.msra.mxu0 0.0
            %535 = vmatprep.subr.mxu0 0.0
            %536 = vmatpush1.msra.mxu0 0.0
            %537 = vmatprep.subr.mxu0 0.0
            %538 = vmatpush1.msra.mxu0 0.0
            %539 = vmatprep.subr.mxu0 0.0
            %540 = vmatpush1.msra.mxu0 0.0
            %541 = vmatprep.subr.mxu0 0.0
            %542 = vmatpush1.msra.mxu0 0.0
            %543 = vmatprep.subr.mxu0 0.0
            %544 = vmatpush1.msra.mxu0 0.0
            %545 = vmatprep.subr.mxu0 0.0
            %546 = vmatpush1.msra.mxu0 0.0
            %547 = vmatprep.subr.mxu0 0.0
            %548 = vmatpush1.msra.mxu0 0.0
            %549 = vmatprep.subr.mxu0 0.0
            %550 = vmatpush1.msra.mxu0 0.0
            %551 = vmatprep.subr.mxu0 0.0
            %552 = vmatpush1.msra.mxu0 0.0
            %553 = vmatprep.subr.mxu0 0.0
            %554 = vmatpush1.msra.mxu0 0.0
            %555 = vmatprep.subr.mxu0 0.0
            %556 = vmatpush1.msra.mxu0 0.0
            %557 = vmatprep.subr.mxu0 0.0
            %558 = vmatpush1.msra.mxu0 0.0
            %559 = vmatprep.subr.mxu0 0.0
            %560 = vmatpush1.msra.mxu0 0.0
            %561 = vmatprep.subr.mxu0 0.0
            %562 = vmatpush1.msra.mxu0 0.0
            %563 = vmatprep.subr.mxu0 0.0
            %564 = vmatpush1.msra.mxu0 0.0
            %565 = vmatprep.subr.mxu0 0.0
            %566 = vmatpush1.msra.mxu0 0.0
            %567 = vmatprep.subr.mxu0 0.0
            %568 = vmatpush1.msra.mxu0 0.0
            %569 = vmatprep.subr.mxu0 0.0
            %570 = vmatpush1.msra.mxu0 0.0
            %571 = vmatprep.subr.mxu0 0.0
            %572 = vmatpush1.msra.mxu0 0.0
            %573 = vmatprep.subr.mxu0 0.0
            %574 = vmatpush1.msra.mxu0 0.0
            %575 = vmatprep.subr.mxu0 0.0
            %576 = vmatpush1.msra.mxu0 0.0
            %577 = vmatprep.subr.mxu0 0.0
            %578 = vmatpush1.msra.mxu0 0.0
            %579 = vmatprep.subr.mxu0 0.0
            %580 = vmatpush1.msra.mxu0 0.0
            %581 = vmatprep.subr.mxu0 0.0
            %582 = vmatpush1.msra.mxu0 0.0
            %583 = vmatprep.subr.mxu0 0.0
            %584 = vmatpush1.msra.mxu0 0.0
            %585 = vmatprep.subr.mxu0 0.0
            %586 = vmatpush1.msra.mxu0 0.0
            %587 = vmatprep.subr.mxu0 0.0
            %588 = vmatpush1.msra.mxu0 0.0
            %589 = vmatprep.subr.mxu0 0.0
            %590 = vmatpush1.msra.mxu0 0.0
            %591 = vmatprep.subr.mxu0 0.0
            %592 = vmatpush1.msra.mxu0 0.0
            %593 = vmatprep.subr.mxu0 0.0
            %594 = vmatpush1.msra.mxu0 0.0
            %595 = vmatprep.mubr.f32.mxu0 0.0
            %596 = vmatmul.mubr.f32.gmra.mrb[0].mxu0 %v529
            %v597 = vpop.f32.mrb[0].mxu0
            %v598 = vadd.f32 %v527, %v597
            %v599 = vpop.f32.mrb[0].mxu0
            %600 = vdwg.mxu0
            %v601 = vsel %vm510, %v598, 0.0
            %602 = vadd.xlane.f32.xlu0 %v601
            %v603 = vpop.xlane.xlu0 %602
            %v604 = vrot.slane %v603, 4
            %v605 = vadd.f32 %v603, %v604
            %v606 = vrot.slane %v605, 2
            %v607 = vadd.f32 %v605, %v606
            %v608 = vrot.slane %v607, 1
            %v609 = vadd.f32 %v607, %v608
            %s610 = vtos %v609
            %v611 = vrcp.pop 8.0
            %s612 = vtos %v611
            %s613 = smul.f32 %s610, %s612
            %v614 = vstv %s613
            %v615 = vsub.f32 %v598, %v614
            %v616 = vmul.f32 %v615, %v615
            %v617 = vsel %vm510, %v616, 0.0
            %618 = vadd.xlane.f32.xlu0 %v617
            %v619 = vpop.xlane.xlu0 %618
            %v620 = vrot.slane %v619, 4
            %v621 = vadd.f32 %v619, %v620
            %v622 = vrot.slane %v621, 2
            %v623 = vadd.f32 %v621, %v622
            %v624 = vrot.slane %v623, 1
            %v625 = vadd.f32 %v623, %v624
            %s626 = vtos %v625
            %v627 = vrcp.pop 8.0
            %s628 = vtos %v627
            %s629 = smul.f32 %s626, %s628
            %s630 = sadd.f32 %s629, 1e-05
            %v631 = vstv %s630
            %v632 = vrsqrt.pop %v631
            %s633 = vtos %v632
            %v634 = vstv %s633
            %v635 = vmul.f32 %v615, %v634
            %v636 = vld [vmem:[%s4] sm:$0xff]
            %v637 = vmul.f32 %v635, %v636
            %v638 = vld [vmem:[%s5] sm:$0xff]
            %v639 = vadd.f32 %v637, %v638
            %v640 = vmax.f32 %v639, 0.0
            %v641 = vld [vmem:[%s6] sm:$0xff]
            %v642 = vld [vmem:[%s7] sm:$0xff]
            %v644 = vsel %vm361, %v641, 0
            %646 = vmatprep.subr.mxu0 0.0
            %647 = vmatpush1.msra.mxu0 %v640
            %648 = vmatprep.subr.mxu0 0.0
            %649 = vmatpush1.msra.mxu0 0.0
            %650 = vmatprep.subr.mxu0 0.0
            %651 = vmatpush1.msra.mxu0 0.0
            %652 = vmatprep.subr.mxu0 0.0
            %653 = vmatpush1.msra.mxu0 0.0
            %654 = vmatprep.subr.mxu0 0.0
            %655 = vmatpush1.msra.mxu0 0.0
            %656 = vmatprep.subr.mxu0 0.0
            %657 = vmatpush1.msra.mxu0 0.0
            %658 = vmatprep.subr.mxu0 0.0
            %659 = vmatpush1.msra.mxu0 0.0
            %660 = vmatprep.subr.mxu0 0.0
            %661 = vmatpush1.msra.mxu0 0.0
            %662 = vmatprep.subr.mxu0 0.0
            %663 = vmatpush1.msra.mxu0 0.0
            %664 = vmatprep.subr.mxu0 0.0
            %665 = vmatpush1.msra.mxu0 0.0
            %666 = vmatprep.subr.mxu0 0.0
            %667 = vmatpush1.msra.mxu0 0.0
            %668 = vmatprep.subr.mxu0 0.0
            %669 = vmatpush1.msra.mxu0 0.0
            %670 = vmatprep.subr.mxu0 0.0
            %671 = vmatpush1.msra.mxu0 0.0
            %672 = vmatprep.subr.mxu0 0.0
            %673 = vmatpush1.msra.mxu0 0.0
            %674 = vmatprep.subr.mxu0 0.0
            %675 = vmatpush1.msra.mxu0 0.0
            %676 = vmatprep.subr.mxu0 0.0
            %677 = vmatpush1.msra.mxu0 0.0
            %678 = vmatprep.subr.mxu0 0.0
            %679 = vmatpush1.msra.mxu0 0.0
            %680 = vmatprep.subr.mxu0 0.0
            %681 = vmatpush1.msra.mxu0 0.0
            %682 = vmatprep.subr.mxu0 0.0
            %683 = vmatpush1.msra.mxu0 0.0
            %684 = vmatprep.subr.mxu0 0.0
            %685 = vmatpush1.msra.mxu0 0.0
            %686 = vmatprep.subr.mxu0 0.0
            %687 = vmatpush1.msra.mxu0 0.0
            %688 = vmatprep.subr.mxu0 0.0
            %689 = vmatpush1.msra.mxu0 0.0
            %690 = vmatprep.subr.mxu0 0.0
            %691 = vmatpush1.msra.mxu0 0.0
            %692 = vmatprep.subr.mxu0 0.0
            %693 = vmatpush1.msra.mxu0 0.0
            %694 = vmatprep.subr.mxu0 0.0
            %695 = vmatpush1.msra.mxu0 0.0
            %696 = vmatprep.subr.mxu0 0.0
            %697 = vmatpush1.msra.mxu0 0.0
            %698 = vmatprep.subr.mxu0 0.0
            %699 = vmatpush1.msra.mxu0 0.0
            %700 = vmatprep.subr.mxu0 0.0
            %701 = vmatpush1.msra.mxu0 0.0
            %702 = vmatprep.subr.mxu0 0.0
            %703 = vmatpush1.msra.mxu0 0.0
            %704 = vmatprep.subr.mxu0 0.0
            %705 = vmatpush1.msra.mxu0 0.0
            %706 = vmatprep.subr.mxu0 0.0
            %707 = vmatpush1.msra.mxu0 0.0
            %708 = vmatprep.subr.mxu0 0.0
            %709 = vmatpush1.msra.mxu0 0.0
            %710 = vmatprep.mubr.f32.mxu0 0.0
            %711 = vmatmul.mubr.f32.gmra.mrb[0].mxu0 %v644
            %v712 = vpop.f32.mrb[0].mxu0
            %v713 = vadd.f32 %v642, %v712
            %v714 = vpop.f32.mrb[0].mxu0
            %715 = vdwg.mxu0
            %716 = vst.msk [vmem:[#allocation5] sm:$0xff] %vm510, %v713
          $region64: #{tpu_custom_call.1} parent=55 // pred_fallthru
            _
        $region56: #{tpu_custom_call.1} parent=51 // pred_fallthru
          _
        %p717 = scmp.eq.s32.totalorder %s28, 1
        // Predicated region
        $region65: #{tpu_custom_call.1} parent=51 // pred_check
          %p718 = pneg %p717
        $region66: #{tpu_custom_call.1} parent=51 // pred_check_branch
          %720 = sbr.rel (%p718) target = $region68
        $region67: #{tpu_custom_call.1} parent=51 // pred_region
          %v721 = vld [vmem:[%s341] sm:$0xff]
          %v722 = vld [vmem:[%s341 + $0x8] sm:$0xff]
          %v723 = vld [vmem:[#allocation5] sm:$0xff]
          %725 = vset.pattern.permute.xlu0 0
          %726 = vperm.xlu0 %725, %v723
          %v727 = vpop.permute.xlu0 %726
          %v729 = vadd.f32 %v721, %v727
          %v730 = vadd.f32 %v722, %v727
          %731 = vst [vmem:[%s332] sm:$0xff] %v729
          %732 = vst [vmem:[%s332 + $0x8] sm:$0xff] %v730
        $region68: #{tpu_custom_call.1} parent=51 // pred_fallthru
          _
        %s733 = sand.u32 %s228, 1
        %s734 = scalar_lea.sflag [#allocation7], %s733
        %s735 = sand.u32 %s228, 1
        %s736 = smul.addr %s735, 16
        %s737 = scalar_lea.vmem [#allocation6], %s736
        // Predicated region
        $region69: #{tpu_custom_call.1} parent=51 // pred_check
          %p738 = pneg %p238
        $region70: #{tpu_custom_call.1} parent=51 // pred_check_branch
          %740 = sbr.rel (%p738) target = $region72
        $region71: #{tpu_custom_call.1} parent=51 // pred_region
          %s741 = smul.u32 %s29, %s28
          %s742 = smul.u32 2, %s741
          %s744 = ssub.s32 256, 256
          %745 = vsyncadd %s734, %s744
          %s746 = smul.addr %s27, 2
          %s747 = sadd.s32 %s742, %s746
          %s748 = smul.addr %s747, 128
          %s749 = scalar_lea.hbm %s8, %s748
          %s751 = sshll.u32 %s737, 4
          %s752 = int_to_ptr.vmem [resolvable:$true] %s751
          %754 = dma.vmem_to_hbm [thread:$0]  %s752, 256, %s749, %s734
        $region72: #{tpu_custom_call.1} parent=51 // pred_fallthru
          _
      $region52: #{tpu_custom_call.1} parent=5 // pred_fallthru
        _
      %p755 = scmp.le.s32.totalorder 2, %s17
      // Predicated region
      $region73: #{tpu_custom_call.1} parent=5 // pred_check
        %p756 = pneg %p755
      $region74: #{tpu_custom_call.1} parent=5 // pred_check_branch
        %758 = sbr.rel (%p756) target = $region76
      $region75: #{tpu_custom_call.1} parent=5 // pred_region
        %s759 = ssub.s32 %s17, 2
        // Predicated region
        $region77: #{tpu_custom_call.1} parent=75 // pred_check
          %p760 = pneg %p244
        $region78: #{tpu_custom_call.1} parent=75 // pred_check_branch
          %762 = sbr.rel (%p760) target = $region80
        $region79: #{tpu_custom_call.1} parent=75 // pred_region
          %s763 = sand.u32 %s229, 1
          %s764 = scalar_lea.sflag [#allocation7], %s763
          %s765 = sand.u32 %s229, 1
          %s766 = smul.addr %s765, 16
          %s767 = scalar_lea.vmem [#allocation6], %s766
          %768 = dma.done %s764, 256
        $region80: #{tpu_custom_call.1} parent=75 // pred_fallthru
          _
      $region76: #{tpu_custom_call.1} parent=5 // pred_fallthru
        _
    $region6: #{tpu_custom_call.1} parent=1 // loop_footer
      %s21 = sadd.s32 1, %s17
    $region7: #{tpu_custom_call.1} parent=1 // loop_footer_branch
      %16 = sbr.rel target = $region3
    $region8: #{tpu_custom_call.1} parent=1 // loop_exit
      _
    %769 = vsyncpa [#allocation7], 1
    %s770 = scalar_lea.sflag [#allocation7], 1
    %771 = vsyncpa %s770, 1

</llo_original>
